<compile_context>
chip_gen: v7x
topology: tpu7x:2x2x1
jax: 0.10.0
libtpu: 0.0.40
codegen_flags: <defaults>
</compile_context>

<pallas_src>
import math

import jax
import jax.numpy as jnp
from jax.experimental import pallas as pl
from jax.experimental.pallas import tpu as pltpu

# ---- small, self-consistent configuration -------------------------------------------------
NUM_LAYERS = 2
FEATURE_DIM = 32          # embed_dim D
NUM_COLUMNS = 8           # sequence length S
NUM_HEADS = 4
FF_HIDDEN = 64
BATCH = 2
HEAD_DIM = FEATURE_DIM // NUM_HEADS

# ---- packed-parameter slab layout (row offsets; all multiples of 16 for bf16 tiling) -------
LAYER_W_ROWS = 144                       # 32 (Wqkv) + 32 (W1) + 64 (W2) + 8 (Wo) + pad
R_WQKV, R_W1, R_W2, R_WO = 0, 32, 64, 128
R_FC = NUM_LAYERS * LAYER_W_ROWS         # 288
W_ROWS = R_FC + FEATURE_DIM              # 320 rows x 128 lanes, bf16
LAYER_V_ROWS = 8
V_ROWS = 24                              # 2*8 + 1 rows used, padded; f32


def _layer_norm(y, w, b, eps=1e-5):
    """PyTorch nn.LayerNorm (biased variance, eps=1e-5) over the last dim."""
    mu = jnp.mean(y, axis=-1, keepdims=True)
    var = jnp.mean((y - mu) ** 2, axis=-1, keepdims=True)
    return (y - mu) * jax.lax.rsqrt(var + eps) * w + b


# ---- the Pallas kernel: full forward (all transformer blocks + mean + fc + sigmoid) --------
def transformer_kernel(x_ref, w_ref, vec_ref, o_ref):
    B, S, D = BATCH, NUM_COLUMNS, FEATURE_DIM
    H, hd, F = NUM_HEADS, HEAD_DIM, FF_HIDDEN
    scale = 1.0 / math.sqrt(hd)
    f32, bf16 = jnp.float32, jnp.bfloat16

    x2 = x_ref[...]                                              # (B*S, D) f32 activations

    for l in range(NUM_LAYERS):
        wb = l * LAYER_W_ROWS
        vb = l * LAYER_V_ROWS
        # static ref slices are free; weights already oriented (in_features, out_features)
        wqkv = w_ref[wb + R_WQKV:wb + R_WQKV + D, 0:3 * D]       # (D, 3D) bf16
        w1 = w_ref[wb + R_W1:wb + R_W1 + D, 0:F]                 # (D, F)  bf16
        w2 = w_ref[wb + R_W2:wb + R_W2 + F, 0:D]                 # (F, D)  bf16
        b_qkv = vec_ref[vb + 0:vb + 1, 0:3 * D]                  # (1, 3D) f32
        b_out = vec_ref[vb + 1:vb + 2, 0:D]
        g1, be1 = vec_ref[vb + 2:vb + 3, 0:D], vec_ref[vb + 3:vb + 4, 0:D]
        b1 = vec_ref[vb + 4:vb + 5, 0:F]
        b2 = vec_ref[vb + 5:vb + 6, 0:D]
        g2, be2 = vec_ref[vb + 6:vb + 7, 0:D], vec_ref[vb + 7:vb + 8, 0:D]

        # ---- fused QKV projection: all heads AND batches in one bf16 MXU matmul ----
        qkv = jnp.dot(x2.astype(bf16), wqkv, preferred_element_type=f32) + b_qkv  # (B*S, 3D)
        q = qkv[:, 0:D].reshape(B, S, D)          # layout-preserving sublane split
        k = qkv[:, D:2 * D].reshape(B, S, D)
        v = qkv[:, 2 * D:3 * D].reshape(B, S, D)

        # ---- per-head attention, batched over B; head-sum folded into out-projection ----
        attn = None
        for h in range(H):
            hs = slice(h * hd, (h + 1) * hd)
            qh = q[:, :, hs].astype(bf16)                        # (B, S, hd)
            kh = k[:, :, hs].astype(bf16)
            vh = v[:, :, hs].astype(bf16)
            s = jnp.einsum('bqd,bkd->bqk', qh, kh,
                           preferred_element_type=f32) * scale   # (B, S, S) f32
            s = s - jnp.max(s, axis=-1, keepdims=True)
            e = jnp.exp(s)
            p = (e / jnp.sum(e, axis=-1, keepdims=True)).astype(bf16)   # exact softmax
            ctx = jnp.einsum('bqk,bkd->bqd', p, vh,
                             preferred_element_type=f32)         # (B, S, hd) f32
            wo_h = w_ref[wb + R_WO:wb + R_WO + hd, h * D:(h + 1) * D]   # (hd, D) bf16
            part = jnp.dot(ctx.reshape(B * S, hd).astype(bf16), wo_h,
                           preferred_element_type=f32)           # (B*S, D)
            attn = part if attn is None else attn + part
        attn = attn + b_out

        # dropout == identity (eval)
        x2 = _layer_norm(x2 + attn, g1, be1)

        # ---- feed-forward on the whole (B*S, D) slab ----
        h1 = jnp.dot(x2.astype(bf16), w1, preferred_element_type=f32) + b1
        h1 = jnp.maximum(h1, 0.0)
        ff = jnp.dot(h1.astype(bf16), w2, preferred_element_type=f32) + b2
        x2 = _layer_norm(x2 + ff, g2, be2)

    # ---- mean over the sequence axis, then fc_output + sigmoid ----
    xm = jnp.mean(x2.reshape(B, S, D), axis=1)                   # (B, D)
    fc_w = w_ref[R_FC:R_FC + D, 0:D]                             # (D, D) bf16
    fc_b = vec_ref[NUM_LAYERS * LAYER_V_ROWS:NUM_LAYERS * LAYER_V_ROWS + 1, 0:D]
    out = jnp.dot(xm.astype(bf16), fc_w, preferred_element_type=f32) + fc_b
    o_ref[...] = jax.nn.sigmoid(out)


# ---- wrapper: pack all params into one bf16 weight slab + one f32 vector slab --------------
def pack_params(p):
    L, D, F, H, hd = NUM_LAYERS, FEATURE_DIM, FF_HIDDEN, NUM_HEADS, HEAD_DIM
    w = jnp.zeros((W_ROWS, 128), jnp.float32)
    v = jnp.zeros((V_ROWS, 128), jnp.float32)
    for l in range(L):
        wb, vb = l * LAYER_W_ROWS, l * LAYER_V_ROWS
        # x @ in_w.T  ->  store in_w.T as (D, 3D); columns are [q | k | v], head-major inside.
        w = w.at[wb + R_WQKV:wb + R_WQKV + D, 0:3 * D].set(p['in_w'][l].T)
        w = w.at[wb + R_W1:wb + R_W1 + D, 0:F].set(p['ff1_w'][l].T)
        w = w.at[wb + R_W2:wb + R_W2 + F, 0:D].set(p['ff2_w'][l].T)
        # out_proj: concat(heads) @ out_w.T ; store per-head (hd, D) row blocks side by side.
        woT = p['out_w'][l].T                                    # (D, D), rows = (head, hd)
        for h in range(H):
            w = w.at[wb + R_WO:wb + R_WO + hd, h * D:(h + 1) * D].set(
                woT[h * hd:(h + 1) * hd, :])
        v = v.at[vb + 0, 0:3 * D].set(p['in_b'][l, 0])
        v = v.at[vb + 1, 0:D].set(p['out_b'][l, 0])
        v = v.at[vb + 2, 0:D].set(p['ln1_w'][l, 0])
        v = v.at[vb + 3, 0:D].set(p['ln1_b'][l, 0])
        v = v.at[vb + 4, 0:F].set(p['ff1_b'][l, 0])
        v = v.at[vb + 5, 0:D].set(p['ff2_b'][l, 0])
        v = v.at[vb + 6, 0:D].set(p['ln2_w'][l, 0])
        v = v.at[vb + 7, 0:D].set(p['ln2_b'][l, 0])
    w = w.at[R_FC:R_FC + D, 0:D].set(p['fc_w'].T)
    v = v.at[L * LAYER_V_ROWS, 0:D].set(p['fc_b'][0])
    return w.astype(jnp.bfloat16), v


def _cost_numbers():
    B, S, D = BATCH, NUM_COLUMNS, FEATURE_DIM
    H, hd, F, L = NUM_HEADS, HEAD_DIM, FF_HIDDEN, NUM_LAYERS
    per_layer = (2 * B * S * D * 3 * D                 # fused QKV projection
                 + H * 2 * (2 * B * S * S * hd)        # scores + context
                 + H * 2 * B * S * hd * D              # per-head out-projection
                 + 2 * B * S * D * F + 2 * B * S * F * D)   # FFN
    flops = L * per_layer + 2 * B * D * D
    transcendentals = L * B * H * S * S + 2 * L * B * S + B * D
    bytes_accessed = (B * S * D * 4 + W_ROWS * 128 * 2 + V_ROWS * 128 * 4 + B * D * 4)
    return int(flops), int(transcendentals), int(bytes_accessed)


@jax.jit
def transformer_predictor(x, params):
    x2 = x.reshape(BATCH * NUM_COLUMNS, FEATURE_DIM).astype(jnp.float32)
    wslab, vslab = pack_params(params)
    flops, transc, nbytes = _cost_numbers()
    vmem = lambda: pl.BlockSpec(memory_space=pltpu.MemorySpace.VMEM)
    return pl.pallas_call(
        transformer_kernel,
        out_shape=jax.ShapeDtypeStruct((BATCH, FEATURE_DIM), jnp.float32),
        in_specs=[vmem(), vmem(), vmem()],
        out_specs=vmem(),
        compiler_params=pltpu.CompilerParams(vmem_limit_bytes=2 * 1024 * 1024),
        cost_estimate=pl.CostEstimate(flops=flops, transcendentals=transc,
                                      bytes_accessed=nbytes),
    )(x2, wslab, vslab)


# ---- deterministic parameter init (shapes follow the nn.Module __init__) -------------------
def init_params(key):
    D, F, L = FEATURE_DIM, FF_HIDDEN, NUM_LAYERS
    keys = jax.random.split(key, 10)

    def nrm(k, shape, scale=0.1):
        return (scale * jax.random.normal(k, shape)).astype(jnp.float32)

    return {
        # nn.MultiheadAttention: in_proj_weight (3E, E), in_proj_bias (3E), out_proj (E, E)+b
        'in_w':  nrm(keys[0], (L, 3 * D, D)),
        'in_b':  nrm(keys[1], (L, 1, 3 * D)),
        'out_w': nrm(keys[2], (L, D, D)),
        'out_b': nrm(keys[3], (L, 1, D)),
        # feed_forward: Linear(D, F) then Linear(F, D)
        'ff1_w': nrm(keys[4], (L, F, D)),
        'ff1_b': nrm(keys[5], (L, 1, F)),
        'ff2_w': nrm(keys[6], (L, D, F)),
        'ff2_b': nrm(keys[7], (L, 1, D)),
        # LayerNorms (default init: weight=1, bias=0)
        'ln1_w': jnp.ones((L, 1, D), jnp.float32),
        'ln1_b': jnp.zeros((L, 1, D), jnp.float32),
        'ln2_w': jnp.ones((L, 1, D), jnp.float32),
        'ln2_b': jnp.zeros((L, 1, D), jnp.float32),
        # fc_output: Linear(D, D)
        'fc_w':  nrm(keys[8], (D, D)),
        'fc_b':  nrm(keys[9], (1, D)),
    }


# ---- pure-JAX f32 reference (same math, for a sanity check) --------------------------------
def reference_forward(x, p):
    B, S, D = x.shape
    H, hd = NUM_HEADS, HEAD_DIM
    scale = 1.0 / math.sqrt(hd)
    x2 = x.reshape(B * S, D)
    for l in range(NUM_LAYERS):
        qkv = x2 @ p['in_w'][l].T + p['in_b'][l]
        q = qkv[:, :D].reshape(B, S, H, hd)
        k = qkv[:, D:2 * D].reshape(B, S, H, hd)
        v = qkv[:, 2 * D:].reshape(B, S, H, hd)
        sc = jnp.einsum('bqhd,bkhd->bhqk', q, k) * scale
        pr = jax.nn.softmax(sc, axis=-1)
        ctx = jnp.einsum('bhqk,bkhd->bqhd', pr, v).reshape(B * S, D)
        attn = ctx @ p['out_w'][l].T + p['out_b'][l]
        x2 = _layer_norm(x2 + attn, p['ln1_w'][l], p['ln1_b'][l])
        h1 = jax.nn.relu(x2 @ p['ff1_w'][l].T + p['ff1_b'][l])
        ff = h1 @ p['ff2_w'][l].T + p['ff2_b'][l]
        x2 = _layer_norm(x2 + ff, p['ln2_w'][l], p['ln2_b'][l])
    xm = x2.reshape(B, S, D).mean(axis=1)
    return jax.nn.sigmoid(xm @ p['fc_w'].T + p['fc_b'])


if __name__ == "__main__":
    key = jax.random.PRNGKey(0)
    kx, kp = jax.random.split(key)
    # x: (batch, num_columns, feature_dim) — exactly what the torch forward expects
    x = jax.random.normal(kx, (BATCH, NUM_COLUMNS, FEATURE_DIM), dtype=jnp.float32)
    params = init_params(kp)

    out = jax.block_until_ready(transformer_predictor(x, params))

    assert out.shape == (BATCH, FEATURE_DIM)
    assert bool(jnp.all(jnp.isfinite(out)))

    ref = reference_forward(x, params)
    # tolerance accounts for bf16 matmul operands (f32 accumulation) vs the f32 reference
    max_err = float(jnp.max(jnp.abs(out - ref)))
    assert bool(jnp.allclose(out, ref, atol=3e-2, rtol=3e-2)), (
        f"mismatch vs reference: max abs err {max_err}")

    print("KERNEL_OK")
</pallas_src>

<mosaic_0001>
module attributes {stable_mosaic.version = 11 : i64} {
  func.func @transformer_kernel(%arg0: memref<16x32xf32, #tpu.memory_space<vmem>>, %arg1: memref<320x128xbf16, #tpu.memory_space<vmem>>, %arg2: memref<24x128xf32, #tpu.memory_space<vmem>>, %arg3: memref<2x32xf32, #tpu.memory_space<vmem>>) attributes {dimension_semantics = [], scalar_prefetch = 0 : i64, scratch_operands = 0 : i64, tpu.core_type = #tpu.core_type<tc>} {
    %c0 = arith.constant 0 : index
    %c0_0 = arith.constant 0 : index
    %0 = vector.load %arg0[%c0, %c0_0] : memref<16x32xf32, #tpu.memory_space<vmem>>, vector<16x32xf32>
    %c0_1 = arith.constant 0 : index
    %c0_2 = arith.constant 0 : index
    %1 = vector.load %arg1[%c0_1, %c0_2] : memref<320x128xbf16, #tpu.memory_space<vmem>>, vector<32x96xbf16>
    %c32 = arith.constant 32 : index
    %c0_3 = arith.constant 0 : index
    %2 = vector.load %arg1[%c32, %c0_3] : memref<320x128xbf16, #tpu.memory_space<vmem>>, vector<32x64xbf16>
    %c64 = arith.constant 64 : index
    %c0_4 = arith.constant 0 : index
    %3 = vector.load %arg1[%c64, %c0_4] : memref<320x128xbf16, #tpu.memory_space<vmem>>, vector<64x32xbf16>
    %c0_5 = arith.constant 0 : index
    %c0_6 = arith.constant 0 : index
    %4 = vector.load %arg2[%c0_5, %c0_6] : memref<24x128xf32, #tpu.memory_space<vmem>>, vector<1x96xf32>
    %c1 = arith.constant 1 : index
    %c0_7 = arith.constant 0 : index
    %5 = vector.load %arg2[%c1, %c0_7] : memref<24x128xf32, #tpu.memory_space<vmem>>, vector<1x32xf32>
    %c2 = arith.constant 2 : index
    %c0_8 = arith.constant 0 : index
    %6 = vector.load %arg2[%c2, %c0_8] : memref<24x128xf32, #tpu.memory_space<vmem>>, vector<1x32xf32>
    %c3 = arith.constant 3 : index
    %c0_9 = arith.constant 0 : index
    %7 = vector.load %arg2[%c3, %c0_9] : memref<24x128xf32, #tpu.memory_space<vmem>>, vector<1x32xf32>
    %c4 = arith.constant 4 : index
    %c0_10 = arith.constant 0 : index
    %8 = vector.load %arg2[%c4, %c0_10] : memref<24x128xf32, #tpu.memory_space<vmem>>, vector<1x64xf32>
    %c5 = arith.constant 5 : index
    %c0_11 = arith.constant 0 : index
    %9 = vector.load %arg2[%c5, %c0_11] : memref<24x128xf32, #tpu.memory_space<vmem>>, vector<1x32xf32>
    %c6 = arith.constant 6 : index
    %c0_12 = arith.constant 0 : index
    %10 = vector.load %arg2[%c6, %c0_12] : memref<24x128xf32, #tpu.memory_space<vmem>>, vector<1x32xf32>
    %c7 = arith.constant 7 : index
    %c0_13 = arith.constant 0 : index
    %11 = vector.load %arg2[%c7, %c0_13] : memref<24x128xf32, #tpu.memory_space<vmem>>, vector<1x32xf32>
    %12 = arith.truncf %0 : vector<16x32xf32> to vector<16x32xbf16>
    %cst = arith.constant dense<0.000000e+00> : vector<16x96xf32>
    %13 = tpu.matmul %12, %1, %cst {dimension_numbers = #tpu.dot_dimension_numbers<[1], [0], [0], [1], [0, 0, 1, 1], [], []>} : vector<16x32xbf16>, vector<32x96xbf16>, vector<16x96xf32> -> vector<16x96xf32>
    %14 = vector.broadcast %4 : vector<1x96xf32> to vector<16x96xf32>
    %15 = arith.addf %13, %14 : vector<16x96xf32>
    %16 = vector.extract_strided_slice %15 {offsets = [0, 0], sizes = [16, 32], strides = [1, 1]} : vector<16x96xf32> to vector<16x32xf32>
    %17 = vector.shape_cast %16 : vector<16x32xf32> to vector<2x8x32xf32>
    %18 = vector.extract_strided_slice %15 {offsets = [0, 32], sizes = [16, 32], strides = [1, 1]} : vector<16x96xf32> to vector<16x32xf32>
    %19 = vector.shape_cast %18 : vector<16x32xf32> to vector<2x8x32xf32>
    %20 = vector.extract_strided_slice %15 {offsets = [0, 64], sizes = [16, 32], strides = [1, 1]} : vector<16x96xf32> to vector<16x32xf32>
    %21 = vector.shape_cast %20 : vector<16x32xf32> to vector<2x8x32xf32>
    %22 = vector.extract_strided_slice %17 {offsets = [0, 0, 0], sizes = [2, 8, 8], strides = [1, 1, 1]} : vector<2x8x32xf32> to vector<2x8x8xf32>
    %23 = arith.truncf %22 : vector<2x8x8xf32> to vector<2x8x8xbf16>
    %24 = vector.extract_strided_slice %19 {offsets = [0, 0, 0], sizes = [2, 8, 8], strides = [1, 1, 1]} : vector<2x8x32xf32> to vector<2x8x8xf32>
    %25 = arith.truncf %24 : vector<2x8x8xf32> to vector<2x8x8xbf16>
    %26 = vector.extract_strided_slice %21 {offsets = [0, 0, 0], sizes = [2, 8, 8], strides = [1, 1, 1]} : vector<2x8x32xf32> to vector<2x8x8xf32>
    %27 = arith.truncf %26 : vector<2x8x8xf32> to vector<2x8x8xbf16>
    "tpu.trace_start"() <{level = 10 : i32, message = "bqd,bkd->bqk"}> : () -> ()
    %cst_14 = arith.constant dense<0.000000e+00> : vector<2x8x8xf32>
    %28 = tpu.matmul %23, %25, %cst_14 {dimension_numbers = #tpu.dot_dimension_numbers<[2], [2], [1], [1], [0, 0, 0, 1, 1, 1], [0], [0]>} : vector<2x8x8xbf16>, vector<2x8x8xbf16>, vector<2x8x8xf32> -> vector<2x8x8xf32>
    "tpu.trace_stop"() : () -> ()
    %cst_15 = arith.constant 0.353553385 : f32
    %29 = vector.broadcast %cst_15 : f32 to vector<2x8x8xf32>
    %30 = arith.mulf %28, %29 : vector<2x8x8xf32>
    %cst_16 = arith.constant dense<0xFF800000> : vector<2x8xf32>
    %31 = vector.multi_reduction <maximumf>, %30, %cst_16 [2] : vector<2x8x8xf32> to vector<2x8xf32>
    %32 = vector.shape_cast %31 : vector<2x8xf32> to vector<2x8x1xf32>
    %33 = vector.broadcast %32 : vector<2x8x1xf32> to vector<2x8x8xf32>
    %34 = arith.subf %30, %33 : vector<2x8x8xf32>
    %35 = math.exp %34 : vector<2x8x8xf32>
    %cst_17 = arith.constant dense<0.000000e+00> : vector<2x8xf32>
    %36 = vector.multi_reduction <add>, %35, %cst_17 [2] : vector<2x8x8xf32> to vector<2x8xf32>
    %37 = vector.shape_cast %36 : vector<2x8xf32> to vector<2x8x1xf32>
    %38 = vector.broadcast %37 : vector<2x8x1xf32> to vector<2x8x8xf32>
    %39 = arith.divf %35, %38 : vector<2x8x8xf32>
    %40 = arith.truncf %39 : vector<2x8x8xf32> to vector<2x8x8xbf16>
    "tpu.trace_start"() <{level = 10 : i32, message = "bqk,bkd->bqd"}> : () -> ()
    %cst_18 = arith.constant dense<0.000000e+00> : vector<2x8x8xf32>
    %41 = tpu.matmul %40, %27, %cst_18 {dimension_numbers = #tpu.dot_dimension_numbers<[2], [1], [1], [2], [0, 0, 0, 1, 1, 2], [0], [0]>} : vector<2x8x8xbf16>, vector<2x8x8xbf16>, vector<2x8x8xf32> -> vector<2x8x8xf32>
    "tpu.trace_stop"() : () -> ()
    %c128 = arith.constant 128 : index
    %c0_19 = arith.constant 0 : index
    %42 = vector.load %arg1[%c128, %c0_19] : memref<320x128xbf16, #tpu.memory_space<vmem>>, vector<8x32xbf16>
    %43 = vector.shape_cast %41 : vector<2x8x8xf32> to vector<16x8xf32>
    %44 = arith.truncf %43 : vector<16x8xf32> to vector<16x8xbf16>
    %cst_20 = arith.constant dense<0.000000e+00> : vector<16x32xf32>
    %45 = tpu.matmul %44, %42, %cst_20 {dimension_numbers = #tpu.dot_dimension_numbers<[1], [0], [0], [1], [0, 0, 1, 1], [], []>} : vector<16x8xbf16>, vector<8x32xbf16>, vector<16x32xf32> -> vector<16x32xf32>
    %46 = vector.extract_strided_slice %17 {offsets = [0, 0, 8], sizes = [2, 8, 8], strides = [1, 1, 1]} : vector<2x8x32xf32> to vector<2x8x8xf32>
    %47 = arith.truncf %46 : vector<2x8x8xf32> to vector<2x8x8xbf16>
    %48 = vector.extract_strided_slice %19 {offsets = [0, 0, 8], sizes = [2, 8, 8], strides = [1, 1, 1]} : vector<2x8x32xf32> to vector<2x8x8xf32>
    %49 = arith.truncf %48 : vector<2x8x8xf32> to vector<2x8x8xbf16>
    %50 = vector.extract_strided_slice %21 {offsets = [0, 0, 8], sizes = [2, 8, 8], strides = [1, 1, 1]} : vector<2x8x32xf32> to vector<2x8x8xf32>
    %51 = arith.truncf %50 : vector<2x8x8xf32> to vector<2x8x8xbf16>
    "tpu.trace_start"() <{level = 10 : i32, message = "bqd,bkd->bqk"}> : () -> ()
    %cst_21 = arith.constant dense<0.000000e+00> : vector<2x8x8xf32>
    %52 = tpu.matmul %47, %49, %cst_21 {dimension_numbers = #tpu.dot_dimension_numbers<[2], [2], [1], [1], [0, 0, 0, 1, 1, 1], [0], [0]>} : vector<2x8x8xbf16>, vector<2x8x8xbf16>, vector<2x8x8xf32> -> vector<2x8x8xf32>
    "tpu.trace_stop"() : () -> ()
    %cst_22 = arith.constant 0.353553385 : f32
    %53 = vector.broadcast %cst_22 : f32 to vector<2x8x8xf32>
    %54 = arith.mulf %52, %53 : vector<2x8x8xf32>
    %cst_23 = arith.constant dense<0xFF800000> : vector<2x8xf32>
    %55 = vector.multi_reduction <maximumf>, %54, %cst_23 [2] : vector<2x8x8xf32> to vector<2x8xf32>
    %56 = vector.shape_cast %55 : vector<2x8xf32> to vector<2x8x1xf32>
    %57 = vector.broadcast %56 : vector<2x8x1xf32> to vector<2x8x8xf32>
    %58 = arith.subf %54, %57 : vector<2x8x8xf32>
    %59 = math.exp %58 : vector<2x8x8xf32>
    %cst_24 = arith.constant dense<0.000000e+00> : vector<2x8xf32>
    %60 = vector.multi_reduction <add>, %59, %cst_24 [2] : vector<2x8x8xf32> to vector<2x8xf32>
    %61 = vector.shape_cast %60 : vector<2x8xf32> to vector<2x8x1xf32>
    %62 = vector.broadcast %61 : vector<2x8x1xf32> to vector<2x8x8xf32>
    %63 = arith.divf %59, %62 : vector<2x8x8xf32>
    %64 = arith.truncf %63 : vector<2x8x8xf32> to vector<2x8x8xbf16>
    "tpu.trace_start"() <{level = 10 : i32, message = "bqk,bkd->bqd"}> : () -> ()
    %cst_25 = arith.constant dense<0.000000e+00> : vector<2x8x8xf32>
    %65 = tpu.matmul %64, %51, %cst_25 {dimension_numbers = #tpu.dot_dimension_numbers<[2], [1], [1], [2], [0, 0, 0, 1, 1, 2], [0], [0]>} : vector<2x8x8xbf16>, vector<2x8x8xbf16>, vector<2x8x8xf32> -> vector<2x8x8xf32>
    "tpu.trace_stop"() : () -> ()
    %c128_26 = arith.constant 128 : index
    %c32_27 = arith.constant 32 : index
    %66 = vector.load %arg1[%c128_26, %c32_27] : memref<320x128xbf16, #tpu.memory_space<vmem>>, vector<8x32xbf16>
    %67 = vector.shape_cast %65 : vector<2x8x8xf32> to vector<16x8xf32>
    %68 = arith.truncf %67 : vector<16x8xf32> to vector<16x8xbf16>
    %cst_28 = arith.constant dense<0.000000e+00> : vector<16x32xf32>
    %69 = tpu.matmul %68, %66, %cst_28 {dimension_numbers = #tpu.dot_dimension_numbers<[1], [0], [0], [1], [0, 0, 1, 1], [], []>} : vector<16x8xbf16>, vector<8x32xbf16>, vector<16x32xf32> -> vector<16x32xf32>
    %70 = arith.addf %45, %69 : vector<16x32xf32>
    %71 = vector.extract_strided_slice %17 {offsets = [0, 0, 16], sizes = [2, 8, 8], strides = [1, 1, 1]} : vector<2x8x32xf32> to vector<2x8x8xf32>
    %72 = arith.truncf %71 : vector<2x8x8xf32> to vector<2x8x8xbf16>
    %73 = vector.extract_strided_slice %19 {offsets = [0, 0, 16], sizes = [2, 8, 8], strides = [1, 1, 1]} : vector<2x8x32xf32> to vector<2x8x8xf32>
    %74 = arith.truncf %73 : vector<2x8x8xf32> to vector<2x8x8xbf16>
    %75 = vector.extract_strided_slice %21 {offsets = [0, 0, 16], sizes = [2, 8, 8], strides = [1, 1, 1]} : vector<2x8x32xf32> to vector<2x8x8xf32>
    %76 = arith.truncf %75 : vector<2x8x8xf32> to vector<2x8x8xbf16>
    "tpu.trace_start"() <{level = 10 : i32, message = "bqd,bkd->bqk"}> : () -> ()
    %cst_29 = arith.constant dense<0.000000e+00> : vector<2x8x8xf32>
    %77 = tpu.matmul %72, %74, %cst_29 {dimension_numbers = #tpu.dot_dimension_numbers<[2], [2], [1], [1], [0, 0, 0, 1, 1, 1], [0], [0]>} : vector<2x8x8xbf16>, vector<2x8x8xbf16>, vector<2x8x8xf32> -> vector<2x8x8xf32>
    "tpu.trace_stop"() : () -> ()
    %cst_30 = arith.constant 0.353553385 : f32
    %78 = vector.broadcast %cst_30 : f32 to vector<2x8x8xf32>
    %79 = arith.mulf %77, %78 : vector<2x8x8xf32>
    %cst_31 = arith.constant dense<0xFF800000> : vector<2x8xf32>
    %80 = vector.multi_reduction <maximumf>, %79, %cst_31 [2] : vector<2x8x8xf32> to vector<2x8xf32>
    %81 = vector.shape_cast %80 : vector<2x8xf32> to vector<2x8x1xf32>
    %82 = vector.broadcast %81 : vector<2x8x1xf32> to vector<2x8x8xf32>
    %83 = arith.subf %79, %82 : vector<2x8x8xf32>
    %84 = math.exp %83 : vector<2x8x8xf32>
    %cst_32 = arith.constant dense<0.000000e+00> : vector<2x8xf32>
    %85 = vector.multi_reduction <add>, %84, %cst_32 [2] : vector<2x8x8xf32> to vector<2x8xf32>
    %86 = vector.shape_cast %85 : vector<2x8xf32> to vector<2x8x1xf32>
    %87 = vector.broadcast %86 : vector<2x8x1xf32> to vector<2x8x8xf32>
    %88 = arith.divf %84, %87 : vector<2x8x8xf32>
    %89 = arith.truncf %88 : vector<2x8x8xf32> to vector<2x8x8xbf16>
    "tpu.trace_start"() <{level = 10 : i32, message = "bqk,bkd->bqd"}> : () -> ()
    %cst_33 = arith.constant dense<0.000000e+00> : vector<2x8x8xf32>
    %90 = tpu.matmul %89, %76, %cst_33 {dimension_numbers = #tpu.dot_dimension_numbers<[2], [1], [1], [2], [0, 0, 0, 1, 1, 2], [0], [0]>} : vector<2x8x8xbf16>, vector<2x8x8xbf16>, vector<2x8x8xf32> -> vector<2x8x8xf32>
    "tpu.trace_stop"() : () -> ()
    %c128_34 = arith.constant 128 : index
    %c64_35 = arith.constant 64 : index
    %91 = vector.load %arg1[%c128_34, %c64_35] : memref<320x128xbf16, #tpu.memory_space<vmem>>, vector<8x32xbf16>
    %92 = vector.shape_cast %90 : vector<2x8x8xf32> to vector<16x8xf32>
    %93 = arith.truncf %92 : vector<16x8xf32> to vector<16x8xbf16>
    %cst_36 = arith.constant dense<0.000000e+00> : vector<16x32xf32>
    %94 = tpu.matmul %93, %91, %cst_36 {dimension_numbers = #tpu.dot_dimension_numbers<[1], [0], [0], [1], [0, 0, 1, 1], [], []>} : vector<16x8xbf16>, vector<8x32xbf16>, vector<16x32xf32> -> vector<16x32xf32>
    %95 = arith.addf %70, %94 : vector<16x32xf32>
    %96 = vector.extract_strided_slice %17 {offsets = [0, 0, 24], sizes = [2, 8, 8], strides = [1, 1, 1]} : vector<2x8x32xf32> to vector<2x8x8xf32>
    %97 = arith.truncf %96 : vector<2x8x8xf32> to vector<2x8x8xbf16>
    %98 = vector.extract_strided_slice %19 {offsets = [0, 0, 24], sizes = [2, 8, 8], strides = [1, 1, 1]} : vector<2x8x32xf32> to vector<2x8x8xf32>
    %99 = arith.truncf %98 : vector<2x8x8xf32> to vector<2x8x8xbf16>
    %100 = vector.extract_strided_slice %21 {offsets = [0, 0, 24], sizes = [2, 8, 8], strides = [1, 1, 1]} : vector<2x8x32xf32> to vector<2x8x8xf32>
    %101 = arith.truncf %100 : vector<2x8x8xf32> to vector<2x8x8xbf16>
    "tpu.trace_start"() <{level = 10 : i32, message = "bqd,bkd->bqk"}> : () -> ()
    %cst_37 = arith.constant dense<0.000000e+00> : vector<2x8x8xf32>
    %102 = tpu.matmul %97, %99, %cst_37 {dimension_numbers = #tpu.dot_dimension_numbers<[2], [2], [1], [1], [0, 0, 0, 1, 1, 1], [0], [0]>} : vector<2x8x8xbf16>, vector<2x8x8xbf16>, vector<2x8x8xf32> -> vector<2x8x8xf32>
    "tpu.trace_stop"() : () -> ()
    %cst_38 = arith.constant 0.353553385 : f32
    %103 = vector.broadcast %cst_38 : f32 to vector<2x8x8xf32>
    %104 = arith.mulf %102, %103 : vector<2x8x8xf32>
    %cst_39 = arith.constant dense<0xFF800000> : vector<2x8xf32>
    %105 = vector.multi_reduction <maximumf>, %104, %cst_39 [2] : vector<2x8x8xf32> to vector<2x8xf32>
    %106 = vector.shape_cast %105 : vector<2x8xf32> to vector<2x8x1xf32>
    %107 = vector.broadcast %106 : vector<2x8x1xf32> to vector<2x8x8xf32>
    %108 = arith.subf %104, %107 : vector<2x8x8xf32>
    %109 = math.exp %108 : vector<2x8x8xf32>
    %cst_40 = arith.constant dense<0.000000e+00> : vector<2x8xf32>
    %110 = vector.multi_reduction <add>, %109, %cst_40 [2] : vector<2x8x8xf32> to vector<2x8xf32>
    %111 = vector.shape_cast %110 : vector<2x8xf32> to vector<2x8x1xf32>
    %112 = vector.broadcast %111 : vector<2x8x1xf32> to vector<2x8x8xf32>
    %113 = arith.divf %109, %112 : vector<2x8x8xf32>
    %114 = arith.truncf %113 : vector<2x8x8xf32> to vector<2x8x8xbf16>
    "tpu.trace_start"() <{level = 10 : i32, message = "bqk,bkd->bqd"}> : () -> ()
    %cst_41 = arith.constant dense<0.000000e+00> : vector<2x8x8xf32>
    %115 = tpu.matmul %114, %101, %cst_41 {dimension_numbers = #tpu.dot_dimension_numbers<[2], [1], [1], [2], [0, 0, 0, 1, 1, 2], [0], [0]>} : vector<2x8x8xbf16>, vector<2x8x8xbf16>, vector<2x8x8xf32> -> vector<2x8x8xf32>
    "tpu.trace_stop"() : () -> ()
    %c128_42 = arith.constant 128 : index
    %c96 = arith.constant 96 : index
    %116 = vector.load %arg1[%c128_42, %c96] : memref<320x128xbf16, #tpu.memory_space<vmem>>, vector<8x32xbf16>
    %117 = vector.shape_cast %115 : vector<2x8x8xf32> to vector<16x8xf32>
    %118 = arith.truncf %117 : vector<16x8xf32> to vector<16x8xbf16>
    %cst_43 = arith.constant dense<0.000000e+00> : vector<16x32xf32>
    %119 = tpu.matmul %118, %116, %cst_43 {dimension_numbers = #tpu.dot_dimension_numbers<[1], [0], [0], [1], [0, 0, 1, 1], [], []>} : vector<16x8xbf16>, vector<8x32xbf16>, vector<16x32xf32> -> vector<16x32xf32>
    %120 = arith.addf %95, %119 : vector<16x32xf32>
    %121 = vector.broadcast %5 : vector<1x32xf32> to vector<16x32xf32>
    %122 = arith.addf %120, %121 : vector<16x32xf32>
    %123 = arith.addf %0, %122 : vector<16x32xf32>
    %cst_44 = arith.constant dense<0.000000e+00> : vector<16xf32>
    %124 = vector.multi_reduction <add>, %123, %cst_44 [1] : vector<16x32xf32> to vector<16xf32>
    %125 = vector.shape_cast %124 : vector<16xf32> to vector<16x1xf32>
    %cst_45 = arith.constant 3.200000e+01 : f32
    %126 = vector.broadcast %cst_45 : f32 to vector<16x1xf32>
    %127 = arith.divf %125, %126 : vector<16x1xf32>
    %128 = vector.broadcast %127 : vector<16x1xf32> to vector<16x32xf32>
    %129 = arith.subf %123, %128 : vector<16x32xf32>
    %130 = arith.mulf %129, %129 : vector<16x32xf32>
    %cst_46 = arith.constant dense<0.000000e+00> : vector<16xf32>
    %131 = vector.multi_reduction <add>, %130, %cst_46 [1] : vector<16x32xf32> to vector<16xf32>
    %132 = vector.shape_cast %131 : vector<16xf32> to vector<16x1xf32>
    %cst_47 = arith.constant 3.200000e+01 : f32
    %133 = vector.broadcast %cst_47 : f32 to vector<16x1xf32>
    %134 = arith.divf %132, %133 : vector<16x1xf32>
    %135 = vector.broadcast %127 : vector<16x1xf32> to vector<16x32xf32>
    %136 = arith.subf %123, %135 : vector<16x32xf32>
    %cst_48 = arith.constant 9.99999974E-6 : f32
    %137 = vector.broadcast %cst_48 : f32 to vector<16x1xf32>
    %138 = arith.addf %134, %137 : vector<16x1xf32>
    %139 = math.rsqrt %138 : vector<16x1xf32>
    %140 = vector.broadcast %139 : vector<16x1xf32> to vector<16x32xf32>
    %141 = arith.mulf %136, %140 : vector<16x32xf32>
    %142 = vector.broadcast %6 : vector<1x32xf32> to vector<16x32xf32>
    %143 = arith.mulf %141, %142 : vector<16x32xf32>
    %144 = vector.broadcast %7 : vector<1x32xf32> to vector<16x32xf32>
    %145 = arith.addf %143, %144 : vector<16x32xf32>
    %146 = arith.truncf %145 : vector<16x32xf32> to vector<16x32xbf16>
    %cst_49 = arith.constant dense<0.000000e+00> : vector<16x64xf32>
    %147 = tpu.matmul %146, %2, %cst_49 {dimension_numbers = #tpu.dot_dimension_numbers<[1], [0], [0], [1], [0, 0, 1, 1], [], []>} : vector<16x32xbf16>, vector<32x64xbf16>, vector<16x64xf32> -> vector<16x64xf32>
    %148 = vector.broadcast %8 : vector<1x64xf32> to vector<16x64xf32>
    %149 = arith.addf %147, %148 : vector<16x64xf32>
    %cst_50 = arith.constant 0.000000e+00 : f32
    %150 = vector.broadcast %cst_50 : f32 to vector<16x64xf32>
    %151 = arith.maximumf %149, %150 : vector<16x64xf32>
    %152 = arith.truncf %151 : vector<16x64xf32> to vector<16x64xbf16>
    %cst_51 = arith.constant dense<0.000000e+00> : vector<16x32xf32>
    %153 = tpu.matmul %152, %3, %cst_51 {dimension_numbers = #tpu.dot_dimension_numbers<[1], [0], [0], [1], [0, 0, 1, 1], [], []>} : vector<16x64xbf16>, vector<64x32xbf16>, vector<16x32xf32> -> vector<16x32xf32>
    %154 = vector.broadcast %9 : vector<1x32xf32> to vector<16x32xf32>
    %155 = arith.addf %153, %154 : vector<16x32xf32>
    %156 = arith.addf %145, %155 : vector<16x32xf32>
    %cst_52 = arith.constant dense<0.000000e+00> : vector<16xf32>
    %157 = vector.multi_reduction <add>, %156, %cst_52 [1] : vector<16x32xf32> to vector<16xf32>
    %158 = vector.shape_cast %157 : vector<16xf32> to vector<16x1xf32>
    %cst_53 = arith.constant 3.200000e+01 : f32
    %159 = vector.broadcast %cst_53 : f32 to vector<16x1xf32>
    %160 = arith.divf %158, %159 : vector<16x1xf32>
    %161 = vector.broadcast %160 : vector<16x1xf32> to vector<16x32xf32>
    %162 = arith.subf %156, %161 : vector<16x32xf32>
    %163 = arith.mulf %162, %162 : vector<16x32xf32>
    %cst_54 = arith.constant dense<0.000000e+00> : vector<16xf32>
    %164 = vector.multi_reduction <add>, %163, %cst_54 [1] : vector<16x32xf32> to vector<16xf32>
    %165 = vector.shape_cast %164 : vector<16xf32> to vector<16x1xf32>
    %cst_55 = arith.constant 3.200000e+01 : f32
    %166 = vector.broadcast %cst_55 : f32 to vector<16x1xf32>
    %167 = arith.divf %165, %166 : vector<16x1xf32>
    %168 = vector.broadcast %160 : vector<16x1xf32> to vector<16x32xf32>
    %169 = arith.subf %156, %168 : vector<16x32xf32>
    %cst_56 = arith.constant 9.99999974E-6 : f32
    %170 = vector.broadcast %cst_56 : f32 to vector<16x1xf32>
    %171 = arith.addf %167, %170 : vector<16x1xf32>
    %172 = math.rsqrt %171 : vector<16x1xf32>
    %173 = vector.broadcast %172 : vector<16x1xf32> to vector<16x32xf32>
    %174 = arith.mulf %169, %173 : vector<16x32xf32>
    %175 = vector.broadcast %10 : vector<1x32xf32> to vector<16x32xf32>
    %176 = arith.mulf %174, %175 : vector<16x32xf32>
    %177 = vector.broadcast %11 : vector<1x32xf32> to vector<16x32xf32>
    %178 = arith.addf %176, %177 : vector<16x32xf32>
    %c144 = arith.constant 144 : index
    %c0_57 = arith.constant 0 : index
    %179 = vector.load %arg1[%c144, %c0_57] : memref<320x128xbf16, #tpu.memory_space<vmem>>, vector<32x96xbf16>
    %c176 = arith.constant 176 : index
    %c0_58 = arith.constant 0 : index
    %180 = vector.load %arg1[%c176, %c0_58] : memref<320x128xbf16, #tpu.memory_space<vmem>>, vector<32x64xbf16>
    %c208 = arith.constant 208 : index
    %c0_59 = arith.constant 0 : index
    %181 = vector.load %arg1[%c208, %c0_59] : memref<320x128xbf16, #tpu.memory_space<vmem>>, vector<64x32xbf16>
    %c8 = arith.constant 8 : index
    %c0_60 = arith.constant 0 : index
    %182 = vector.load %arg2[%c8, %c0_60] : memref<24x128xf32, #tpu.memory_space<vmem>>, vector<1x96xf32>
    %c9 = arith.constant 9 : index
    %c0_61 = arith.constant 0 : index
    %183 = vector.load %arg2[%c9, %c0_61] : memref<24x128xf32, #tpu.memory_space<vmem>>, vector<1x32xf32>
    %c10 = arith.constant 10 : index
    %c0_62 = arith.constant 0 : index
    %184 = vector.load %arg2[%c10, %c0_62] : memref<24x128xf32, #tpu.memory_space<vmem>>, vector<1x32xf32>
    %c11 = arith.constant 11 : index
    %c0_63 = arith.constant 0 : index
    %185 = vector.load %arg2[%c11, %c0_63] : memref<24x128xf32, #tpu.memory_space<vmem>>, vector<1x32xf32>
    %c12 = arith.constant 12 : index
    %c0_64 = arith.constant 0 : index
    %186 = vector.load %arg2[%c12, %c0_64] : memref<24x128xf32, #tpu.memory_space<vmem>>, vector<1x64xf32>
    %c13 = arith.constant 13 : index
    %c0_65 = arith.constant 0 : index
    %187 = vector.load %arg2[%c13, %c0_65] : memref<24x128xf32, #tpu.memory_space<vmem>>, vector<1x32xf32>
    %c14 = arith.constant 14 : index
    %c0_66 = arith.constant 0 : index
    %188 = vector.load %arg2[%c14, %c0_66] : memref<24x128xf32, #tpu.memory_space<vmem>>, vector<1x32xf32>
    %c15 = arith.constant 15 : index
    %c0_67 = arith.constant 0 : index
    %189 = vector.load %arg2[%c15, %c0_67] : memref<24x128xf32, #tpu.memory_space<vmem>>, vector<1x32xf32>
    %190 = arith.truncf %178 : vector<16x32xf32> to vector<16x32xbf16>
    %cst_68 = arith.constant dense<0.000000e+00> : vector<16x96xf32>
    %191 = tpu.matmul %190, %179, %cst_68 {dimension_numbers = #tpu.dot_dimension_numbers<[1], [0], [0], [1], [0, 0, 1, 1], [], []>} : vector<16x32xbf16>, vector<32x96xbf16>, vector<16x96xf32> -> vector<16x96xf32>
    %192 = vector.broadcast %182 : vector<1x96xf32> to vector<16x96xf32>
    %193 = arith.addf %191, %192 : vector<16x96xf32>
    %194 = vector.extract_strided_slice %193 {offsets = [0, 0], sizes = [16, 32], strides = [1, 1]} : vector<16x96xf32> to vector<16x32xf32>
    %195 = vector.shape_cast %194 : vector<16x32xf32> to vector<2x8x32xf32>
    %196 = vector.extract_strided_slice %193 {offsets = [0, 32], sizes = [16, 32], strides = [1, 1]} : vector<16x96xf32> to vector<16x32xf32>
    %197 = vector.shape_cast %196 : vector<16x32xf32> to vector<2x8x32xf32>
    %198 = vector.extract_strided_slice %193 {offsets = [0, 64], sizes = [16, 32], strides = [1, 1]} : vector<16x96xf32> to vector<16x32xf32>
    %199 = vector.shape_cast %198 : vector<16x32xf32> to vector<2x8x32xf32>
    %200 = vector.extract_strided_slice %195 {offsets = [0, 0, 0], sizes = [2, 8, 8], strides = [1, 1, 1]} : vector<2x8x32xf32> to vector<2x8x8xf32>
    %201 = arith.truncf %200 : vector<2x8x8xf32> to vector<2x8x8xbf16>
    %202 = vector.extract_strided_slice %197 {offsets = [0, 0, 0], sizes = [2, 8, 8], strides = [1, 1, 1]} : vector<2x8x32xf32> to vector<2x8x8xf32>
    %203 = arith.truncf %202 : vector<2x8x8xf32> to vector<2x8x8xbf16>
    %204 = vector.extract_strided_slice %199 {offsets = [0, 0, 0], sizes = [2, 8, 8], strides = [1, 1, 1]} : vector<2x8x32xf32> to vector<2x8x8xf32>
    %205 = arith.truncf %204 : vector<2x8x8xf32> to vector<2x8x8xbf16>
    "tpu.trace_start"() <{level = 10 : i32, message = "bqd,bkd->bqk"}> : () -> ()
    %cst_69 = arith.constant dense<0.000000e+00> : vector<2x8x8xf32>
    %206 = tpu.matmul %201, %203, %cst_69 {dimension_numbers = #tpu.dot_dimension_numbers<[2], [2], [1], [1], [0, 0, 0, 1, 1, 1], [0], [0]>} : vector<2x8x8xbf16>, vector<2x8x8xbf16>, vector<2x8x8xf32> -> vector<2x8x8xf32>
    "tpu.trace_stop"() : () -> ()
    %cst_70 = arith.constant 0.353553385 : f32
    %207 = vector.broadcast %cst_70 : f32 to vector<2x8x8xf32>
    %208 = arith.mulf %206, %207 : vector<2x8x8xf32>
    %cst_71 = arith.constant dense<0xFF800000> : vector<2x8xf32>
    %209 = vector.multi_reduction <maximumf>, %208, %cst_71 [2] : vector<2x8x8xf32> to vector<2x8xf32>
    %210 = vector.shape_cast %209 : vector<2x8xf32> to vector<2x8x1xf32>
    %211 = vector.broadcast %210 : vector<2x8x1xf32> to vector<2x8x8xf32>
    %212 = arith.subf %208, %211 : vector<2x8x8xf32>
    %213 = math.exp %212 : vector<2x8x8xf32>
    %cst_72 = arith.constant dense<0.000000e+00> : vector<2x8xf32>
    %214 = vector.multi_reduction <add>, %213, %cst_72 [2] : vector<2x8x8xf32> to vector<2x8xf32>
    %215 = vector.shape_cast %214 : vector<2x8xf32> to vector<2x8x1xf32>
    %216 = vector.broadcast %215 : vector<2x8x1xf32> to vector<2x8x8xf32>
    %217 = arith.divf %213, %216 : vector<2x8x8xf32>
    %218 = arith.truncf %217 : vector<2x8x8xf32> to vector<2x8x8xbf16>
    "tpu.trace_start"() <{level = 10 : i32, message = "bqk,bkd->bqd"}> : () -> ()
    %cst_73 = arith.constant dense<0.000000e+00> : vector<2x8x8xf32>
    %219 = tpu.matmul %218, %205, %cst_73 {dimension_numbers = #tpu.dot_dimension_numbers<[2], [1], [1], [2], [0, 0, 0, 1, 1, 2], [0], [0]>} : vector<2x8x8xbf16>, vector<2x8x8xbf16>, vector<2x8x8xf32> -> vector<2x8x8xf32>
    "tpu.trace_stop"() : () -> ()
    %c272 = arith.constant 272 : index
    %c0_74 = arith.constant 0 : index
    %220 = vector.load %arg1[%c272, %c0_74] : memref<320x128xbf16, #tpu.memory_space<vmem>>, vector<8x32xbf16>
    %221 = vector.shape_cast %219 : vector<2x8x8xf32> to vector<16x8xf32>
    %222 = arith.truncf %221 : vector<16x8xf32> to vector<16x8xbf16>
    %cst_75 = arith.constant dense<0.000000e+00> : vector<16x32xf32>
    %223 = tpu.matmul %222, %220, %cst_75 {dimension_numbers = #tpu.dot_dimension_numbers<[1], [0], [0], [1], [0, 0, 1, 1], [], []>} : vector<16x8xbf16>, vector<8x32xbf16>, vector<16x32xf32> -> vector<16x32xf32>
    %224 = vector.extract_strided_slice %195 {offsets = [0, 0, 8], sizes = [2, 8, 8], strides = [1, 1, 1]} : vector<2x8x32xf32> to vector<2x8x8xf32>
    %225 = arith.truncf %224 : vector<2x8x8xf32> to vector<2x8x8xbf16>
    %226 = vector.extract_strided_slice %197 {offsets = [0, 0, 8], sizes = [2, 8, 8], strides = [1, 1, 1]} : vector<2x8x32xf32> to vector<2x8x8xf32>
    %227 = arith.truncf %226 : vector<2x8x8xf32> to vector<2x8x8xbf16>
    %228 = vector.extract_strided_slice %199 {offsets = [0, 0, 8], sizes = [2, 8, 8], strides = [1, 1, 1]} : vector<2x8x32xf32> to vector<2x8x8xf32>
    %229 = arith.truncf %228 : vector<2x8x8xf32> to vector<2x8x8xbf16>
    "tpu.trace_start"() <{level = 10 : i32, message = "bqd,bkd->bqk"}> : () -> ()
    %cst_76 = arith.constant dense<0.000000e+00> : vector<2x8x8xf32>
    %230 = tpu.matmul %225, %227, %cst_76 {dimension_numbers = #tpu.dot_dimension_numbers<[2], [2], [1], [1], [0, 0, 0, 1, 1, 1], [0], [0]>} : vector<2x8x8xbf16>, vector<2x8x8xbf16>, vector<2x8x8xf32> -> vector<2x8x8xf32>
    "tpu.trace_stop"() : () -> ()
    %cst_77 = arith.constant 0.353553385 : f32
    %231 = vector.broadcast %cst_77 : f32 to vector<2x8x8xf32>
    %232 = arith.mulf %230, %231 : vector<2x8x8xf32>
    %cst_78 = arith.constant dense<0xFF800000> : vector<2x8xf32>
    %233 = vector.multi_reduction <maximumf>, %232, %cst_78 [2] : vector<2x8x8xf32> to vector<2x8xf32>
    %234 = vector.shape_cast %233 : vector<2x8xf32> to vector<2x8x1xf32>
    %235 = vector.broadcast %234 : vector<2x8x1xf32> to vector<2x8x8xf32>
    %236 = arith.subf %232, %235 : vector<2x8x8xf32>
    %237 = math.exp %236 : vector<2x8x8xf32>
    %cst_79 = arith.constant dense<0.000000e+00> : vector<2x8xf32>
    %238 = vector.multi_reduction <add>, %237, %cst_79 [2] : vector<2x8x8xf32> to vector<2x8xf32>
    %239 = vector.shape_cast %238 : vector<2x8xf32> to vector<2x8x1xf32>
    %240 = vector.broadcast %239 : vector<2x8x1xf32> to vector<2x8x8xf32>
    %241 = arith.divf %237, %240 : vector<2x8x8xf32>
    %242 = arith.truncf %241 : vector<2x8x8xf32> to vector<2x8x8xbf16>
    "tpu.trace_start"() <{level = 10 : i32, message = "bqk,bkd->bqd"}> : () -> ()
    %cst_80 = arith.constant dense<0.000000e+00> : vector<2x8x8xf32>
    %243 = tpu.matmul %242, %229, %cst_80 {dimension_numbers = #tpu.dot_dimension_numbers<[2], [1], [1], [2], [0, 0, 0, 1, 1, 2], [0], [0]>} : vector<2x8x8xbf16>, vector<2x8x8xbf16>, vector<2x8x8xf32> -> vector<2x8x8xf32>
    "tpu.trace_stop"() : () -> ()
    %c272_81 = arith.constant 272 : index
    %c32_82 = arith.constant 32 : index
    %244 = vector.load %arg1[%c272_81, %c32_82] : memref<320x128xbf16, #tpu.memory_space<vmem>>, vector<8x32xbf16>
    %245 = vector.shape_cast %243 : vector<2x8x8xf32> to vector<16x8xf32>
    %246 = arith.truncf %245 : vector<16x8xf32> to vector<16x8xbf16>
    %cst_83 = arith.constant dense<0.000000e+00> : vector<16x32xf32>
    %247 = tpu.matmul %246, %244, %cst_83 {dimension_numbers = #tpu.dot_dimension_numbers<[1], [0], [0], [1], [0, 0, 1, 1], [], []>} : vector<16x8xbf16>, vector<8x32xbf16>, vector<16x32xf32> -> vector<16x32xf32>
    %248 = arith.addf %223, %247 : vector<16x32xf32>
    %249 = vector.extract_strided_slice %195 {offsets = [0, 0, 16], sizes = [2, 8, 8], strides = [1, 1, 1]} : vector<2x8x32xf32> to vector<2x8x8xf32>
    %250 = arith.truncf %249 : vector<2x8x8xf32> to vector<2x8x8xbf16>
    %251 = vector.extract_strided_slice %197 {offsets = [0, 0, 16], sizes = [2, 8, 8], strides = [1, 1, 1]} : vector<2x8x32xf32> to vector<2x8x8xf32>
    %252 = arith.truncf %251 : vector<2x8x8xf32> to vector<2x8x8xbf16>
    %253 = vector.extract_strided_slice %199 {offsets = [0, 0, 16], sizes = [2, 8, 8], strides = [1, 1, 1]} : vector<2x8x32xf32> to vector<2x8x8xf32>
    %254 = arith.truncf %253 : vector<2x8x8xf32> to vector<2x8x8xbf16>
    "tpu.trace_start"() <{level = 10 : i32, message = "bqd,bkd->bqk"}> : () -> ()
    %cst_84 = arith.constant dense<0.000000e+00> : vector<2x8x8xf32>
    %255 = tpu.matmul %250, %252, %cst_84 {dimension_numbers = #tpu.dot_dimension_numbers<[2], [2], [1], [1], [0, 0, 0, 1, 1, 1], [0], [0]>} : vector<2x8x8xbf16>, vector<2x8x8xbf16>, vector<2x8x8xf32> -> vector<2x8x8xf32>
    "tpu.trace_stop"() : () -> ()
    %cst_85 = arith.constant 0.353553385 : f32
    %256 = vector.broadcast %cst_85 : f32 to vector<2x8x8xf32>
    %257 = arith.mulf %255, %256 : vector<2x8x8xf32>
    %cst_86 = arith.constant dense<0xFF800000> : vector<2x8xf32>
    %258 = vector.multi_reduction <maximumf>, %257, %cst_86 [2] : vector<2x8x8xf32> to vector<2x8xf32>
    %259 = vector.shape_cast %258 : vector<2x8xf32> to vector<2x8x1xf32>
    %260 = vector.broadcast %259 : vector<2x8x1xf32> to vector<2x8x8xf32>
    %261 = arith.subf %257, %260 : vector<2x8x8xf32>
    %262 = math.exp %261 : vector<2x8x8xf32>
    %cst_87 = arith.constant dense<0.000000e+00> : vector<2x8xf32>
    %263 = vector.multi_reduction <add>, %262, %cst_87 [2] : vector<2x8x8xf32> to vector<2x8xf32>
    %264 = vector.shape_cast %263 : vector<2x8xf32> to vector<2x8x1xf32>
    %265 = vector.broadcast %264 : vector<2x8x1xf32> to vector<2x8x8xf32>
    %266 = arith.divf %262, %265 : vector<2x8x8xf32>
    %267 = arith.truncf %266 : vector<2x8x8xf32> to vector<2x8x8xbf16>
    "tpu.trace_start"() <{level = 10 : i32, message = "bqk,bkd->bqd"}> : () -> ()
    %cst_88 = arith.constant dense<0.000000e+00> : vector<2x8x8xf32>
    %268 = tpu.matmul %267, %254, %cst_88 {dimension_numbers = #tpu.dot_dimension_numbers<[2], [1], [1], [2], [0, 0, 0, 1, 1, 2], [0], [0]>} : vector<2x8x8xbf16>, vector<2x8x8xbf16>, vector<2x8x8xf32> -> vector<2x8x8xf32>
    "tpu.trace_stop"() : () -> ()
    %c272_89 = arith.constant 272 : index
    %c64_90 = arith.constant 64 : index
    %269 = vector.load %arg1[%c272_89, %c64_90] : memref<320x128xbf16, #tpu.memory_space<vmem>>, vector<8x32xbf16>
    %270 = vector.shape_cast %268 : vector<2x8x8xf32> to vector<16x8xf32>
    %271 = arith.truncf %270 : vector<16x8xf32> to vector<16x8xbf16>
    %cst_91 = arith.constant dense<0.000000e+00> : vector<16x32xf32>
    %272 = tpu.matmul %271, %269, %cst_91 {dimension_numbers = #tpu.dot_dimension_numbers<[1], [0], [0], [1], [0, 0, 1, 1], [], []>} : vector<16x8xbf16>, vector<8x32xbf16>, vector<16x32xf32> -> vector<16x32xf32>
    %273 = arith.addf %248, %272 : vector<16x32xf32>
    %274 = vector.extract_strided_slice %195 {offsets = [0, 0, 24], sizes = [2, 8, 8], strides = [1, 1, 1]} : vector<2x8x32xf32> to vector<2x8x8xf32>
    %275 = arith.truncf %274 : vector<2x8x8xf32> to vector<2x8x8xbf16>
    %276 = vector.extract_strided_slice %197 {offsets = [0, 0, 24], sizes = [2, 8, 8], strides = [1, 1, 1]} : vector<2x8x32xf32> to vector<2x8x8xf32>
    %277 = arith.truncf %276 : vector<2x8x8xf32> to vector<2x8x8xbf16>
    %278 = vector.extract_strided_slice %199 {offsets = [0, 0, 24], sizes = [2, 8, 8], strides = [1, 1, 1]} : vector<2x8x32xf32> to vector<2x8x8xf32>
    %279 = arith.truncf %278 : vector<2x8x8xf32> to vector<2x8x8xbf16>
    "tpu.trace_start"() <{level = 10 : i32, message = "bqd,bkd->bqk"}> : () -> ()
    %cst_92 = arith.constant dense<0.000000e+00> : vector<2x8x8xf32>
    %280 = tpu.matmul %275, %277, %cst_92 {dimension_numbers = #tpu.dot_dimension_numbers<[2], [2], [1], [1], [0, 0, 0, 1, 1, 1], [0], [0]>} : vector<2x8x8xbf16>, vector<2x8x8xbf16>, vector<2x8x8xf32> -> vector<2x8x8xf32>
    "tpu.trace_stop"() : () -> ()
    %cst_93 = arith.constant 0.353553385 : f32
    %281 = vector.broadcast %cst_93 : f32 to vector<2x8x8xf32>
    %282 = arith.mulf %280, %281 : vector<2x8x8xf32>
    %cst_94 = arith.constant dense<0xFF800000> : vector<2x8xf32>
    %283 = vector.multi_reduction <maximumf>, %282, %cst_94 [2] : vector<2x8x8xf32> to vector<2x8xf32>
    %284 = vector.shape_cast %283 : vector<2x8xf32> to vector<2x8x1xf32>
    %285 = vector.broadcast %284 : vector<2x8x1xf32> to vector<2x8x8xf32>
    %286 = arith.subf %282, %285 : vector<2x8x8xf32>
    %287 = math.exp %286 : vector<2x8x8xf32>
    %cst_95 = arith.constant dense<0.000000e+00> : vector<2x8xf32>
    %288 = vector.multi_reduction <add>, %287, %cst_95 [2] : vector<2x8x8xf32> to vector<2x8xf32>
    %289 = vector.shape_cast %288 : vector<2x8xf32> to vector<2x8x1xf32>
    %290 = vector.broadcast %289 : vector<2x8x1xf32> to vector<2x8x8xf32>
    %291 = arith.divf %287, %290 : vector<2x8x8xf32>
    %292 = arith.truncf %291 : vector<2x8x8xf32> to vector<2x8x8xbf16>
    "tpu.trace_start"() <{level = 10 : i32, message = "bqk,bkd->bqd"}> : () -> ()
    %cst_96 = arith.constant dense<0.000000e+00> : vector<2x8x8xf32>
    %293 = tpu.matmul %292, %279, %cst_96 {dimension_numbers = #tpu.dot_dimension_numbers<[2], [1], [1], [2], [0, 0, 0, 1, 1, 2], [0], [0]>} : vector<2x8x8xbf16>, vector<2x8x8xbf16>, vector<2x8x8xf32> -> vector<2x8x8xf32>
    "tpu.trace_stop"() : () -> ()
    %c272_97 = arith.constant 272 : index
    %c96_98 = arith.constant 96 : index
    %294 = vector.load %arg1[%c272_97, %c96_98] : memref<320x128xbf16, #tpu.memory_space<vmem>>, vector<8x32xbf16>
    %295 = vector.shape_cast %293 : vector<2x8x8xf32> to vector<16x8xf32>
    %296 = arith.truncf %295 : vector<16x8xf32> to vector<16x8xbf16>
    %cst_99 = arith.constant dense<0.000000e+00> : vector<16x32xf32>
    %297 = tpu.matmul %296, %294, %cst_99 {dimension_numbers = #tpu.dot_dimension_numbers<[1], [0], [0], [1], [0, 0, 1, 1], [], []>} : vector<16x8xbf16>, vector<8x32xbf16>, vector<16x32xf32> -> vector<16x32xf32>
    %298 = arith.addf %273, %297 : vector<16x32xf32>
    %299 = vector.broadcast %183 : vector<1x32xf32> to vector<16x32xf32>
    %300 = arith.addf %298, %299 : vector<16x32xf32>
    %301 = arith.addf %178, %300 : vector<16x32xf32>
    %cst_100 = arith.constant dense<0.000000e+00> : vector<16xf32>
    %302 = vector.multi_reduction <add>, %301, %cst_100 [1] : vector<16x32xf32> to vector<16xf32>
    %303 = vector.shape_cast %302 : vector<16xf32> to vector<16x1xf32>
    %cst_101 = arith.constant 3.200000e+01 : f32
    %304 = vector.broadcast %cst_101 : f32 to vector<16x1xf32>
    %305 = arith.divf %303, %304 : vector<16x1xf32>
    %306 = vector.broadcast %305 : vector<16x1xf32> to vector<16x32xf32>
    %307 = arith.subf %301, %306 : vector<16x32xf32>
    %308 = arith.mulf %307, %307 : vector<16x32xf32>
    %cst_102 = arith.constant dense<0.000000e+00> : vector<16xf32>
    %309 = vector.multi_reduction <add>, %308, %cst_102 [1] : vector<16x32xf32> to vector<16xf32>
    %310 = vector.shape_cast %309 : vector<16xf32> to vector<16x1xf32>
    %cst_103 = arith.constant 3.200000e+01 : f32
    %311 = vector.broadcast %cst_103 : f32 to vector<16x1xf32>
    %312 = arith.divf %310, %311 : vector<16x1xf32>
    %313 = vector.broadcast %305 : vector<16x1xf32> to vector<16x32xf32>
    %314 = arith.subf %301, %313 : vector<16x32xf32>
    %cst_104 = arith.constant 9.99999974E-6 : f32
    %315 = vector.broadcast %cst_104 : f32 to vector<16x1xf32>
    %316 = arith.addf %312, %315 : vector<16x1xf32>
    %317 = math.rsqrt %316 : vector<16x1xf32>
    %318 = vector.broadcast %317 : vector<16x1xf32> to vector<16x32xf32>
    %319 = arith.mulf %314, %318 : vector<16x32xf32>
    %320 = vector.broadcast %184 : vector<1x32xf32> to vector<16x32xf32>
    %321 = arith.mulf %319, %320 : vector<16x32xf32>
    %322 = vector.broadcast %185 : vector<1x32xf32> to vector<16x32xf32>
    %323 = arith.addf %321, %322 : vector<16x32xf32>
    %324 = arith.truncf %323 : vector<16x32xf32> to vector<16x32xbf16>
    %cst_105 = arith.constant dense<0.000000e+00> : vector<16x64xf32>
    %325 = tpu.matmul %324, %180, %cst_105 {dimension_numbers = #tpu.dot_dimension_numbers<[1], [0], [0], [1], [0, 0, 1, 1], [], []>} : vector<16x32xbf16>, vector<32x64xbf16>, vector<16x64xf32> -> vector<16x64xf32>
    %326 = vector.broadcast %186 : vector<1x64xf32> to vector<16x64xf32>
    %327 = arith.addf %325, %326 : vector<16x64xf32>
    %cst_106 = arith.constant 0.000000e+00 : f32
    %328 = vector.broadcast %cst_106 : f32 to vector<16x64xf32>
    %329 = arith.maximumf %327, %328 : vector<16x64xf32>
    %330 = arith.truncf %329 : vector<16x64xf32> to vector<16x64xbf16>
    %cst_107 = arith.constant dense<0.000000e+00> : vector<16x32xf32>
    %331 = tpu.matmul %330, %181, %cst_107 {dimension_numbers = #tpu.dot_dimension_numbers<[1], [0], [0], [1], [0, 0, 1, 1], [], []>} : vector<16x64xbf16>, vector<64x32xbf16>, vector<16x32xf32> -> vector<16x32xf32>
    %332 = vector.broadcast %187 : vector<1x32xf32> to vector<16x32xf32>
    %333 = arith.addf %331, %332 : vector<16x32xf32>
    %334 = arith.addf %323, %333 : vector<16x32xf32>
    %cst_108 = arith.constant dense<0.000000e+00> : vector<16xf32>
    %335 = vector.multi_reduction <add>, %334, %cst_108 [1] : vector<16x32xf32> to vector<16xf32>
    %336 = vector.shape_cast %335 : vector<16xf32> to vector<16x1xf32>
    %cst_109 = arith.constant 3.200000e+01 : f32
    %337 = vector.broadcast %cst_109 : f32 to vector<16x1xf32>
    %338 = arith.divf %336, %337 : vector<16x1xf32>
    %339 = vector.broadcast %338 : vector<16x1xf32> to vector<16x32xf32>
    %340 = arith.subf %334, %339 : vector<16x32xf32>
    %341 = arith.mulf %340, %340 : vector<16x32xf32>
    %cst_110 = arith.constant dense<0.000000e+00> : vector<16xf32>
    %342 = vector.multi_reduction <add>, %341, %cst_110 [1] : vector<16x32xf32> to vector<16xf32>
    %343 = vector.shape_cast %342 : vector<16xf32> to vector<16x1xf32>
    %cst_111 = arith.constant 3.200000e+01 : f32
    %344 = vector.broadcast %cst_111 : f32 to vector<16x1xf32>
    %345 = arith.divf %343, %344 : vector<16x1xf32>
    %346 = vector.broadcast %338 : vector<16x1xf32> to vector<16x32xf32>
    %347 = arith.subf %334, %346 : vector<16x32xf32>
    %cst_112 = arith.constant 9.99999974E-6 : f32
    %348 = vector.broadcast %cst_112 : f32 to vector<16x1xf32>
    %349 = arith.addf %345, %348 : vector<16x1xf32>
    %350 = math.rsqrt %349 : vector<16x1xf32>
    %351 = vector.broadcast %350 : vector<16x1xf32> to vector<16x32xf32>
    %352 = arith.mulf %347, %351 : vector<16x32xf32>
    %353 = vector.broadcast %188 : vector<1x32xf32> to vector<16x32xf32>
    %354 = arith.mulf %352, %353 : vector<16x32xf32>
    %355 = vector.broadcast %189 : vector<1x32xf32> to vector<16x32xf32>
    %356 = arith.addf %354, %355 : vector<16x32xf32>
    %357 = vector.shape_cast %356 : vector<16x32xf32> to vector<2x8x32xf32>
    %cst_113 = arith.constant dense<0.000000e+00> : vector<2x32xf32>
    %358 = vector.multi_reduction <add>, %357, %cst_113 [1] : vector<2x8x32xf32> to vector<2x32xf32>
    %cst_114 = arith.constant 8.000000e+00 : f32
    %359 = vector.broadcast %cst_114 : f32 to vector<2x32xf32>
    %360 = arith.divf %358, %359 : vector<2x32xf32>
    %c288 = arith.constant 288 : index
    %c0_115 = arith.constant 0 : index
    %361 = vector.load %arg1[%c288, %c0_115] : memref<320x128xbf16, #tpu.memory_space<vmem>>, vector<32x32xbf16>
    %c16 = arith.constant 16 : index
    %c0_116 = arith.constant 0 : index
    %362 = vector.load %arg2[%c16, %c0_116] : memref<24x128xf32, #tpu.memory_space<vmem>>, vector<1x32xf32>
    %363 = arith.truncf %360 : vector<2x32xf32> to vector<2x32xbf16>
    %cst_117 = arith.constant dense<0.000000e+00> : vector<2x32xf32>
    %364 = tpu.matmul %363, %361, %cst_117 {dimension_numbers = #tpu.dot_dimension_numbers<[1], [0], [0], [1], [0, 0, 1, 1], [], []>} : vector<2x32xbf16>, vector<32x32xbf16>, vector<2x32xf32> -> vector<2x32xf32>
    %365 = vector.broadcast %362 : vector<1x32xf32> to vector<2x32xf32>
    %366 = arith.addf %364, %365 : vector<2x32xf32>
    %367 = arith.negf %366 : vector<2x32xf32>
    %368 = math.exp %367 : vector<2x32xf32>
    %cst_118 = arith.constant 1.000000e+00 : f32
    %369 = vector.broadcast %cst_118 : f32 to vector<2x32xf32>
    %370 = arith.addf %369, %368 : vector<2x32xf32>
    %371 = arith.divf %369, %370 : vector<2x32xf32>
    %c0_119 = arith.constant 0 : index
    %c0_120 = arith.constant 0 : index
    %372 = vector.load %arg3[%c0_119, %c0_120] : memref<2x32xf32, #tpu.memory_space<vmem>>, vector<2x32xf32>
    tpu.vector_store %arg3[%c0_119, %c0_120], %371 {strides = array<i32>} : memref<2x32xf32, #tpu.memory_space<vmem>>, vector<2x32xf32>,
    return
  }
}

</mosaic_0001>

<llo_original>
// kernel: transformer_predictor.1
$region0: #{transformer_predictor.1}
  #allocation0 [shape = 'u32[]', space=smem, size = 0x4, offset = 0x4, fixed_abs, tag = 'smem constant byte address 0x4 - core index']
  #allocation1 [shape = 'u32[144,128]{1,0:T(1,128)}', space=vmem, size = 0x12000, scoped, tag = 'internal scratch']
  %s0 = inlined_call_operand.vmem [shape: f32[16,32], index: 0, kind: input, shape index: {}]
  %s1 = inlined_call_operand.vmem [shape: bf16[320,128], index: 1, kind: input, shape index: {}]
  %s2 = inlined_call_operand.vmem [shape: f32[24,128], index: 2, kind: input, shape index: {}]
  %s3 = inlined_call_operand.hbm [shape: f32[2,32], index: 3, kind: output, shape index: {}]
  %s4 = sld [smem:[#allocation0]]
  $region22: #{transformer_predictor.1} parent=0
    _
  %s6 = ssub.s32 1, %s4
  %s7 = scalar_select 0, %s6, %s4
  $region1: #{transformer_predictor.1} parent=0
    #allocation2 [shape = 'u8[1024]{0}', space=vmem, size = 0x400, scoped, tag = 'output window, operand 0, single buffered']
    #allocation3 [shape = 's32[1]{0}', space=sflag, size = 0x4, scoped, tag = 'scoped memory for transformer_predictor.1']
    %8 = vsyncpa [#allocation3], 0
    // Predicated region
    $region2: #{transformer_predictor.1} parent=1 // pred_check
      _
    $region3: #{transformer_predictor.1} parent=1 // pred_check_branch
      %10 = sbr.rel (0) target = $region5
    $region4: #{transformer_predictor.1} parent=1 // pred_region
      _
    $region5: #{transformer_predictor.1} parent=1 // pred_fallthru
      _
    // Predicated region
    $region6: #{transformer_predictor.1} parent=1 // pred_check
      _
    $region7: #{transformer_predictor.1} parent=1 // pred_check_branch
      %12 = sbr.rel (0) target = $region9
    $region8: #{transformer_predictor.1} parent=1 // pred_region
      _
    $region9: #{transformer_predictor.1} parent=1 // pred_fallthru
      _
    // Predicated region
    $region10: #{transformer_predictor.1} parent=1 // pred_check
      _
    $region11: #{transformer_predictor.1} parent=1 // pred_check_branch
      %14 = sbr.rel (0) target = $region13
    $region12: #{transformer_predictor.1} parent=1 // pred_region
      _
    $region13: #{transformer_predictor.1} parent=1 // pred_fallthru
      _
    %v16 = vld [vmem:[%s0] sm:$0xff]
    %v17 = vld [vmem:[%s0 + $0x8] sm:$0xff]
    %v18 = vld [vmem:[%s1] sm:$0xf]
    %v19 = vld [vmem:[%s1 + $0x4] sm:$0xf]
    %v20 = vld [vmem:[%s1 + $0x8] sm:$0xf]
    %v21 = vld [vmem:[%s1 + $0xc] sm:$0xf]
    %v22 = vld [vmem:[%s1 + $0x10] sm:$0xf]
    %v23 = vld [vmem:[%s1 + $0x14] sm:$0xf]
    %v24 = vld [vmem:[%s1 + $0x18] sm:$0xf]
    %v25 = vld [vmem:[%s1 + $0x1c] sm:$0xf]
    %v26 = vld [vmem:[%s1 + $0x20] sm:$0xf]
    %v27 = vld [vmem:[%s1 + $0x24] sm:$0xf]
    %v28 = vld [vmem:[%s1 + $0x28] sm:$0xf]
    %v29 = vld [vmem:[%s1 + $0x2c] sm:$0xf]
    %v30 = vld [vmem:[%s1 + $0x30] sm:$0xf]
    %v31 = vld [vmem:[%s1 + $0x34] sm:$0xf]
    %v32 = vld [vmem:[%s1 + $0x38] sm:$0xf]
    %v33 = vld [vmem:[%s1 + $0x3c] sm:$0xf]
    %v34 = vld [vmem:[%s2] sm:$0x1]
    %v35 = vld [vmem:[%s2 + $0x1] sm:$0x1]
    %v36 = vld [vmem:[%s2 + $0x2] sm:$0x1]
    %v37 = vld [vmem:[%s2 + $0x3] sm:$0x1]
    %v38 = vld [vmem:[%s2 + $0x4] sm:$0x1]
    %v39 = vld [vmem:[%s2 + $0x5] sm:$0x1]
    %v40 = vld [vmem:[%s2 + $0x6] sm:$0x1]
    %v41 = vld [vmem:[%s2 + $0x7] sm:$0x1]
    %v42 = vpack.c.bf16 %v17, %v16
    %v43 = vlaneseq
    %v44 = vshrl.u32 %v43, 7
    %v45 = vsub.s32 0, %v44
    %v46 = vrot.slane %v34, %v45
    %v51 = vunpack.c.l.b16 %v18
    %v52 = vunpack.c.l.b16 %v19
    %v53 = vunpack.c.l.b16 %v20
    %v54 = vunpack.c.l.b16 %v21
    %v55 = vpack.c.b16 %v52, %v51
    %v56 = vpack.c.b16 %v54, %v53
    %vm59 = vcmask 261120
    %v61 = vsel %vm59, %v42, 0
    %63 = vmatprep.subr.bf16.mxu0 0
    %64 = vmatpush1.bf16.msra.mxu0 %v55
    %65 = vmatprep.subr.bf16.mxu0 0
    %66 = vmatpush1.bf16.msra.mxu0 %v56
    %67 = vmatprep.subr.bf16.mxu0 0
    %68 = vmatpush1.bf16.msra.mxu0 0
    %69 = vmatprep.subr.bf16.mxu0 0
    %70 = vmatpush1.bf16.msra.mxu0 0
    %71 = vmatprep.subr.bf16.mxu0 0
    %72 = vmatpush1.bf16.msra.mxu0 0
    %73 = vmatprep.subr.bf16.mxu0 0
    %74 = vmatpush1.bf16.msra.mxu0 0
    %75 = vmatprep.subr.bf16.mxu0 0
    %76 = vmatpush1.bf16.msra.mxu0 0
    %77 = vmatprep.subr.bf16.mxu0 0
    %78 = vmatpush1.bf16.msra.mxu0 0
    %79 = vmatprep.subr.bf16.mxu0 0
    %80 = vmatpush1.bf16.msra.mxu0 0
    %81 = vmatprep.subr.bf16.mxu0 0
    %82 = vmatpush1.bf16.msra.mxu0 0
    %83 = vmatprep.subr.bf16.mxu0 0
    %84 = vmatpush1.bf16.msra.mxu0 0
    %85 = vmatprep.subr.bf16.mxu0 0
    %86 = vmatpush1.bf16.msra.mxu0 0
    %87 = vmatprep.subr.bf16.mxu0 0
    %88 = vmatpush1.bf16.msra.mxu0 0
    %89 = vmatprep.subr.bf16.mxu0 0
    %90 = vmatpush1.bf16.msra.mxu0 0
    %91 = vmatprep.subr.bf16.mxu0 0
    %92 = vmatpush1.bf16.msra.mxu0 0
    %93 = vmatprep.subr.bf16.mxu0 0
    %94 = vmatpush1.bf16.msra.mxu0 0
    %95 = vmatprep.mubr.bf16.mxu0 0
    %96 = vmatmul.mubr.bf16.gmra.mrb[0].mxu0 %v61
    %v97 = vpop.f32.mrb[0].mxu0
    %v98 = vadd.f32 %v46, %v97
    %v99 = vpop.f32.mrb[0].mxu0
    %v100 = vpop.f32.mrb[0].mxu0
    %v101 = vadd.f32 %v46, %v100
    %v102 = vpop.f32.mrb[0].mxu0
    %103 = vdwg.mxu0
    %v104 = vpack.c.bf16 %v98, %v98
    %v105 = vpack.c.bf16 %v101, %v101
    %107 = vrot.lane.b32.xlu0 %v104, 96
    %v108 = vpop.permute.xlu0 %107
    %vm109 = vcmask 64512
    %v111 = vsel %vm109, %v104, 0
    %v114 = vsel %vm109, %v108, 0
    %116 = vmatprep.subr.bf16.mxu0 0
    %117 = vmatpush1.bf16.xpose.msra.mxu0 %v114
    %118 = vmatprep.subr.bf16.mxu0 0
    %119 = vmatpush1.bf16.xpose.msra.mxu0 0
    %120 = vmatprep.subr.bf16.mxu0 0
    %121 = vmatpush1.bf16.xpose.msra.mxu0 0
    %122 = vmatprep.subr.bf16.mxu0 0
    %123 = vmatpush1.bf16.xpose.msra.mxu0 0
    %124 = vmatprep.subr.bf16.mxu0 0
    %125 = vmatpush1.bf16.xpose.msra.mxu0 0
    %126 = vmatprep.subr.bf16.mxu0 0
    %127 = vmatpush1.bf16.xpose.msra.mxu0 0
    %128 = vmatprep.subr.bf16.mxu0 0
    %129 = vmatpush1.bf16.xpose.msra.mxu0 0
    %130 = vmatprep.subr.bf16.mxu0 0
    %131 = vmatpush1.bf16.xpose.msra.mxu0 0
    %132 = vmatprep.subr.bf16.mxu0 0
    %133 = vmatpush1.bf16.xpose.msra.mxu0 0
    %134 = vmatprep.subr.bf16.mxu0 0
    %135 = vmatpush1.bf16.xpose.msra.mxu0 0
    %136 = vmatprep.subr.bf16.mxu0 0
    %137 = vmatpush1.bf16.xpose.msra.mxu0 0
    %138 = vmatprep.subr.bf16.mxu0 0
    %139 = vmatpush1.bf16.xpose.msra.mxu0 0
    %140 = vmatprep.subr.bf16.mxu0 0
    %141 = vmatpush1.bf16.xpose.msra.mxu0 0
    %142 = vmatprep.subr.bf16.mxu0 0
    %143 = vmatpush1.bf16.xpose.msra.mxu0 0
    %144 = vmatprep.subr.bf16.mxu0 0
    %145 = vmatpush1.bf16.xpose.msra.mxu0 0
    %146 = vmatprep.subr.bf16.mxu0 0
    %147 = vmatpush1.bf16.xpose.msra.mxu0 0
    %148 = vmatprep.mubr.bf16.mxu0 0
    %149 = vmatmul.mubr.bf16.gmra.mrb[0].mxu0 %v111
    %v150 = vpop.f32.mrb[0].mxu0
    %v151 = vadd.f32 0.0, %v150
    %v152 = vpop.f32.mrb[0].mxu0
    %v153 = vpop.f32.mrb[0].mxu0
    %v154 = vpop.f32.mrb[0].mxu0
    %155 = vdwg.mxu0
    %157 = vrot.lane.b32.xlu0 %v105, 96
    %v158 = vpop.permute.xlu0 %157
    %v160 = vsel %vm109, %v105, 0
    %v163 = vsel %vm109, %v158, 0
    %165 = vmatprep.subr.bf16.mxu0 0
    %166 = vmatpush1.bf16.xpose.msra.mxu0 %v163
    %167 = vmatprep.subr.bf16.mxu0 0
    %168 = vmatpush1.bf16.xpose.msra.mxu0 0
    %169 = vmatprep.subr.bf16.mxu0 0
    %170 = vmatpush1.bf16.xpose.msra.mxu0 0
    %171 = vmatprep.subr.bf16.mxu0 0
    %172 = vmatpush1.bf16.xpose.msra.mxu0 0
    %173 = vmatprep.subr.bf16.mxu0 0
    %174 = vmatpush1.bf16.xpose.msra.mxu0 0
    %175 = vmatprep.subr.bf16.mxu0 0
    %176 = vmatpush1.bf16.xpose.msra.mxu0 0
    %177 = vmatprep.subr.bf16.mxu0 0
    %178 = vmatpush1.bf16.xpose.msra.mxu0 0
    %179 = vmatprep.subr.bf16.mxu0 0
    %180 = vmatpush1.bf16.xpose.msra.mxu0 0
    %181 = vmatprep.subr.bf16.mxu0 0
    %182 = vmatpush1.bf16.xpose.msra.mxu0 0
    %183 = vmatprep.subr.bf16.mxu0 0
    %184 = vmatpush1.bf16.xpose.msra.mxu0 0
    %185 = vmatprep.subr.bf16.mxu0 0
    %186 = vmatpush1.bf16.xpose.msra.mxu0 0
    %187 = vmatprep.subr.bf16.mxu0 0
    %188 = vmatpush1.bf16.xpose.msra.mxu0 0
    %189 = vmatprep.subr.bf16.mxu0 0
    %190 = vmatpush1.bf16.xpose.msra.mxu0 0
    %191 = vmatprep.subr.bf16.mxu0 0
    %192 = vmatpush1.bf16.xpose.msra.mxu0 0
    %193 = vmatprep.subr.bf16.mxu0 0
    %194 = vmatpush1.bf16.xpose.msra.mxu0 0
    %195 = vmatprep.subr.bf16.mxu0 0
    %196 = vmatpush1.bf16.xpose.msra.mxu0 0
    %197 = vmatprep.mubr.bf16.mxu0 0
    %198 = vmatmul.mubr.bf16.gmra.mrb[0].mxu0 %v160
    %v199 = vpop.f32.mrb[0].mxu0
    %v200 = vadd.f32 0.0, %v199
    %v201 = vpop.f32.mrb[0].mxu0
    %v202 = vpop.f32.mrb[0].mxu0
    %v203 = vpop.f32.mrb[0].mxu0
    %204 = vdwg.mxu0
    %v205 = vmul.f32 %v151, 0.35355338
    %v206 = vmul.f32 %v200, 0.35355338
    %v207 = vsel %vm109, %v205, -inf
    %208 = vmax.xlane.f32.xlu0 %v207
    %v209 = vpop.xlane.xlu0 %208
    %v210 = vsel %vm109, %v206, -inf
    %211 = vmax.xlane.f32.xlu0 %v210
    %v212 = vpop.xlane.xlu0 %211
    %v213 = vsub.f32 %v205, %v209
    %v214 = vsub.f32 %v206, %v212
    %v215 = vmul.f32 %v213, 1.442695
    %v216 = vpow.pop %v215
    %v217 = vmul.f32 %v214, 1.442695
    %v218 = vpow.pop %v217
    %v219 = vsel %vm109, %v216, 0.0
    %220 = vadd.xlane.f32.xlu0 %v219
    %v221 = vpop.xlane.xlu0 %220
    %v222 = vsel %vm109, %v218, 0.0
    %223 = vadd.xlane.f32.xlu0 %v222
    %v224 = vpop.xlane.xlu0 %223
    %v225 = vrcp.pop %v221
    %v226 = vmul.f32 %v216, %v225
    %v227 = vrcp.pop %v224
    %v228 = vmul.f32 %v218, %v227
    %v229 = vpack.c.bf16 %v226, %v226
    %v230 = vpack.c.bf16 %v228, %v228
    %231 = vrot.lane.b32.xlu0 %v104, 64
    %v232 = vpop.permute.xlu0 %231
    %v234 = vsel %vm109, %v229, 0
    %vm236 = vcmask 1043456
    %v238 = vsel %vm236, %v232, 0
    %240 = vmatprep.subr.bf16.mxu0 0
    %241 = vmatpush1.bf16.msra.mxu0 %v238
    %242 = vmatprep.subr.bf16.mxu0 0
    %243 = vmatpush1.bf16.msra.mxu0 0
    %244 = vmatprep.subr.bf16.mxu0 0
    %245 = vmatpush1.bf16.msra.mxu0 0
    %246 = vmatprep.subr.bf16.mxu0 0
    %247 = vmatpush1.bf16.msra.mxu0 0
    %248 = vmatprep.subr.bf16.mxu0 0
    %249 = vmatpush1.bf16.msra.mxu0 0
    %250 = vmatprep.subr.bf16.mxu0 0
    %251 = vmatpush1.bf16.msra.mxu0 0
    %252 = vmatprep.subr.bf16.mxu0 0
    %253 = vmatpush1.bf16.msra.mxu0 0
    %254 = vmatprep.subr.bf16.mxu0 0
    %255 = vmatpush1.bf16.msra.mxu0 0
    %256 = vmatprep.subr.bf16.mxu0 0
    %257 = vmatpush1.bf16.msra.mxu0 0
    %258 = vmatprep.subr.bf16.mxu0 0
    %259 = vmatpush1.bf16.msra.mxu0 0
    %260 = vmatprep.subr.bf16.mxu0 0
    %261 = vmatpush1.bf16.msra.mxu0 0
    %262 = vmatprep.subr.bf16.mxu0 0
    %263 = vmatpush1.bf16.msra.mxu0 0
    %264 = vmatprep.subr.bf16.mxu0 0
    %265 = vmatpush1.bf16.msra.mxu0 0
    %266 = vmatprep.subr.bf16.mxu0 0
    %267 = vmatpush1.bf16.msra.mxu0 0
    %268 = vmatprep.subr.bf16.mxu0 0
    %269 = vmatpush1.bf16.msra.mxu0 0
    %270 = vmatprep.subr.bf16.mxu0 0
    %271 = vmatpush1.bf16.msra.mxu0 0
    %272 = vmatprep.mubr.bf16.mxu0 0
    %273 = vmatmul.mubr.bf16.gmra.mrb[0].mxu0 %v234
    %v274 = vpop.f32.mrb[0].mxu0
    %v275 = vadd.f32 0.0, %v274
    %v276 = vpop.f32.mrb[0].mxu0
    %v277 = vpop.f32.mrb[0].mxu0
    %v278 = vpop.f32.mrb[0].mxu0
    %279 = vdwg.mxu0
    %280 = vrot.lane.b32.xlu0 %v105, 64
    %v281 = vpop.permute.xlu0 %280
    %v283 = vsel %vm109, %v230, 0
    %v286 = vsel %vm236, %v281, 0
    %288 = vmatprep.subr.bf16.mxu0 0
    %289 = vmatpush1.bf16.msra.mxu0 %v286
    %290 = vmatprep.subr.bf16.mxu0 0
    %291 = vmatpush1.bf16.msra.mxu0 0
    %292 = vmatprep.subr.bf16.mxu0 0
    %293 = vmatpush1.bf16.msra.mxu0 0
    %294 = vmatprep.subr.bf16.mxu0 0
    %295 = vmatpush1.bf16.msra.mxu0 0
    %296 = vmatprep.subr.bf16.mxu0 0
    %297 = vmatpush1.bf16.msra.mxu0 0
    %298 = vmatprep.subr.bf16.mxu0 0
    %299 = vmatpush1.bf16.msra.mxu0 0
    %300 = vmatprep.subr.bf16.mxu0 0
    %301 = vmatpush1.bf16.msra.mxu0 0
    %302 = vmatprep.subr.bf16.mxu0 0
    %303 = vmatpush1.bf16.msra.mxu0 0
    %304 = vmatprep.subr.bf16.mxu0 0
    %305 = vmatpush1.bf16.msra.mxu0 0
    %306 = vmatprep.subr.bf16.mxu0 0
    %307 = vmatpush1.bf16.msra.mxu0 0
    %308 = vmatprep.subr.bf16.mxu0 0
    %309 = vmatpush1.bf16.msra.mxu0 0
    %310 = vmatprep.subr.bf16.mxu0 0
    %311 = vmatpush1.bf16.msra.mxu0 0
    %312 = vmatprep.subr.bf16.mxu0 0
    %313 = vmatpush1.bf16.msra.mxu0 0
    %314 = vmatprep.subr.bf16.mxu0 0
    %315 = vmatpush1.bf16.msra.mxu0 0
    %316 = vmatprep.subr.bf16.mxu0 0
    %317 = vmatpush1.bf16.msra.mxu0 0
    %318 = vmatprep.subr.bf16.mxu0 0
    %319 = vmatpush1.bf16.msra.mxu0 0
    %320 = vmatprep.mubr.bf16.mxu0 0
    %321 = vmatmul.mubr.bf16.gmra.mrb[0].mxu0 %v283
    %v322 = vpop.f32.mrb[0].mxu0
    %v323 = vadd.f32 0.0, %v322
    %v324 = vpop.f32.mrb[0].mxu0
    %v325 = vpop.f32.mrb[0].mxu0
    %v326 = vpop.f32.mrb[0].mxu0
    %327 = vdwg.mxu0
    %v328 = vld [vmem:[%s1 + $0x40] sm:$0xf]
    %v329 = vpack.c.bf16 %v323, %v275
    %330 = vrot.lane.b32.xlu0 %v104, 120
    %v331 = vpop.permute.xlu0 %330
    %332 = vrot.lane.b32.xlu0 %v104, 88
    %v333 = vpop.permute.xlu0 %332
    %v335 = vsel %vm109, %v331, 0
    %v338 = vsel %vm109, %v333, 0
    %340 = vmatprep.subr.bf16.mxu0 0
    %341 = vmatpush1.bf16.xpose.msra.mxu0 %v338
    %342 = vmatprep.subr.bf16.mxu0 0
    %343 = vmatpush1.bf16.xpose.msra.mxu0 0
    %344 = vmatprep.subr.bf16.mxu0 0
    %345 = vmatpush1.bf16.xpose.msra.mxu0 0
    %346 = vmatprep.subr.bf16.mxu0 0
    %347 = vmatpush1.bf16.xpose.msra.mxu0 0
    %348 = vmatprep.subr.bf16.mxu0 0
    %349 = vmatpush1.bf16.xpose.msra.mxu0 0
    %350 = vmatprep.subr.bf16.mxu0 0
    %351 = vmatpush1.bf16.xpose.msra.mxu0 0
    %352 = vmatprep.subr.bf16.mxu0 0
    %353 = vmatpush1.bf16.xpose.msra.mxu0 0
    %354 = vmatprep.subr.bf16.mxu0 0
    %355 = vmatpush1.bf16.xpose.msra.mxu0 0
    %356 = vmatprep.subr.bf16.mxu0 0
    %357 = vmatpush1.bf16.xpose.msra.mxu0 0
    %358 = vmatprep.subr.bf16.mxu0 0
    %359 = vmatpush1.bf16.xpose.msra.mxu0 0
    %360 = vmatprep.subr.bf16.mxu0 0
    %361 = vmatpush1.bf16.xpose.msra.mxu0 0
    %362 = vmatprep.subr.bf16.mxu0 0
    %363 = vmatpush1.bf16.xpose.msra.mxu0 0
    %364 = vmatprep.subr.bf16.mxu0 0
    %365 = vmatpush1.bf16.xpose.msra.mxu0 0
    %366 = vmatprep.subr.bf16.mxu0 0
    %367 = vmatpush1.bf16.xpose.msra.mxu0 0
    %368 = vmatprep.subr.bf16.mxu0 0
    %369 = vmatpush1.bf16.xpose.msra.mxu0 0
    %370 = vmatprep.subr.bf16.mxu0 0
    %371 = vmatpush1.bf16.xpose.msra.mxu0 0
    %372 = vmatprep.mubr.bf16.mxu0 0
    %373 = vmatmul.mubr.bf16.gmra.mrb[0].mxu0 %v335
    %v374 = vpop.f32.mrb[0].mxu0
    %v375 = vadd.f32 0.0, %v374
    %v376 = vpop.f32.mrb[0].mxu0
    %v377 = vpop.f32.mrb[0].mxu0
    %v378 = vpop.f32.mrb[0].mxu0
    %379 = vdwg.mxu0
    %380 = vrot.lane.b32.xlu0 %v105, 120
    %v381 = vpop.permute.xlu0 %380
    %382 = vrot.lane.b32.xlu0 %v105, 88
    %v383 = vpop.permute.xlu0 %382
    %v385 = vsel %vm109, %v381, 0
    %v388 = vsel %vm109, %v383, 0
    %390 = vmatprep.subr.bf16.mxu0 0
    %391 = vmatpush1.bf16.xpose.msra.mxu0 %v388
    %392 = vmatprep.subr.bf16.mxu0 0
    %393 = vmatpush1.bf16.xpose.msra.mxu0 0
    %394 = vmatprep.subr.bf16.mxu0 0
    %395 = vmatpush1.bf16.xpose.msra.mxu0 0
    %396 = vmatprep.subr.bf16.mxu0 0
    %397 = vmatpush1.bf16.xpose.msra.mxu0 0
    %398 = vmatprep.subr.bf16.mxu0 0
    %399 = vmatpush1.bf16.xpose.msra.mxu0 0
    %400 = vmatprep.subr.bf16.mxu0 0
    %401 = vmatpush1.bf16.xpose.msra.mxu0 0
    %402 = vmatprep.subr.bf16.mxu0 0
    %403 = vmatpush1.bf16.xpose.msra.mxu0 0
    %404 = vmatprep.subr.bf16.mxu0 0
    %405 = vmatpush1.bf16.xpose.msra.mxu0 0
    %406 = vmatprep.subr.bf16.mxu0 0
    %407 = vmatpush1.bf16.xpose.msra.mxu0 0
    %408 = vmatprep.subr.bf16.mxu0 0
    %409 = vmatpush1.bf16.xpose.msra.mxu0 0
    %410 = vmatprep.subr.bf16.mxu0 0
    %411 = vmatpush1.bf16.xpose.msra.mxu0 0
    %412 = vmatprep.subr.bf16.mxu0 0
    %413 = vmatpush1.bf16.xpose.msra.mxu0 0
    %414 = vmatprep.subr.bf16.mxu0 0
    %415 = vmatpush1.bf16.xpose.msra.mxu0 0
    %416 = vmatprep.subr.bf16.mxu0 0
    %417 = vmatpush1.bf16.xpose.msra.mxu0 0
    %418 = vmatprep.subr.bf16.mxu0 0
    %419 = vmatpush1.bf16.xpose.msra.mxu0 0
    %420 = vmatprep.subr.bf16.mxu0 0
    %421 = vmatpush1.bf16.xpose.msra.mxu0 0
    %422 = vmatprep.mubr.bf16.mxu0 0
    %423 = vmatmul.mubr.bf16.gmra.mrb[0].mxu0 %v385
    %v424 = vpop.f32.mrb[0].mxu0
    %v425 = vadd.f32 0.0, %v424
    %v426 = vpop.f32.mrb[0].mxu0
    %v427 = vpop.f32.mrb[0].mxu0
    %v428 = vpop.f32.mrb[0].mxu0
    %429 = vdwg.mxu0
    %v430 = vmul.f32 %v375, 0.35355338
    %v431 = vmul.f32 %v425, 0.35355338
    %v432 = vsel %vm109, %v430, -inf
    %433 = vmax.xlane.f32.xlu0 %v432
    %v434 = vpop.xlane.xlu0 %433
    %v435 = vsel %vm109, %v431, -inf
    %436 = vmax.xlane.f32.xlu0 %v435
    %v437 = vpop.xlane.xlu0 %436
    %v438 = vsub.f32 %v430, %v434
    %v439 = vsub.f32 %v431, %v437
    %v440 = vmul.f32 %v438, 1.442695
    %v441 = vpow.pop %v440
    %v442 = vmul.f32 %v439, 1.442695
    %v443 = vpow.pop %v442
    %v444 = vsel %vm109, %v441, 0.0
    %445 = vadd.xlane.f32.xlu0 %v444
    %v446 = vpop.xlane.xlu0 %445
    %v447 = vsel %vm109, %v443, 0.0
    %448 = vadd.xlane.f32.xlu0 %v447
    %v449 = vpop.xlane.xlu0 %448
    %v450 = vrcp.pop %v446
    %v451 = vmul.f32 %v441, %v450
    %v452 = vrcp.pop %v449
    %v453 = vmul.f32 %v443, %v452
    %v454 = vpack.c.bf16 %v451, %v451
    %v455 = vpack.c.bf16 %v453, %v453
    %456 = vrot.lane.b32.xlu0 %v104, 56
    %v457 = vpop.permute.xlu0 %456
    %v459 = vsel %vm109, %v454, 0
    %v462 = vsel %vm236, %v457, 0
    %464 = vmatprep.subr.bf16.mxu0 0
    %465 = vmatpush1.bf16.msra.mxu0 %v462
    %466 = vmatprep.subr.bf16.mxu0 0
    %467 = vmatpush1.bf16.msra.mxu0 0
    %468 = vmatprep.subr.bf16.mxu0 0
    %469 = vmatpush1.bf16.msra.mxu0 0
    %470 = vmatprep.subr.bf16.mxu0 0
    %471 = vmatpush1.bf16.msra.mxu0 0
    %472 = vmatprep.subr.bf16.mxu0 0
    %473 = vmatpush1.bf16.msra.mxu0 0
    %474 = vmatprep.subr.bf16.mxu0 0
    %475 = vmatpush1.bf16.msra.mxu0 0
    %476 = vmatprep.subr.bf16.mxu0 0
    %477 = vmatpush1.bf16.msra.mxu0 0
    %478 = vmatprep.subr.bf16.mxu0 0
    %479 = vmatpush1.bf16.msra.mxu0 0
    %480 = vmatprep.subr.bf16.mxu0 0
    %481 = vmatpush1.bf16.msra.mxu0 0
    %482 = vmatprep.subr.bf16.mxu0 0
    %483 = vmatpush1.bf16.msra.mxu0 0
    %484 = vmatprep.subr.bf16.mxu0 0
    %485 = vmatpush1.bf16.msra.mxu0 0
    %486 = vmatprep.subr.bf16.mxu0 0
    %487 = vmatpush1.bf16.msra.mxu0 0
    %488 = vmatprep.subr.bf16.mxu0 0
    %489 = vmatpush1.bf16.msra.mxu0 0
    %490 = vmatprep.subr.bf16.mxu0 0
    %491 = vmatpush1.bf16.msra.mxu0 0
    %492 = vmatprep.subr.bf16.mxu0 0
    %493 = vmatpush1.bf16.msra.mxu0 0
    %494 = vmatprep.subr.bf16.mxu0 0
    %495 = vmatpush1.bf16.msra.mxu0 0
    %496 = vmatprep.mubr.bf16.mxu0 0
    %497 = vmatmul.mubr.bf16.gmra.mrb[0].mxu0 %v459
    %v498 = vpop.f32.mrb[0].mxu0
    %v499 = vadd.f32 0.0, %v498
    %v500 = vpop.f32.mrb[0].mxu0
    %v501 = vpop.f32.mrb[0].mxu0
    %v502 = vpop.f32.mrb[0].mxu0
    %503 = vdwg.mxu0
    %504 = vrot.lane.b32.xlu0 %v105, 56
    %v505 = vpop.permute.xlu0 %504
    %v507 = vsel %vm109, %v455, 0
    %v510 = vsel %vm236, %v505, 0
    %512 = vmatprep.subr.bf16.mxu0 0
    %513 = vmatpush1.bf16.msra.mxu0 %v510
    %514 = vmatprep.subr.bf16.mxu0 0
    %515 = vmatpush1.bf16.msra.mxu0 0
    %516 = vmatprep.subr.bf16.mxu0 0
    %517 = vmatpush1.bf16.msra.mxu0 0
    %518 = vmatprep.subr.bf16.mxu0 0
    %519 = vmatpush1.bf16.msra.mxu0 0
    %520 = vmatprep.subr.bf16.mxu0 0
    %521 = vmatpush1.bf16.msra.mxu0 0
    %522 = vmatprep.subr.bf16.mxu0 0
    %523 = vmatpush1.bf16.msra.mxu0 0
    %524 = vmatprep.subr.bf16.mxu0 0
    %525 = vmatpush1.bf16.msra.mxu0 0
    %526 = vmatprep.subr.bf16.mxu0 0
    %527 = vmatpush1.bf16.msra.mxu0 0
    %528 = vmatprep.subr.bf16.mxu0 0
    %529 = vmatpush1.bf16.msra.mxu0 0
    %530 = vmatprep.subr.bf16.mxu0 0
    %531 = vmatpush1.bf16.msra.mxu0 0
    %532 = vmatprep.subr.bf16.mxu0 0
    %533 = vmatpush1.bf16.msra.mxu0 0
    %534 = vmatprep.subr.bf16.mxu0 0
    %535 = vmatpush1.bf16.msra.mxu0 0
    %536 = vmatprep.subr.bf16.mxu0 0
    %537 = vmatpush1.bf16.msra.mxu0 0
    %538 = vmatprep.subr.bf16.mxu0 0
    %539 = vmatpush1.bf16.msra.mxu0 0
    %540 = vmatprep.subr.bf16.mxu0 0
    %541 = vmatpush1.bf16.msra.mxu0 0
    %542 = vmatprep.subr.bf16.mxu0 0
    %543 = vmatpush1.bf16.msra.mxu0 0
    %544 = vmatprep.mubr.bf16.mxu0 0
    %545 = vmatmul.mubr.bf16.gmra.mrb[0].mxu0 %v507
    %v546 = vpop.f32.mrb[0].mxu0
    %v547 = vadd.f32 0.0, %v546
    %v548 = vpop.f32.mrb[0].mxu0
    %v549 = vpop.f32.mrb[0].mxu0
    %v550 = vpop.f32.mrb[0].mxu0
    %551 = vdwg.mxu0
    %v552 = vld [vmem:[%s1 + $0x40] sm:$0xf]
    %v553 = vpack.c.bf16 %v547, %v499
    %v555 = vunpack.c.l.b16 %v552
    %v556 = vpack.c.b16 %v555, %v555
    %557 = vrot.lane.b32.xlu0 %v556, 96
    %v558 = vpop.permute.xlu0 %557
    %v560 = vsel %vm109, %v553, 0
    %v563 = vsel %vm236, %v558, 0
    %565 = vmatprep.subr.bf16.mxu0 0
    %566 = vmatpush1.bf16.msra.mxu0 %v563
    %567 = vmatprep.subr.bf16.mxu0 0
    %568 = vmatpush1.bf16.msra.mxu0 0
    %569 = vmatprep.subr.bf16.mxu0 0
    %570 = vmatpush1.bf16.msra.mxu0 0
    %571 = vmatprep.subr.bf16.mxu0 0
    %572 = vmatpush1.bf16.msra.mxu0 0
    %573 = vmatprep.subr.bf16.mxu0 0
    %574 = vmatpush1.bf16.msra.mxu0 0
    %575 = vmatprep.subr.bf16.mxu0 0
    %576 = vmatpush1.bf16.msra.mxu0 0
    %577 = vmatprep.subr.bf16.mxu0 0
    %578 = vmatpush1.bf16.msra.mxu0 0
    %579 = vmatprep.subr.bf16.mxu0 0
    %580 = vmatpush1.bf16.msra.mxu0 0
    %581 = vmatprep.subr.bf16.mxu0 0
    %582 = vmatpush1.bf16.msra.mxu0 0
    %583 = vmatprep.subr.bf16.mxu0 0
    %584 = vmatpush1.bf16.msra.mxu0 0
    %585 = vmatprep.subr.bf16.mxu0 0
    %586 = vmatpush1.bf16.msra.mxu0 0
    %587 = vmatprep.subr.bf16.mxu0 0
    %588 = vmatpush1.bf16.msra.mxu0 0
    %589 = vmatprep.subr.bf16.mxu0 0
    %590 = vmatpush1.bf16.msra.mxu0 0
    %591 = vmatprep.subr.bf16.mxu0 0
    %592 = vmatpush1.bf16.msra.mxu0 0
    %593 = vmatprep.subr.bf16.mxu0 0
    %594 = vmatpush1.bf16.msra.mxu0 0
    %595 = vmatprep.subr.bf16.mxu0 0
    %596 = vmatpush1.bf16.msra.mxu0 0
    %597 = vmatprep.mubr.bf16.mxu0 0
    %598 = vmatmul.mubr.bf16.gmra.mrb[0].mxu0 %v560
    %v599 = vpop.f32.mrb[0].mxu0
    %v600 = vadd.f32 0.0, %v599
    %v601 = vpop.f32.mrb[0].mxu0
    %v602 = vpop.f32.mrb[0].mxu0
    %v603 = vadd.f32 0.0, %v602
    %v604 = vpop.f32.mrb[0].mxu0
    %605 = vdwg.mxu0
    %v607 = vsel %vm109, %v329, 0
    %v610 = vsel %vm236, %v328, 0
    %612 = vmatprep.subr.bf16.mxu0 0
    %613 = vmatpush1.bf16.msra.mxu0 %v610
    %614 = vmatprep.subr.bf16.mxu0 0
    %615 = vmatpush1.bf16.msra.mxu0 0
    %616 = vmatprep.subr.bf16.mxu0 0
    %617 = vmatpush1.bf16.msra.mxu0 0
    %618 = vmatprep.subr.bf16.mxu0 0
    %619 = vmatpush1.bf16.msra.mxu0 0
    %620 = vmatprep.subr.bf16.mxu0 0
    %621 = vmatpush1.bf16.msra.mxu0 0
    %622 = vmatprep.subr.bf16.mxu0 0
    %623 = vmatpush1.bf16.msra.mxu0 0
    %624 = vmatprep.subr.bf16.mxu0 0
    %625 = vmatpush1.bf16.msra.mxu0 0
    %626 = vmatprep.subr.bf16.mxu0 0
    %627 = vmatpush1.bf16.msra.mxu0 0
    %628 = vmatprep.subr.bf16.mxu0 0
    %629 = vmatpush1.bf16.msra.mxu0 0
    %630 = vmatprep.subr.bf16.mxu0 0
    %631 = vmatpush1.bf16.msra.mxu0 0
    %632 = vmatprep.subr.bf16.mxu0 0
    %633 = vmatpush1.bf16.msra.mxu0 0
    %634 = vmatprep.subr.bf16.mxu0 0
    %635 = vmatpush1.bf16.msra.mxu0 0
    %636 = vmatprep.subr.bf16.mxu0 0
    %637 = vmatpush1.bf16.msra.mxu0 0
    %638 = vmatprep.subr.bf16.mxu0 0
    %639 = vmatpush1.bf16.msra.mxu0 0
    %640 = vmatprep.subr.bf16.mxu0 0
    %641 = vmatpush1.bf16.msra.mxu0 0
    %642 = vmatprep.subr.bf16.mxu0 0
    %643 = vmatpush1.bf16.msra.mxu0 0
    %644 = vmatprep.mubr.bf16.mxu0 0
    %645 = vmatmul.mubr.bf16.gmra.mrb[0].mxu0 %v607
    %v646 = vpop.f32.mrb[0].mxu0
    %v647 = vadd.f32 %v600, %v646
    %v648 = vpop.f32.mrb[0].mxu0
    %v649 = vpop.f32.mrb[0].mxu0
    %v650 = vadd.f32 %v603, %v649
    %v651 = vpop.f32.mrb[0].mxu0
    %652 = vdwg.mxu0
    %653 = vrot.lane.b32.xlu0 %v104, 112
    %v654 = vpop.permute.xlu0 %653
    %655 = vrot.lane.b32.xlu0 %v104, 80
    %v656 = vpop.permute.xlu0 %655
    %v658 = vsel %vm109, %v654, 0
    %v661 = vsel %vm109, %v656, 0
    %663 = vmatprep.subr.bf16.mxu0 0
    %664 = vmatpush1.bf16.xpose.msra.mxu0 %v661
    %665 = vmatprep.subr.bf16.mxu0 0
    %666 = vmatpush1.bf16.xpose.msra.mxu0 0
    %667 = vmatprep.subr.bf16.mxu0 0
    %668 = vmatpush1.bf16.xpose.msra.mxu0 0
    %669 = vmatprep.subr.bf16.mxu0 0
    %670 = vmatpush1.bf16.xpose.msra.mxu0 0
    %671 = vmatprep.subr.bf16.mxu0 0
    %672 = vmatpush1.bf16.xpose.msra.mxu0 0
    %673 = vmatprep.subr.bf16.mxu0 0
    %674 = vmatpush1.bf16.xpose.msra.mxu0 0
    %675 = vmatprep.subr.bf16.mxu0 0
    %676 = vmatpush1.bf16.xpose.msra.mxu0 0
    %677 = vmatprep.subr.bf16.mxu0 0
    %678 = vmatpush1.bf16.xpose.msra.mxu0 0
    %679 = vmatprep.subr.bf16.mxu0 0
    %680 = vmatpush1.bf16.xpose.msra.mxu0 0
    %681 = vmatprep.subr.bf16.mxu0 0
    %682 = vmatpush1.bf16.xpose.msra.mxu0 0
    %683 = vmatprep.subr.bf16.mxu0 0
    %684 = vmatpush1.bf16.xpose.msra.mxu0 0
    %685 = vmatprep.subr.bf16.mxu0 0
    %686 = vmatpush1.bf16.xpose.msra.mxu0 0
    %687 = vmatprep.subr.bf16.mxu0 0
    %688 = vmatpush1.bf16.xpose.msra.mxu0 0
    %689 = vmatprep.subr.bf16.mxu0 0
    %690 = vmatpush1.bf16.xpose.msra.mxu0 0
    %691 = vmatprep.subr.bf16.mxu0 0
    %692 = vmatpush1.bf16.xpose.msra.mxu0 0
    %693 = vmatprep.subr.bf16.mxu0 0
    %694 = vmatpush1.bf16.xpose.msra.mxu0 0
    %695 = vmatprep.mubr.bf16.mxu0 0
    %696 = vmatmul.mubr.bf16.gmra.mrb[0].mxu0 %v658
    %v697 = vpop.f32.mrb[0].mxu0
    %v698 = vadd.f32 0.0, %v697
    %v699 = vpop.f32.mrb[0].mxu0
    %v700 = vpop.f32.mrb[0].mxu0
    %v701 = vpop.f32.mrb[0].mxu0
    %702 = vdwg.mxu0
    %703 = vrot.lane.b32.xlu0 %v105, 112
    %v704 = vpop.permute.xlu0 %703
    %705 = vrot.lane.b32.xlu0 %v105, 80
    %v706 = vpop.permute.xlu0 %705
    %v708 = vsel %vm109, %v704, 0
    %v711 = vsel %vm109, %v706, 0
    %713 = vmatprep.subr.bf16.mxu0 0
    %714 = vmatpush1.bf16.xpose.msra.mxu0 %v711
    %715 = vmatprep.subr.bf16.mxu0 0
    %716 = vmatpush1.bf16.xpose.msra.mxu0 0
    %717 = vmatprep.subr.bf16.mxu0 0
    %718 = vmatpush1.bf16.xpose.msra.mxu0 0
    %719 = vmatprep.subr.bf16.mxu0 0
    %720 = vmatpush1.bf16.xpose.msra.mxu0 0
    %721 = vmatprep.subr.bf16.mxu0 0
    %722 = vmatpush1.bf16.xpose.msra.mxu0 0
    %723 = vmatprep.subr.bf16.mxu0 0
    %724 = vmatpush1.bf16.xpose.msra.mxu0 0
    %725 = vmatprep.subr.bf16.mxu0 0
    %726 = vmatpush1.bf16.xpose.msra.mxu0 0
    %727 = vmatprep.subr.bf16.mxu0 0
    %728 = vmatpush1.bf16.xpose.msra.mxu0 0
    %729 = vmatprep.subr.bf16.mxu0 0
    %730 = vmatpush1.bf16.xpose.msra.mxu0 0
    %731 = vmatprep.subr.bf16.mxu0 0
    %732 = vmatpush1.bf16.xpose.msra.mxu0 0
    %733 = vmatprep.subr.bf16.mxu0 0
    %734 = vmatpush1.bf16.xpose.msra.mxu0 0
    %735 = vmatprep.subr.bf16.mxu0 0
    %736 = vmatpush1.bf16.xpose.msra.mxu0 0
    %737 = vmatprep.subr.bf16.mxu0 0
    %738 = vmatpush1.bf16.xpose.msra.mxu0 0
    %739 = vmatprep.subr.bf16.mxu0 0
    %740 = vmatpush1.bf16.xpose.msra.mxu0 0
    %741 = vmatprep.subr.bf16.mxu0 0
    %742 = vmatpush1.bf16.xpose.msra.mxu0 0
    %743 = vmatprep.subr.bf16.mxu0 0
    %744 = vmatpush1.bf16.xpose.msra.mxu0 0
    %745 = vmatprep.mubr.bf16.mxu0 0
    %746 = vmatmul.mubr.bf16.gmra.mrb[0].mxu0 %v708
    %v747 = vpop.f32.mrb[0].mxu0
    %v748 = vadd.f32 0.0, %v747
    %v749 = vpop.f32.mrb[0].mxu0
    %v750 = vpop.f32.mrb[0].mxu0
    %v751 = vpop.f32.mrb[0].mxu0
    %752 = vdwg.mxu0
    %v753 = vmul.f32 %v698, 0.35355338
    %v754 = vmul.f32 %v748, 0.35355338
    %v755 = vsel %vm109, %v753, -inf
    %756 = vmax.xlane.f32.xlu0 %v755
    %v757 = vpop.xlane.xlu0 %756
    %v758 = vsel %vm109, %v754, -inf
    %759 = vmax.xlane.f32.xlu0 %v758
    %v760 = vpop.xlane.xlu0 %759
    %v761 = vsub.f32 %v753, %v757
    %v762 = vsub.f32 %v754, %v760
    %v763 = vmul.f32 %v761, 1.442695
    %v764 = vpow.pop %v763
    %v765 = vmul.f32 %v762, 1.442695
    %v766 = vpow.pop %v765
    %v767 = vsel %vm109, %v764, 0.0
    %768 = vadd.xlane.f32.xlu0 %v767
    %v769 = vpop.xlane.xlu0 %768
    %v770 = vsel %vm109, %v766, 0.0
    %771 = vadd.xlane.f32.xlu0 %v770
    %v772 = vpop.xlane.xlu0 %771
    %v773 = vrcp.pop %v769
    %v774 = vmul.f32 %v764, %v773
    %v775 = vrcp.pop %v772
    %v776 = vmul.f32 %v766, %v775
    %v777 = vpack.c.bf16 %v774, %v774
    %v778 = vpack.c.bf16 %v776, %v776
    %779 = vrot.lane.b32.xlu0 %v104, 48
    %v780 = vpop.permute.xlu0 %779
    %v782 = vsel %vm109, %v777, 0
    %v785 = vsel %vm236, %v780, 0
    %787 = vmatprep.subr.bf16.mxu0 0
    %788 = vmatpush1.bf16.msra.mxu0 %v785
    %789 = vmatprep.subr.bf16.mxu0 0
    %790 = vmatpush1.bf16.msra.mxu0 0
    %791 = vmatprep.subr.bf16.mxu0 0
    %792 = vmatpush1.bf16.msra.mxu0 0
    %793 = vmatprep.subr.bf16.mxu0 0
    %794 = vmatpush1.bf16.msra.mxu0 0
    %795 = vmatprep.subr.bf16.mxu0 0
    %796 = vmatpush1.bf16.msra.mxu0 0
    %797 = vmatprep.subr.bf16.mxu0 0
    %798 = vmatpush1.bf16.msra.mxu0 0
    %799 = vmatprep.subr.bf16.mxu0 0
    %800 = vmatpush1.bf16.msra.mxu0 0
    %801 = vmatprep.subr.bf16.mxu0 0
    %802 = vmatpush1.bf16.msra.mxu0 0
    %803 = vmatprep.subr.bf16.mxu0 0
    %804 = vmatpush1.bf16.msra.mxu0 0
    %805 = vmatprep.subr.bf16.mxu0 0
    %806 = vmatpush1.bf16.msra.mxu0 0
    %807 = vmatprep.subr.bf16.mxu0 0
    %808 = vmatpush1.bf16.msra.mxu0 0
    %809 = vmatprep.subr.bf16.mxu0 0
    %810 = vmatpush1.bf16.msra.mxu0 0
    %811 = vmatprep.subr.bf16.mxu0 0
    %812 = vmatpush1.bf16.msra.mxu0 0
    %813 = vmatprep.subr.bf16.mxu0 0
    %814 = vmatpush1.bf16.msra.mxu0 0
    %815 = vmatprep.subr.bf16.mxu0 0
    %816 = vmatpush1.bf16.msra.mxu0 0
    %817 = vmatprep.subr.bf16.mxu0 0
    %818 = vmatpush1.bf16.msra.mxu0 0
    %819 = vmatprep.mubr.bf16.mxu0 0
    %820 = vmatmul.mubr.bf16.gmra.mrb[0].mxu0 %v782
    %v821 = vpop.f32.mrb[0].mxu0
    %v822 = vadd.f32 0.0, %v821
    %v823 = vpop.f32.mrb[0].mxu0
    %v824 = vpop.f32.mrb[0].mxu0
    %v825 = vpop.f32.mrb[0].mxu0
    %826 = vdwg.mxu0
    %827 = vrot.lane.b32.xlu0 %v105, 48
    %v828 = vpop.permute.xlu0 %827
    %v830 = vsel %vm109, %v778, 0
    %v833 = vsel %vm236, %v828, 0
    %835 = vmatprep.subr.bf16.mxu0 0
    %836 = vmatpush1.bf16.msra.mxu0 %v833
    %837 = vmatprep.subr.bf16.mxu0 0
    %838 = vmatpush1.bf16.msra.mxu0 0
    %839 = vmatprep.subr.bf16.mxu0 0
    %840 = vmatpush1.bf16.msra.mxu0 0
    %841 = vmatprep.subr.bf16.mxu0 0
    %842 = vmatpush1.bf16.msra.mxu0 0
    %843 = vmatprep.subr.bf16.mxu0 0
    %844 = vmatpush1.bf16.msra.mxu0 0
    %845 = vmatprep.subr.bf16.mxu0 0
    %846 = vmatpush1.bf16.msra.mxu0 0
    %847 = vmatprep.subr.bf16.mxu0 0
    %848 = vmatpush1.bf16.msra.mxu0 0
    %849 = vmatprep.subr.bf16.mxu0 0
    %850 = vmatpush1.bf16.msra.mxu0 0
    %851 = vmatprep.subr.bf16.mxu0 0
    %852 = vmatpush1.bf16.msra.mxu0 0
    %853 = vmatprep.subr.bf16.mxu0 0
    %854 = vmatpush1.bf16.msra.mxu0 0
    %855 = vmatprep.subr.bf16.mxu0 0
    %856 = vmatpush1.bf16.msra.mxu0 0
    %857 = vmatprep.subr.bf16.mxu0 0
    %858 = vmatpush1.bf16.msra.mxu0 0
    %859 = vmatprep.subr.bf16.mxu0 0
    %860 = vmatpush1.bf16.msra.mxu0 0
    %861 = vmatprep.subr.bf16.mxu0 0
    %862 = vmatpush1.bf16.msra.mxu0 0
    %863 = vmatprep.subr.bf16.mxu0 0
    %864 = vmatpush1.bf16.msra.mxu0 0
    %865 = vmatprep.subr.bf16.mxu0 0
    %866 = vmatpush1.bf16.msra.mxu0 0
    %867 = vmatprep.mubr.bf16.mxu0 0
    %868 = vmatmul.mubr.bf16.gmra.mrb[0].mxu0 %v830
    %v869 = vpop.f32.mrb[0].mxu0
    %v870 = vadd.f32 0.0, %v869
    %v871 = vpop.f32.mrb[0].mxu0
    %v872 = vpop.f32.mrb[0].mxu0
    %v873 = vpop.f32.mrb[0].mxu0
    %874 = vdwg.mxu0
    %v875 = vld [vmem:[%s1 + $0x40] sm:$0xf]
    %v876 = vpack.c.bf16 %v870, %v822
    %v878 = vunpack.c.l.b16 %v875
    %v879 = vpack.c.b16 %v878, %v878
    %880 = vrot.lane.b32.xlu0 %v879, 64
    %v881 = vpop.permute.xlu0 %880
    %v883 = vsel %vm109, %v876, 0
    %v886 = vsel %vm236, %v881, 0
    %888 = vmatprep.subr.bf16.mxu0 0
    %889 = vmatpush1.bf16.msra.mxu0 %v886
    %890 = vmatprep.subr.bf16.mxu0 0
    %891 = vmatpush1.bf16.msra.mxu0 0
    %892 = vmatprep.subr.bf16.mxu0 0
    %893 = vmatpush1.bf16.msra.mxu0 0
    %894 = vmatprep.subr.bf16.mxu0 0
    %895 = vmatpush1.bf16.msra.mxu0 0
    %896 = vmatprep.subr.bf16.mxu0 0
    %897 = vmatpush1.bf16.msra.mxu0 0
    %898 = vmatprep.subr.bf16.mxu0 0
    %899 = vmatpush1.bf16.msra.mxu0 0
    %900 = vmatprep.subr.bf16.mxu0 0
    %901 = vmatpush1.bf16.msra.mxu0 0
    %902 = vmatprep.subr.bf16.mxu0 0
    %903 = vmatpush1.bf16.msra.mxu0 0
    %904 = vmatprep.subr.bf16.mxu0 0
    %905 = vmatpush1.bf16.msra.mxu0 0
    %906 = vmatprep.subr.bf16.mxu0 0
    %907 = vmatpush1.bf16.msra.mxu0 0
    %908 = vmatprep.subr.bf16.mxu0 0
    %909 = vmatpush1.bf16.msra.mxu0 0
    %910 = vmatprep.subr.bf16.mxu0 0
    %911 = vmatpush1.bf16.msra.mxu0 0
    %912 = vmatprep.subr.bf16.mxu0 0
    %913 = vmatpush1.bf16.msra.mxu0 0
    %914 = vmatprep.subr.bf16.mxu0 0
    %915 = vmatpush1.bf16.msra.mxu0 0
    %916 = vmatprep.subr.bf16.mxu0 0
    %917 = vmatpush1.bf16.msra.mxu0 0
    %918 = vmatprep.subr.bf16.mxu0 0
    %919 = vmatpush1.bf16.msra.mxu0 0
    %920 = vmatprep.mubr.bf16.mxu0 0
    %921 = vmatmul.mubr.bf16.gmra.mrb[0].mxu0 %v883
    %v922 = vpop.f32.mrb[0].mxu0
    %v923 = vadd.f32 0.0, %v922
    %v924 = vpop.f32.mrb[0].mxu0
    %v925 = vpop.f32.mrb[0].mxu0
    %v926 = vadd.f32 0.0, %v925
    %v927 = vpop.f32.mrb[0].mxu0
    %928 = vdwg.mxu0
    %v929 = vadd.f32 %v647, %v923
    %v930 = vadd.f32 %v650, %v926
    %931 = vrot.lane.b32.xlu0 %v104, 104
    %v932 = vpop.permute.xlu0 %931
    %933 = vrot.lane.b32.xlu0 %v104, 72
    %v934 = vpop.permute.xlu0 %933
    %v936 = vsel %vm109, %v932, 0
    %v939 = vsel %vm109, %v934, 0
    %941 = vmatprep.subr.bf16.mxu0 0
    %942 = vmatpush1.bf16.xpose.msra.mxu0 %v939
    %943 = vmatprep.subr.bf16.mxu0 0
    %944 = vmatpush1.bf16.xpose.msra.mxu0 0
    %945 = vmatprep.subr.bf16.mxu0 0
    %946 = vmatpush1.bf16.xpose.msra.mxu0 0
    %947 = vmatprep.subr.bf16.mxu0 0
    %948 = vmatpush1.bf16.xpose.msra.mxu0 0
    %949 = vmatprep.subr.bf16.mxu0 0
    %950 = vmatpush1.bf16.xpose.msra.mxu0 0
    %951 = vmatprep.subr.bf16.mxu0 0
    %952 = vmatpush1.bf16.xpose.msra.mxu0 0
    %953 = vmatprep.subr.bf16.mxu0 0
    %954 = vmatpush1.bf16.xpose.msra.mxu0 0
    %955 = vmatprep.subr.bf16.mxu0 0
    %956 = vmatpush1.bf16.xpose.msra.mxu0 0
    %957 = vmatprep.subr.bf16.mxu0 0
    %958 = vmatpush1.bf16.xpose.msra.mxu0 0
    %959 = vmatprep.subr.bf16.mxu0 0
    %960 = vmatpush1.bf16.xpose.msra.mxu0 0
    %961 = vmatprep.subr.bf16.mxu0 0
    %962 = vmatpush1.bf16.xpose.msra.mxu0 0
    %963 = vmatprep.subr.bf16.mxu0 0
    %964 = vmatpush1.bf16.xpose.msra.mxu0 0
    %965 = vmatprep.subr.bf16.mxu0 0
    %966 = vmatpush1.bf16.xpose.msra.mxu0 0
    %967 = vmatprep.subr.bf16.mxu0 0
    %968 = vmatpush1.bf16.xpose.msra.mxu0 0
    %969 = vmatprep.subr.bf16.mxu0 0
    %970 = vmatpush1.bf16.xpose.msra.mxu0 0
    %971 = vmatprep.subr.bf16.mxu0 0
    %972 = vmatpush1.bf16.xpose.msra.mxu0 0
    %973 = vmatprep.mubr.bf16.mxu0 0
    %974 = vmatmul.mubr.bf16.gmra.mrb[0].mxu0 %v936
    %v975 = vpop.f32.mrb[0].mxu0
    %v976 = vadd.f32 0.0, %v975
    %v977 = vpop.f32.mrb[0].mxu0
    %v978 = vpop.f32.mrb[0].mxu0
    %v979 = vpop.f32.mrb[0].mxu0
    %980 = vdwg.mxu0
    %981 = vrot.lane.b32.xlu0 %v105, 104
    %v982 = vpop.permute.xlu0 %981
    %983 = vrot.lane.b32.xlu0 %v105, 72
    %v984 = vpop.permute.xlu0 %983
    %v986 = vsel %vm109, %v982, 0
    %v989 = vsel %vm109, %v984, 0
    %991 = vmatprep.subr.bf16.mxu0 0
    %992 = vmatpush1.bf16.xpose.msra.mxu0 %v989
    %993 = vmatprep.subr.bf16.mxu0 0
    %994 = vmatpush1.bf16.xpose.msra.mxu0 0
    %995 = vmatprep.subr.bf16.mxu0 0
    %996 = vmatpush1.bf16.xpose.msra.mxu0 0
    %997 = vmatprep.subr.bf16.mxu0 0
    %998 = vmatpush1.bf16.xpose.msra.mxu0 0
    %999 = vmatprep.subr.bf16.mxu0 0
    %1000 = vmatpush1.bf16.xpose.msra.mxu0 0
    %1001 = vmatprep.subr.bf16.mxu0 0
    %1002 = vmatpush1.bf16.xpose.msra.mxu0 0
    %1003 = vmatprep.subr.bf16.mxu0 0
    %1004 = vmatpush1.bf16.xpose.msra.mxu0 0
    %1005 = vmatprep.subr.bf16.mxu0 0
    %1006 = vmatpush1.bf16.xpose.msra.mxu0 0
    %1007 = vmatprep.subr.bf16.mxu0 0
    %1008 = vmatpush1.bf16.xpose.msra.mxu0 0
    %1009 = vmatprep.subr.bf16.mxu0 0
    %1010 = vmatpush1.bf16.xpose.msra.mxu0 0
    %1011 = vmatprep.subr.bf16.mxu0 0
    %1012 = vmatpush1.bf16.xpose.msra.mxu0 0
    %1013 = vmatprep.subr.bf16.mxu0 0
    %1014 = vmatpush1.bf16.xpose.msra.mxu0 0
    %1015 = vmatprep.subr.bf16.mxu0 0
    %1016 = vmatpush1.bf16.xpose.msra.mxu0 0
    %1017 = vmatprep.subr.bf16.mxu0 0
    %1018 = vmatpush1.bf16.xpose.msra.mxu0 0
    %1019 = vmatprep.subr.bf16.mxu0 0
    %1020 = vmatpush1.bf16.xpose.msra.mxu0 0
    %1021 = vmatprep.subr.bf16.mxu0 0
    %1022 = vmatpush1.bf16.xpose.msra.mxu0 0
    %1023 = vmatprep.mubr.bf16.mxu0 0
    %1024 = vmatmul.mubr.bf16.gmra.mrb[0].mxu0 %v986
    %v1025 = vpop.f32.mrb[0].mxu0
    %v1026 = vadd.f32 0.0, %v1025
    %v1027 = vpop.f32.mrb[0].mxu0
    %v1028 = vpop.f32.mrb[0].mxu0
    %v1029 = vpop.f32.mrb[0].mxu0
    %1030 = vdwg.mxu0
    %v1031 = vmul.f32 %v976, 0.35355338
    %v1032 = vmul.f32 %v1026, 0.35355338
    %v1033 = vsel %vm109, %v1031, -inf
    %1034 = vmax.xlane.f32.xlu0 %v1033
    %v1035 = vpop.xlane.xlu0 %1034
    %v1036 = vsel %vm109, %v1032, -inf
    %1037 = vmax.xlane.f32.xlu0 %v1036
    %v1038 = vpop.xlane.xlu0 %1037
    %v1039 = vsub.f32 %v1031, %v1035
    %v1040 = vsub.f32 %v1032, %v1038
    %v1041 = vmul.f32 %v1039, 1.442695
    %v1042 = vpow.pop %v1041
    %v1043 = vmul.f32 %v1040, 1.442695
    %v1044 = vpow.pop %v1043
    %v1045 = vsel %vm109, %v1042, 0.0
    %1046 = vadd.xlane.f32.xlu0 %v1045
    %v1047 = vpop.xlane.xlu0 %1046
    %v1048 = vsel %vm109, %v1044, 0.0
    %1049 = vadd.xlane.f32.xlu0 %v1048
    %v1050 = vpop.xlane.xlu0 %1049
    %v1051 = vrcp.pop %v1047
    %v1052 = vmul.f32 %v1042, %v1051
    %v1053 = vrcp.pop %v1050
    %v1054 = vmul.f32 %v1044, %v1053
    %v1055 = vpack.c.bf16 %v1052, %v1052
    %v1056 = vpack.c.bf16 %v1054, %v1054
    %1057 = vrot.lane.b32.xlu0 %v104, 40
    %v1058 = vpop.permute.xlu0 %1057
    %v1060 = vsel %vm109, %v1055, 0
    %v1063 = vsel %vm236, %v1058, 0
    %1065 = vmatprep.subr.bf16.mxu0 0
    %1066 = vmatpush1.bf16.msra.mxu0 %v1063
    %1067 = vmatprep.subr.bf16.mxu0 0
    %1068 = vmatpush1.bf16.msra.mxu0 0
    %1069 = vmatprep.subr.bf16.mxu0 0
    %1070 = vmatpush1.bf16.msra.mxu0 0
    %1071 = vmatprep.subr.bf16.mxu0 0
    %1072 = vmatpush1.bf16.msra.mxu0 0
    %1073 = vmatprep.subr.bf16.mxu0 0
    %1074 = vmatpush1.bf16.msra.mxu0 0
    %1075 = vmatprep.subr.bf16.mxu0 0
    %1076 = vmatpush1.bf16.msra.mxu0 0
    %1077 = vmatprep.subr.bf16.mxu0 0
    %1078 = vmatpush1.bf16.msra.mxu0 0
    %1079 = vmatprep.subr.bf16.mxu0 0
    %1080 = vmatpush1.bf16.msra.mxu0 0
    %1081 = vmatprep.subr.bf16.mxu0 0
    %1082 = vmatpush1.bf16.msra.mxu0 0
    %1083 = vmatprep.subr.bf16.mxu0 0
    %1084 = vmatpush1.bf16.msra.mxu0 0
    %1085 = vmatprep.subr.bf16.mxu0 0
    %1086 = vmatpush1.bf16.msra.mxu0 0
    %1087 = vmatprep.subr.bf16.mxu0 0
    %1088 = vmatpush1.bf16.msra.mxu0 0
    %1089 = vmatprep.subr.bf16.mxu0 0
    %1090 = vmatpush1.bf16.msra.mxu0 0
    %1091 = vmatprep.subr.bf16.mxu0 0
    %1092 = vmatpush1.bf16.msra.mxu0 0
    %1093 = vmatprep.subr.bf16.mxu0 0
    %1094 = vmatpush1.bf16.msra.mxu0 0
    %1095 = vmatprep.subr.bf16.mxu0 0
    %1096 = vmatpush1.bf16.msra.mxu0 0
    %1097 = vmatprep.mubr.bf16.mxu0 0
    %1098 = vmatmul.mubr.bf16.gmra.mrb[0].mxu0 %v1060
    %v1099 = vpop.f32.mrb[0].mxu0
    %v1100 = vadd.f32 0.0, %v1099
    %v1101 = vpop.f32.mrb[0].mxu0
    %v1102 = vpop.f32.mrb[0].mxu0
    %v1103 = vpop.f32.mrb[0].mxu0
    %1104 = vdwg.mxu0
    %1105 = vrot.lane.b32.xlu0 %v105, 40
    %v1106 = vpop.permute.xlu0 %1105
    %v1108 = vsel %vm109, %v1056, 0
    %v1111 = vsel %vm236, %v1106, 0
    %1113 = vmatprep.subr.bf16.mxu0 0
    %1114 = vmatpush1.bf16.msra.mxu0 %v1111
    %1115 = vmatprep.subr.bf16.mxu0 0
    %1116 = vmatpush1.bf16.msra.mxu0 0
    %1117 = vmatprep.subr.bf16.mxu0 0
    %1118 = vmatpush1.bf16.msra.mxu0 0
    %1119 = vmatprep.subr.bf16.mxu0 0
    %1120 = vmatpush1.bf16.msra.mxu0 0
    %1121 = vmatprep.subr.bf16.mxu0 0
    %1122 = vmatpush1.bf16.msra.mxu0 0
    %1123 = vmatprep.subr.bf16.mxu0 0
    %1124 = vmatpush1.bf16.msra.mxu0 0
    %1125 = vmatprep.subr.bf16.mxu0 0
    %1126 = vmatpush1.bf16.msra.mxu0 0
    %1127 = vmatprep.subr.bf16.mxu0 0
    %1128 = vmatpush1.bf16.msra.mxu0 0
    %1129 = vmatprep.subr.bf16.mxu0 0
    %1130 = vmatpush1.bf16.msra.mxu0 0
    %1131 = vmatprep.subr.bf16.mxu0 0
    %1132 = vmatpush1.bf16.msra.mxu0 0
    %1133 = vmatprep.subr.bf16.mxu0 0
    %1134 = vmatpush1.bf16.msra.mxu0 0
    %1135 = vmatprep.subr.bf16.mxu0 0
    %1136 = vmatpush1.bf16.msra.mxu0 0
    %1137 = vmatprep.subr.bf16.mxu0 0
    %1138 = vmatpush1.bf16.msra.mxu0 0
    %1139 = vmatprep.subr.bf16.mxu0 0
    %1140 = vmatpush1.bf16.msra.mxu0 0
    %1141 = vmatprep.subr.bf16.mxu0 0
    %1142 = vmatpush1.bf16.msra.mxu0 0
    %1143 = vmatprep.subr.bf16.mxu0 0
    %1144 = vmatpush1.bf16.msra.mxu0 0
    %1145 = vmatprep.mubr.bf16.mxu0 0
    %1146 = vmatmul.mubr.bf16.gmra.mrb[0].mxu0 %v1108
    %v1147 = vpop.f32.mrb[0].mxu0
    %v1148 = vadd.f32 0.0, %v1147
    %v1149 = vpop.f32.mrb[0].mxu0
    %v1150 = vpop.f32.mrb[0].mxu0
    %v1151 = vpop.f32.mrb[0].mxu0
    %1152 = vdwg.mxu0
    %v1153 = vld [vmem:[%s1 + $0x40] sm:$0xf]
    %v1154 = vpack.c.bf16 %v1148, %v1100
    %v1156 = vunpack.c.l.b16 %v1153
    %v1157 = vpack.c.b16 %v1156, %v1156
    %1158 = vrot.lane.b32.xlu0 %v1157, 32
    %v1159 = vpop.permute.xlu0 %1158
    %v1161 = vsel %vm109, %v1154, 0
    %v1164 = vsel %vm236, %v1159, 0
    %1166 = vmatprep.subr.bf16.mxu0 0
    %1167 = vmatpush1.bf16.msra.mxu0 %v1164
    %1168 = vmatprep.subr.bf16.mxu0 0
    %1169 = vmatpush1.bf16.msra.mxu0 0
    %1170 = vmatprep.subr.bf16.mxu0 0
    %1171 = vmatpush1.bf16.msra.mxu0 0
    %1172 = vmatprep.subr.bf16.mxu0 0
    %1173 = vmatpush1.bf16.msra.mxu0 0
    %1174 = vmatprep.subr.bf16.mxu0 0
    %1175 = vmatpush1.bf16.msra.mxu0 0
    %1176 = vmatprep.subr.bf16.mxu0 0
    %1177 = vmatpush1.bf16.msra.mxu0 0
    %1178 = vmatprep.subr.bf16.mxu0 0
    %1179 = vmatpush1.bf16.msra.mxu0 0
    %1180 = vmatprep.subr.bf16.mxu0 0
    %1181 = vmatpush1.bf16.msra.mxu0 0
    %1182 = vmatprep.subr.bf16.mxu0 0
    %1183 = vmatpush1.bf16.msra.mxu0 0
    %1184 = vmatprep.subr.bf16.mxu0 0
    %1185 = vmatpush1.bf16.msra.mxu0 0
    %1186 = vmatprep.subr.bf16.mxu0 0
    %1187 = vmatpush1.bf16.msra.mxu0 0
    %1188 = vmatprep.subr.bf16.mxu0 0
    %1189 = vmatpush1.bf16.msra.mxu0 0
    %1190 = vmatprep.subr.bf16.mxu0 0
    %1191 = vmatpush1.bf16.msra.mxu0 0
    %1192 = vmatprep.subr.bf16.mxu0 0
    %1193 = vmatpush1.bf16.msra.mxu0 0
    %1194 = vmatprep.subr.bf16.mxu0 0
    %1195 = vmatpush1.bf16.msra.mxu0 0
    %1196 = vmatprep.subr.bf16.mxu0 0
    %1197 = vmatpush1.bf16.msra.mxu0 0
    %1198 = vmatprep.mubr.bf16.mxu0 0
    %1199 = vmatmul.mubr.bf16.gmra.mrb[0].mxu0 %v1161
    %v1200 = vpop.f32.mrb[0].mxu0
    %v1201 = vadd.f32 0.0, %v1200
    %v1202 = vpop.f32.mrb[0].mxu0
    %v1203 = vpop.f32.mrb[0].mxu0
    %v1204 = vadd.f32 0.0, %v1203
    %v1205 = vpop.f32.mrb[0].mxu0
    %1206 = vdwg.mxu0
    %v1207 = vadd.f32 %v929, %v1201
    %v1208 = vadd.f32 %v930, %v1204
    %v1209 = vlaneseq
    %v1210 = vshrl.u32 %v1209, 7
    %v1211 = vsub.s32 0, %v1210
    %v1212 = vrot.slane %v35, %v1211
    %v1213 = vadd.f32 %v1207, %v1212
    %v1214 = vadd.f32 %v1208, %v1212
    %v1215 = vadd.f32 %v16, %v1213
    %v1216 = vadd.f32 %v17, %v1214
    %v1217 = vsel %vm59, %v1215, 0.0
    %1218 = vadd.xlane.f32.xlu0 %v1217
    %v1219 = vpop.xlane.xlu0 %1218
    %v1220 = vsel %vm59, %v1216, 0.0
    %1221 = vadd.xlane.f32.xlu0 %v1220
    %v1222 = vpop.xlane.xlu0 %1221
    %v1223 = vrcp.pop 32.0
    %v1224 = vmul.f32 %v1219, %v1223
    %v1225 = vmul.f32 %v1222, %v1223
    %v1226 = vsub.f32 %v1215, %v1224
    %v1227 = vsub.f32 %v1216, %v1225
    %v1228 = vmul.f32 %v1226, %v1226
    %v1229 = vmul.f32 %v1227, %v1227
    %v1230 = vsel %vm59, %v1228, 0.0
    %1231 = vadd.xlane.f32.xlu0 %v1230
    %v1232 = vpop.xlane.xlu0 %1231
    %v1233 = vsel %vm59, %v1229, 0.0
    %1234 = vadd.xlane.f32.xlu0 %v1233
    %v1235 = vpop.xlane.xlu0 %1234
    %v1236 = vmul.f32 %v1232, %v1223
    %v1237 = vmul.f32 %v1235, %v1223
    %v1238 = vadd.f32 %v1236, 1e-05
    %v1239 = vadd.f32 %v1237, 1e-05
    %v1240 = vrsqrt.pop %v1238
    %v1241 = vrsqrt.pop %v1239
    %v1242 = vmul.f32 %v1226, %v1240
    %v1243 = vmul.f32 %v1227, %v1241
    %v1244 = vlaneseq
    %v1245 = vshrl.u32 %v1244, 7
    %v1246 = vsub.s32 0, %v1245
    %v1247 = vrot.slane %v36, %v1246
    %v1248 = vmul.f32 %v1242, %v1247
    %v1249 = vmul.f32 %v1243, %v1247
    %v1250 = vlaneseq
    %v1251 = vshrl.u32 %v1250, 7
    %v1252 = vsub.s32 0, %v1251
    %v1253 = vrot.slane %v37, %v1252
    %v1254 = vadd.f32 %v1248, %v1253
    %v1255 = vadd.f32 %v1249, %v1253
    %v1256 = vpack.c.bf16 %v1255, %v1254
    %v1257 = vlaneseq
    %v1258 = vshrl.u32 %v1257, 7
    %v1259 = vsub.s32 0, %v1258
    %v1260 = vrot.slane %v38, %v1259
    %v1265 = vunpack.c.l.b16 %v22
    %v1266 = vunpack.c.l.b16 %v23
    %v1267 = vunpack.c.l.b16 %v24
    %v1268 = vunpack.c.l.b16 %v25
    %v1269 = vpack.c.b16 %v1266, %v1265
    %v1270 = vpack.c.b16 %v1268, %v1267
    %v1274 = vsel %vm59, %v1256, 0
    %1276 = vmatprep.subr.bf16.mxu0 0
    %1277 = vmatpush1.bf16.msra.mxu0 %v1269
    %1278 = vmatprep.subr.bf16.mxu0 0
    %1279 = vmatpush1.bf16.msra.mxu0 %v1270
    %1280 = vmatprep.subr.bf16.mxu0 0
    %1281 = vmatpush1.bf16.msra.mxu0 0
    %1282 = vmatprep.subr.bf16.mxu0 0
    %1283 = vmatpush1.bf16.msra.mxu0 0
    %1284 = vmatprep.subr.bf16.mxu0 0
    %1285 = vmatpush1.bf16.msra.mxu0 0
    %1286 = vmatprep.subr.bf16.mxu0 0
    %1287 = vmatpush1.bf16.msra.mxu0 0
    %1288 = vmatprep.subr.bf16.mxu0 0
    %1289 = vmatpush1.bf16.msra.mxu0 0
    %1290 = vmatprep.subr.bf16.mxu0 0
    %1291 = vmatpush1.bf16.msra.mxu0 0
    %1292 = vmatprep.subr.bf16.mxu0 0
    %1293 = vmatpush1.bf16.msra.mxu0 0
    %1294 = vmatprep.subr.bf16.mxu0 0
    %1295 = vmatpush1.bf16.msra.mxu0 0
    %1296 = vmatprep.subr.bf16.mxu0 0
    %1297 = vmatpush1.bf16.msra.mxu0 0
    %1298 = vmatprep.subr.bf16.mxu0 0
    %1299 = vmatpush1.bf16.msra.mxu0 0
    %1300 = vmatprep.subr.bf16.mxu0 0
    %1301 = vmatpush1.bf16.msra.mxu0 0
    %1302 = vmatprep.subr.bf16.mxu0 0
    %1303 = vmatpush1.bf16.msra.mxu0 0
    %1304 = vmatprep.subr.bf16.mxu0 0
    %1305 = vmatpush1.bf16.msra.mxu0 0
    %1306 = vmatprep.subr.bf16.mxu0 0
    %1307 = vmatpush1.bf16.msra.mxu0 0
    %1308 = vmatprep.mubr.bf16.mxu0 0
    %1309 = vmatmul.mubr.bf16.gmra.mrb[0].mxu0 %v1274
    %v1310 = vpop.f32.mrb[0].mxu0
    %v1311 = vadd.f32 %v1260, %v1310
    %v1312 = vpop.f32.mrb[0].mxu0
    %v1313 = vpop.f32.mrb[0].mxu0
    %v1314 = vadd.f32 %v1260, %v1313
    %v1315 = vpop.f32.mrb[0].mxu0
    %1316 = vdwg.mxu0
    %v1317 = vmax.f32 %v1311, 0.0
    %v1318 = vmax.f32 %v1314, 0.0
    %v1319 = vpack.c.bf16 %v1318, %v1317
    %v1320 = vlaneseq
    %v1321 = vshrl.u32 %v1320, 7
    %v1322 = vsub.s32 0, %v1321
    %v1323 = vrot.slane %v39, %v1322
    %v1332 = vunpack.c.l.b16 %v26
    %v1333 = vunpack.c.l.b16 %v27
    %v1334 = vunpack.c.l.b16 %v28
    %v1335 = vunpack.c.l.b16 %v29
    %v1336 = vunpack.c.l.b16 %v30
    %v1337 = vunpack.c.l.b16 %v31
    %v1338 = vunpack.c.l.b16 %v32
    %v1339 = vunpack.c.l.b16 %v33
    %v1340 = vpack.c.b16 %v1333, %v1332
    %v1341 = vpack.c.b16 %v1335, %v1334
    %v1342 = vpack.c.b16 %v1337, %v1336
    %v1343 = vpack.c.b16 %v1339, %v1338
    %vm1348 = vcmask 523264
    %v1350 = vsel %vm1348, %v1319, 0
    %1352 = vmatprep.subr.bf16.mxu0 0
    %1353 = vmatpush1.bf16.msra.mxu0 %v1340
    %1354 = vmatprep.subr.bf16.mxu0 0
    %1355 = vmatpush1.bf16.msra.mxu0 %v1341
    %1356 = vmatprep.subr.bf16.mxu0 0
    %1357 = vmatpush1.bf16.msra.mxu0 %v1342
    %1358 = vmatprep.subr.bf16.mxu0 0
    %1359 = vmatpush1.bf16.msra.mxu0 %v1343
    %1360 = vmatprep.subr.bf16.mxu0 0
    %1361 = vmatpush1.bf16.msra.mxu0 0
    %1362 = vmatprep.subr.bf16.mxu0 0
    %1363 = vmatpush1.bf16.msra.mxu0 0
    %1364 = vmatprep.subr.bf16.mxu0 0
    %1365 = vmatpush1.bf16.msra.mxu0 0
    %1366 = vmatprep.subr.bf16.mxu0 0
    %1367 = vmatpush1.bf16.msra.mxu0 0
    %1368 = vmatprep.subr.bf16.mxu0 0
    %1369 = vmatpush1.bf16.msra.mxu0 0
    %1370 = vmatprep.subr.bf16.mxu0 0
    %1371 = vmatpush1.bf16.msra.mxu0 0
    %1372 = vmatprep.subr.bf16.mxu0 0
    %1373 = vmatpush1.bf16.msra.mxu0 0
    %1374 = vmatprep.subr.bf16.mxu0 0
    %1375 = vmatpush1.bf16.msra.mxu0 0
    %1376 = vmatprep.subr.bf16.mxu0 0
    %1377 = vmatpush1.bf16.msra.mxu0 0
    %1378 = vmatprep.subr.bf16.mxu0 0
    %1379 = vmatpush1.bf16.msra.mxu0 0
    %1380 = vmatprep.subr.bf16.mxu0 0
    %1381 = vmatpush1.bf16.msra.mxu0 0
    %1382 = vmatprep.subr.bf16.mxu0 0
    %1383 = vmatpush1.bf16.msra.mxu0 0
    %1384 = vmatprep.mubr.bf16.mxu0 0
    %1385 = vmatmul.mubr.bf16.gmra.mrb[0].mxu0 %v1350
    %v1386 = vpop.f32.mrb[0].mxu0
    %v1387 = vadd.f32 %v1323, %v1386
    %v1388 = vpop.f32.mrb[0].mxu0
    %v1389 = vpop.f32.mrb[0].mxu0
    %v1390 = vadd.f32 %v1323, %v1389
    %v1391 = vpop.f32.mrb[0].mxu0
    %1392 = vdwg.mxu0
    %v1393 = vadd.f32 %v1254, %v1387
    %v1394 = vadd.f32 %v1255, %v1390
    %v1395 = vsel %vm59, %v1393, 0.0
    %1396 = vadd.xlane.f32.xlu0 %v1395
    %v1397 = vpop.xlane.xlu0 %1396
    %v1398 = vsel %vm59, %v1394, 0.0
    %1399 = vadd.xlane.f32.xlu0 %v1398
    %v1400 = vpop.xlane.xlu0 %1399
    %v1401 = vmul.f32 %v1397, %v1223
    %v1402 = vmul.f32 %v1400, %v1223
    %v1403 = vsub.f32 %v1393, %v1401
    %v1404 = vsub.f32 %v1394, %v1402
    %v1405 = vmul.f32 %v1403, %v1403
    %v1406 = vmul.f32 %v1404, %v1404
    %v1407 = vsel %vm59, %v1405, 0.0
    %1408 = vadd.xlane.f32.xlu0 %v1407
    %v1409 = vpop.xlane.xlu0 %1408
    %v1410 = vsel %vm59, %v1406, 0.0
    %1411 = vadd.xlane.f32.xlu0 %v1410
    %v1412 = vpop.xlane.xlu0 %1411
    %v1413 = vmul.f32 %v1409, %v1223
    %v1414 = vmul.f32 %v1412, %v1223
    %v1415 = vadd.f32 %v1413, 1e-05
    %v1416 = vadd.f32 %v1414, 1e-05
    %v1417 = vrsqrt.pop %v1415
    %v1418 = vrsqrt.pop %v1416
    %v1419 = vmul.f32 %v1403, %v1417
    %v1420 = vmul.f32 %v1404, %v1418
    %v1421 = vlaneseq
    %v1422 = vshrl.u32 %v1421, 7
    %v1423 = vsub.s32 0, %v1422
    %v1424 = vrot.slane %v40, %v1423
    %v1425 = vmul.f32 %v1419, %v1424
    %v1426 = vmul.f32 %v1420, %v1424
    %v1427 = vlaneseq
    %v1428 = vshrl.u32 %v1427, 7
    %v1429 = vsub.s32 0, %v1428
    %v1430 = vrot.slane %v41, %v1429
    %v1431 = vadd.f32 %v1425, %v1430
    %v1432 = vadd.f32 %v1426, %v1430
    %v1433 = vld [vmem:[%s1 + $0x48] sm:$0xf]
    %v1434 = vld [vmem:[%s1 + $0x4c] sm:$0xf]
    %v1435 = vld [vmem:[%s1 + $0x50] sm:$0xf]
    %v1436 = vld [vmem:[%s1 + $0x54] sm:$0xf]
    %v1437 = vld [vmem:[%s1 + $0x58] sm:$0xf]
    %v1438 = vld [vmem:[%s1 + $0x5c] sm:$0xf]
    %v1439 = vld [vmem:[%s1 + $0x60] sm:$0xf]
    %v1440 = vld [vmem:[%s1 + $0x64] sm:$0xf]
    %v1441 = vld [vmem:[%s1 + $0x68] sm:$0xf]
    %v1442 = vld [vmem:[%s1 + $0x6c] sm:$0xf]
    %v1443 = vld [vmem:[%s1 + $0x70] sm:$0xf]
    %v1444 = vld [vmem:[%s1 + $0x74] sm:$0xf]
    %v1445 = vld [vmem:[%s1 + $0x78] sm:$0xf]
    %v1446 = vld [vmem:[%s1 + $0x7c] sm:$0xf]
    %v1447 = vld [vmem:[%s1 + $0x80] sm:$0xf]
    %v1448 = vld [vmem:[%s1 + $0x84] sm:$0xf]
    %v1449 = vld [vmem:[%s2 + $0x8] sm:$0x1]
    %v1450 = vld [vmem:[%s2 + $0x9] sm:$0x1]
    %v1451 = vld [vmem:[%s2 + $0xa] sm:$0x1]
    %v1452 = vld [vmem:[%s2 + $0xb] sm:$0x1]
    %v1453 = vld [vmem:[%s2 + $0xc] sm:$0x1]
    %v1454 = vld [vmem:[%s2 + $0xd] sm:$0x1]
    %v1455 = vld [vmem:[%s2 + $0xe] sm:$0x1]
    %v1456 = vld [vmem:[%s2 + $0xf] sm:$0x1]
    %v1457 = vpack.c.bf16 %v1432, %v1431
    %v1458 = vlaneseq
    %v1459 = vshrl.u32 %v1458, 7
    %v1460 = vsub.s32 0, %v1459
    %v1461 = vrot.slane %v1449, %v1460
    %v1466 = vunpack.c.l.b16 %v1433
    %v1467 = vunpack.c.l.b16 %v1434
    %v1468 = vunpack.c.l.b16 %v1435
    %v1469 = vunpack.c.l.b16 %v1436
    %v1470 = vpack.c.b16 %v1467, %v1466
    %v1471 = vpack.c.b16 %v1469, %v1468
    %v1475 = vsel %vm59, %v1457, 0
    %1477 = vmatprep.subr.bf16.mxu0 0
    %1478 = vmatpush1.bf16.msra.mxu0 %v1470
    %1479 = vmatprep.subr.bf16.mxu0 0
    %1480 = vmatpush1.bf16.msra.mxu0 %v1471
    %1481 = vmatprep.subr.bf16.mxu0 0
    %1482 = vmatpush1.bf16.msra.mxu0 0
    %1483 = vmatprep.subr.bf16.mxu0 0
    %1484 = vmatpush1.bf16.msra.mxu0 0
    %1485 = vmatprep.subr.bf16.mxu0 0
    %1486 = vmatpush1.bf16.msra.mxu0 0
    %1487 = vmatprep.subr.bf16.mxu0 0
    %1488 = vmatpush1.bf16.msra.mxu0 0
    %1489 = vmatprep.subr.bf16.mxu0 0
    %1490 = vmatpush1.bf16.msra.mxu0 0
    %1491 = vmatprep.subr.bf16.mxu0 0
    %1492 = vmatpush1.bf16.msra.mxu0 0
    %1493 = vmatprep.subr.bf16.mxu0 0
    %1494 = vmatpush1.bf16.msra.mxu0 0
    %1495 = vmatprep.subr.bf16.mxu0 0
    %1496 = vmatpush1.bf16.msra.mxu0 0
    %1497 = vmatprep.subr.bf16.mxu0 0
    %1498 = vmatpush1.bf16.msra.mxu0 0
    %1499 = vmatprep.subr.bf16.mxu0 0
    %1500 = vmatpush1.bf16.msra.mxu0 0
    %1501 = vmatprep.subr.bf16.mxu0 0
    %1502 = vmatpush1.bf16.msra.mxu0 0
    %1503 = vmatprep.subr.bf16.mxu0 0
    %1504 = vmatpush1.bf16.msra.mxu0 0
    %1505 = vmatprep.subr.bf16.mxu0 0
    %1506 = vmatpush1.bf16.msra.mxu0 0
    %1507 = vmatprep.subr.bf16.mxu0 0
    %1508 = vmatpush1.bf16.msra.mxu0 0
    %1509 = vmatprep.mubr.bf16.mxu0 0
    %1510 = vmatmul.mubr.bf16.gmra.mrb[0].mxu0 %v1475
    %v1511 = vpop.f32.mrb[0].mxu0
    %v1512 = vadd.f32 %v1461, %v1511
    %v1513 = vpop.f32.mrb[0].mxu0
    %v1514 = vpop.f32.mrb[0].mxu0
    %v1515 = vadd.f32 %v1461, %v1514
    %v1516 = vpop.f32.mrb[0].mxu0
    %1517 = vdwg.mxu0
    %v1518 = vpack.c.bf16 %v1512, %v1512
    %v1519 = vpack.c.bf16 %v1515, %v1515
    %1521 = vrot.lane.b32.xlu0 %v1518, 96
    %v1522 = vpop.permute.xlu0 %1521
    %v1524 = vsel %vm109, %v1518, 0
    %v1527 = vsel %vm109, %v1522, 0
    %1529 = vmatprep.subr.bf16.mxu0 0
    %1530 = vmatpush1.bf16.xpose.msra.mxu0 %v1527
    %1531 = vmatprep.subr.bf16.mxu0 0
    %1532 = vmatpush1.bf16.xpose.msra.mxu0 0
    %1533 = vmatprep.subr.bf16.mxu0 0
    %1534 = vmatpush1.bf16.xpose.msra.mxu0 0
    %1535 = vmatprep.subr.bf16.mxu0 0
    %1536 = vmatpush1.bf16.xpose.msra.mxu0 0
    %1537 = vmatprep.subr.bf16.mxu0 0
    %1538 = vmatpush1.bf16.xpose.msra.mxu0 0
    %1539 = vmatprep.subr.bf16.mxu0 0
    %1540 = vmatpush1.bf16.xpose.msra.mxu0 0
    %1541 = vmatprep.subr.bf16.mxu0 0
    %1542 = vmatpush1.bf16.xpose.msra.mxu0 0
    %1543 = vmatprep.subr.bf16.mxu0 0
    %1544 = vmatpush1.bf16.xpose.msra.mxu0 0
    %1545 = vmatprep.subr.bf16.mxu0 0
    %1546 = vmatpush1.bf16.xpose.msra.mxu0 0
    %1547 = vmatprep.subr.bf16.mxu0 0
    %1548 = vmatpush1.bf16.xpose.msra.mxu0 0
    %1549 = vmatprep.subr.bf16.mxu0 0
    %1550 = vmatpush1.bf16.xpose.msra.mxu0 0
    %1551 = vmatprep.subr.bf16.mxu0 0
    %1552 = vmatpush1.bf16.xpose.msra.mxu0 0
    %1553 = vmatprep.subr.bf16.mxu0 0
    %1554 = vmatpush1.bf16.xpose.msra.mxu0 0
    %1555 = vmatprep.subr.bf16.mxu0 0
    %1556 = vmatpush1.bf16.xpose.msra.mxu0 0
    %1557 = vmatprep.subr.bf16.mxu0 0
    %1558 = vmatpush1.bf16.xpose.msra.mxu0 0
    %1559 = vmatprep.subr.bf16.mxu0 0
    %1560 = vmatpush1.bf16.xpose.msra.mxu0 0
    %1561 = vmatprep.mubr.bf16.mxu0 0
    %1562 = vmatmul.mubr.bf16.gmra.mrb[0].mxu0 %v1524
    %v1563 = vpop.f32.mrb[0].mxu0
    %v1564 = vadd.f32 0.0, %v1563
    %v1565 = vpop.f32.mrb[0].mxu0
    %v1566 = vpop.f32.mrb[0].mxu0
    %v1567 = vpop.f32.mrb[0].mxu0
    %1568 = vdwg.mxu0
    %1570 = vrot.lane.b32.xlu0 %v1519, 96
    %v1571 = vpop.permute.xlu0 %1570
    %v1573 = vsel %vm109, %v1519, 0
    %v1576 = vsel %vm109, %v1571, 0
    %1578 = vmatprep.subr.bf16.mxu0 0
    %1579 = vmatpush1.bf16.xpose.msra.mxu0 %v1576
    %1580 = vmatprep.subr.bf16.mxu0 0
    %1581 = vmatpush1.bf16.xpose.msra.mxu0 0
    %1582 = vmatprep.subr.bf16.mxu0 0
    %1583 = vmatpush1.bf16.xpose.msra.mxu0 0
    %1584 = vmatprep.subr.bf16.mxu0 0
    %1585 = vmatpush1.bf16.xpose.msra.mxu0 0
    %1586 = vmatprep.subr.bf16.mxu0 0
    %1587 = vmatpush1.bf16.xpose.msra.mxu0 0
    %1588 = vmatprep.subr.bf16.mxu0 0
    %1589 = vmatpush1.bf16.xpose.msra.mxu0 0
    %1590 = vmatprep.subr.bf16.mxu0 0
    %1591 = vmatpush1.bf16.xpose.msra.mxu0 0
    %1592 = vmatprep.subr.bf16.mxu0 0
    %1593 = vmatpush1.bf16.xpose.msra.mxu0 0
    %1594 = vmatprep.subr.bf16.mxu0 0
    %1595 = vmatpush1.bf16.xpose.msra.mxu0 0
    %1596 = vmatprep.subr.bf16.mxu0 0
    %1597 = vmatpush1.bf16.xpose.msra.mxu0 0
    %1598 = vmatprep.subr.bf16.mxu0 0
    %1599 = vmatpush1.bf16.xpose.msra.mxu0 0
    %1600 = vmatprep.subr.bf16.mxu0 0
    %1601 = vmatpush1.bf16.xpose.msra.mxu0 0
    %1602 = vmatprep.subr.bf16.mxu0 0
    %1603 = vmatpush1.bf16.xpose.msra.mxu0 0
    %1604 = vmatprep.subr.bf16.mxu0 0
    %1605 = vmatpush1.bf16.xpose.msra.mxu0 0
    %1606 = vmatprep.subr.bf16.mxu0 0
    %1607 = vmatpush1.bf16.xpose.msra.mxu0 0
    %1608 = vmatprep.subr.bf16.mxu0 0
    %1609 = vmatpush1.bf16.xpose.msra.mxu0 0
    %1610 = vmatprep.mubr.bf16.mxu0 0
    %1611 = vmatmul.mubr.bf16.gmra.mrb[0].mxu0 %v1573
    %v1612 = vpop.f32.mrb[0].mxu0
    %v1613 = vadd.f32 0.0, %v1612
    %v1614 = vpop.f32.mrb[0].mxu0
    %v1615 = vpop.f32.mrb[0].mxu0
    %v1616 = vpop.f32.mrb[0].mxu0
    %1617 = vdwg.mxu0
    %v1618 = vmul.f32 %v1564, 0.35355338
    %v1619 = vmul.f32 %v1613, 0.35355338
    %v1620 = vsel %vm109, %v1618, -inf
    %1621 = vmax.xlane.f32.xlu0 %v1620
    %v1622 = vpop.xlane.xlu0 %1621
    %v1623 = vsel %vm109, %v1619, -inf
    %1624 = vmax.xlane.f32.xlu0 %v1623
    %v1625 = vpop.xlane.xlu0 %1624
    %v1626 = vsub.f32 %v1618, %v1622
    %v1627 = vsub.f32 %v1619, %v1625
    %v1628 = vmul.f32 %v1626, 1.442695
    %v1629 = vpow.pop %v1628
    %v1630 = vmul.f32 %v1627, 1.442695
    %v1631 = vpow.pop %v1630
    %v1632 = vsel %vm109, %v1629, 0.0
    %1633 = vadd.xlane.f32.xlu0 %v1632
    %v1634 = vpop.xlane.xlu0 %1633
    %v1635 = vsel %vm109, %v1631, 0.0
    %1636 = vadd.xlane.f32.xlu0 %v1635
    %v1637 = vpop.xlane.xlu0 %1636
    %v1638 = vrcp.pop %v1634
    %v1639 = vmul.f32 %v1629, %v1638
    %v1640 = vrcp.pop %v1637
    %v1641 = vmul.f32 %v1631, %v1640
    %v1642 = vpack.c.bf16 %v1639, %v1639
    %v1643 = vpack.c.bf16 %v1641, %v1641
    %1644 = vrot.lane.b32.xlu0 %v1518, 64
    %v1645 = vpop.permute.xlu0 %1644
    %v1647 = vsel %vm109, %v1642, 0
    %v1650 = vsel %vm236, %v1645, 0
    %1652 = vmatprep.subr.bf16.mxu0 0
    %1653 = vmatpush1.bf16.msra.mxu0 %v1650
    %1654 = vmatprep.subr.bf16.mxu0 0
    %1655 = vmatpush1.bf16.msra.mxu0 0
    %1656 = vmatprep.subr.bf16.mxu0 0
    %1657 = vmatpush1.bf16.msra.mxu0 0
    %1658 = vmatprep.subr.bf16.mxu0 0
    %1659 = vmatpush1.bf16.msra.mxu0 0
    %1660 = vmatprep.subr.bf16.mxu0 0
    %1661 = vmatpush1.bf16.msra.mxu0 0
    %1662 = vmatprep.subr.bf16.mxu0 0
    %1663 = vmatpush1.bf16.msra.mxu0 0
    %1664 = vmatprep.subr.bf16.mxu0 0
    %1665 = vmatpush1.bf16.msra.mxu0 0
    %1666 = vmatprep.subr.bf16.mxu0 0
    %1667 = vmatpush1.bf16.msra.mxu0 0
    %1668 = vmatprep.subr.bf16.mxu0 0
    %1669 = vmatpush1.bf16.msra.mxu0 0
    %1670 = vmatprep.subr.bf16.mxu0 0
    %1671 = vmatpush1.bf16.msra.mxu0 0
    %1672 = vmatprep.subr.bf16.mxu0 0
    %1673 = vmatpush1.bf16.msra.mxu0 0
    %1674 = vmatprep.subr.bf16.mxu0 0
    %1675 = vmatpush1.bf16.msra.mxu0 0
    %1676 = vmatprep.subr.bf16.mxu0 0
    %1677 = vmatpush1.bf16.msra.mxu0 0
    %1678 = vmatprep.subr.bf16.mxu0 0
    %1679 = vmatpush1.bf16.msra.mxu0 0
    %1680 = vmatprep.subr.bf16.mxu0 0
    %1681 = vmatpush1.bf16.msra.mxu0 0
    %1682 = vmatprep.subr.bf16.mxu0 0
    %1683 = vmatpush1.bf16.msra.mxu0 0
    %1684 = vmatprep.mubr.bf16.mxu0 0
    %1685 = vmatmul.mubr.bf16.gmra.mrb[0].mxu0 %v1647
    %v1686 = vpop.f32.mrb[0].mxu0
    %v1687 = vadd.f32 0.0, %v1686
    %v1688 = vpop.f32.mrb[0].mxu0
    %v1689 = vpop.f32.mrb[0].mxu0
    %v1690 = vpop.f32.mrb[0].mxu0
    %1691 = vdwg.mxu0
    %1692 = vrot.lane.b32.xlu0 %v1519, 64
    %v1693 = vpop.permute.xlu0 %1692
    %v1695 = vsel %vm109, %v1643, 0
    %v1698 = vsel %vm236, %v1693, 0
    %1700 = vmatprep.subr.bf16.mxu0 0
    %1701 = vmatpush1.bf16.msra.mxu0 %v1698
    %1702 = vmatprep.subr.bf16.mxu0 0
    %1703 = vmatpush1.bf16.msra.mxu0 0
    %1704 = vmatprep.subr.bf16.mxu0 0
    %1705 = vmatpush1.bf16.msra.mxu0 0
    %1706 = vmatprep.subr.bf16.mxu0 0
    %1707 = vmatpush1.bf16.msra.mxu0 0
    %1708 = vmatprep.subr.bf16.mxu0 0
    %1709 = vmatpush1.bf16.msra.mxu0 0
    %1710 = vmatprep.subr.bf16.mxu0 0
    %1711 = vmatpush1.bf16.msra.mxu0 0
    %1712 = vmatprep.subr.bf16.mxu0 0
    %1713 = vmatpush1.bf16.msra.mxu0 0
    %1714 = vmatprep.subr.bf16.mxu0 0
    %1715 = vmatpush1.bf16.msra.mxu0 0
    %1716 = vmatprep.subr.bf16.mxu0 0
    %1717 = vmatpush1.bf16.msra.mxu0 0
    %1718 = vmatprep.subr.bf16.mxu0 0
    %1719 = vmatpush1.bf16.msra.mxu0 0
    %1720 = vmatprep.subr.bf16.mxu0 0
    %1721 = vmatpush1.bf16.msra.mxu0 0
    %1722 = vmatprep.subr.bf16.mxu0 0
    %1723 = vmatpush1.bf16.msra.mxu0 0
    %1724 = vmatprep.subr.bf16.mxu0 0
    %1725 = vmatpush1.bf16.msra.mxu0 0
    %1726 = vmatprep.subr.bf16.mxu0 0
    %1727 = vmatpush1.bf16.msra.mxu0 0
    %1728 = vmatprep.subr.bf16.mxu0 0
    %1729 = vmatpush1.bf16.msra.mxu0 0
    %1730 = vmatprep.subr.bf16.mxu0 0
    %1731 = vmatpush1.bf16.msra.mxu0 0
    %1732 = vmatprep.mubr.bf16.mxu0 0
    %1733 = vmatmul.mubr.bf16.gmra.mrb[0].mxu0 %v1695
    %v1734 = vpop.f32.mrb[0].mxu0
    %v1735 = vadd.f32 0.0, %v1734
    %v1736 = vpop.f32.mrb[0].mxu0
    %v1737 = vpop.f32.mrb[0].mxu0
    %v1738 = vpop.f32.mrb[0].mxu0
    %1739 = vdwg.mxu0
    %v1740 = vld [vmem:[%s1 + $0x88] sm:$0xf]
    %v1741 = vpack.c.bf16 %v1735, %v1687
    %1742 = vrot.lane.b32.xlu0 %v1518, 120
    %v1743 = vpop.permute.xlu0 %1742
    %1744 = vrot.lane.b32.xlu0 %v1518, 88
    %v1745 = vpop.permute.xlu0 %1744
    %v1747 = vsel %vm109, %v1743, 0
    %v1750 = vsel %vm109, %v1745, 0
    %1752 = vmatprep.subr.bf16.mxu0 0
    %1753 = vmatpush1.bf16.xpose.msra.mxu0 %v1750
    %1754 = vmatprep.subr.bf16.mxu0 0
    %1755 = vmatpush1.bf16.xpose.msra.mxu0 0
    %1756 = vmatprep.subr.bf16.mxu0 0
    %1757 = vmatpush1.bf16.xpose.msra.mxu0 0
    %1758 = vmatprep.subr.bf16.mxu0 0
    %1759 = vmatpush1.bf16.xpose.msra.mxu0 0
    %1760 = vmatprep.subr.bf16.mxu0 0
    %1761 = vmatpush1.bf16.xpose.msra.mxu0 0
    %1762 = vmatprep.subr.bf16.mxu0 0
    %1763 = vmatpush1.bf16.xpose.msra.mxu0 0
    %1764 = vmatprep.subr.bf16.mxu0 0
    %1765 = vmatpush1.bf16.xpose.msra.mxu0 0
    %1766 = vmatprep.subr.bf16.mxu0 0
    %1767 = vmatpush1.bf16.xpose.msra.mxu0 0
    %1768 = vmatprep.subr.bf16.mxu0 0
    %1769 = vmatpush1.bf16.xpose.msra.mxu0 0
    %1770 = vmatprep.subr.bf16.mxu0 0
    %1771 = vmatpush1.bf16.xpose.msra.mxu0 0
    %1772 = vmatprep.subr.bf16.mxu0 0
    %1773 = vmatpush1.bf16.xpose.msra.mxu0 0
    %1774 = vmatprep.subr.bf16.mxu0 0
    %1775 = vmatpush1.bf16.xpose.msra.mxu0 0
    %1776 = vmatprep.subr.bf16.mxu0 0
    %1777 = vmatpush1.bf16.xpose.msra.mxu0 0
    %1778 = vmatprep.subr.bf16.mxu0 0
    %1779 = vmatpush1.bf16.xpose.msra.mxu0 0
    %1780 = vmatprep.subr.bf16.mxu0 0
    %1781 = vmatpush1.bf16.xpose.msra.mxu0 0
    %1782 = vmatprep.subr.bf16.mxu0 0
    %1783 = vmatpush1.bf16.xpose.msra.mxu0 0
    %1784 = vmatprep.mubr.bf16.mxu0 0
    %1785 = vmatmul.mubr.bf16.gmra.mrb[0].mxu0 %v1747
    %v1786 = vpop.f32.mrb[0].mxu0
    %v1787 = vadd.f32 0.0, %v1786
    %v1788 = vpop.f32.mrb[0].mxu0
    %v1789 = vpop.f32.mrb[0].mxu0
    %v1790 = vpop.f32.mrb[0].mxu0
    %1791 = vdwg.mxu0
    %1792 = vrot.lane.b32.xlu0 %v1519, 120
    %v1793 = vpop.permute.xlu0 %1792
    %1794 = vrot.lane.b32.xlu0 %v1519, 88
    %v1795 = vpop.permute.xlu0 %1794
    %v1797 = vsel %vm109, %v1793, 0
    %v1800 = vsel %vm109, %v1795, 0
    %1802 = vmatprep.subr.bf16.mxu0 0
    %1803 = vmatpush1.bf16.xpose.msra.mxu0 %v1800
    %1804 = vmatprep.subr.bf16.mxu0 0
    %1805 = vmatpush1.bf16.xpose.msra.mxu0 0
    %1806 = vmatprep.subr.bf16.mxu0 0
    %1807 = vmatpush1.bf16.xpose.msra.mxu0 0
    %1808 = vmatprep.subr.bf16.mxu0 0
    %1809 = vmatpush1.bf16.xpose.msra.mxu0 0
    %1810 = vmatprep.subr.bf16.mxu0 0
    %1811 = vmatpush1.bf16.xpose.msra.mxu0 0
    %1812 = vmatprep.subr.bf16.mxu0 0
    %1813 = vmatpush1.bf16.xpose.msra.mxu0 0
    %1814 = vmatprep.subr.bf16.mxu0 0
    %1815 = vmatpush1.bf16.xpose.msra.mxu0 0
    %1816 = vmatprep.subr.bf16.mxu0 0
    %1817 = vmatpush1.bf16.xpose.msra.mxu0 0
    %1818 = vmatprep.subr.bf16.mxu0 0
    %1819 = vmatpush1.bf16.xpose.msra.mxu0 0
    %1820 = vmatprep.subr.bf16.mxu0 0
    %1821 = vmatpush1.bf16.xpose.msra.mxu0 0
    %1822 = vmatprep.subr.bf16.mxu0 0
    %1823 = vmatpush1.bf16.xpose.msra.mxu0 0
    %1824 = vmatprep.subr.bf16.mxu0 0
    %1825 = vmatpush1.bf16.xpose.msra.mxu0 0
    %1826 = vmatprep.subr.bf16.mxu0 0
    %1827 = vmatpush1.bf16.xpose.msra.mxu0 0
    %1828 = vmatprep.subr.bf16.mxu0 0
    %1829 = vmatpush1.bf16.xpose.msra.mxu0 0
    %1830 = vmatprep.subr.bf16.mxu0 0
    %1831 = vmatpush1.bf16.xpose.msra.mxu0 0
    %1832 = vmatprep.subr.bf16.mxu0 0
    %1833 = vmatpush1.bf16.xpose.msra.mxu0 0
    %1834 = vmatprep.mubr.bf16.mxu0 0
    %1835 = vmatmul.mubr.bf16.gmra.mrb[0].mxu0 %v1797
    %v1836 = vpop.f32.mrb[0].mxu0
    %v1837 = vadd.f32 0.0, %v1836
    %v1838 = vpop.f32.mrb[0].mxu0
    %v1839 = vpop.f32.mrb[0].mxu0
    %v1840 = vpop.f32.mrb[0].mxu0
    %1841 = vdwg.mxu0
    %v1842 = vmul.f32 %v1787, 0.35355338
    %v1843 = vmul.f32 %v1837, 0.35355338
    %v1844 = vsel %vm109, %v1842, -inf
    %1845 = vmax.xlane.f32.xlu0 %v1844
    %v1846 = vpop.xlane.xlu0 %1845
    %v1847 = vsel %vm109, %v1843, -inf
    %1848 = vmax.xlane.f32.xlu0 %v1847
    %v1849 = vpop.xlane.xlu0 %1848
    %v1850 = vsub.f32 %v1842, %v1846
    %v1851 = vsub.f32 %v1843, %v1849
    %v1852 = vmul.f32 %v1850, 1.442695
    %v1853 = vpow.pop %v1852
    %v1854 = vmul.f32 %v1851, 1.442695
    %v1855 = vpow.pop %v1854
    %v1856 = vsel %vm109, %v1853, 0.0
    %1857 = vadd.xlane.f32.xlu0 %v1856
    %v1858 = vpop.xlane.xlu0 %1857
    %v1859 = vsel %vm109, %v1855, 0.0
    %1860 = vadd.xlane.f32.xlu0 %v1859
    %v1861 = vpop.xlane.xlu0 %1860
    %v1862 = vrcp.pop %v1858
    %v1863 = vmul.f32 %v1853, %v1862
    %v1864 = vrcp.pop %v1861
    %v1865 = vmul.f32 %v1855, %v1864
    %v1866 = vpack.c.bf16 %v1863, %v1863
    %v1867 = vpack.c.bf16 %v1865, %v1865
    %1868 = vrot.lane.b32.xlu0 %v1518, 56
    %v1869 = vpop.permute.xlu0 %1868
    %v1871 = vsel %vm109, %v1866, 0
    %v1874 = vsel %vm236, %v1869, 0
    %1876 = vmatprep.subr.bf16.mxu0 0
    %1877 = vmatpush1.bf16.msra.mxu0 %v1874
    %1878 = vmatprep.subr.bf16.mxu0 0
    %1879 = vmatpush1.bf16.msra.mxu0 0
    %1880 = vmatprep.subr.bf16.mxu0 0
    %1881 = vmatpush1.bf16.msra.mxu0 0
    %1882 = vmatprep.subr.bf16.mxu0 0
    %1883 = vmatpush1.bf16.msra.mxu0 0
    %1884 = vmatprep.subr.bf16.mxu0 0
    %1885 = vmatpush1.bf16.msra.mxu0 0
    %1886 = vmatprep.subr.bf16.mxu0 0
    %1887 = vmatpush1.bf16.msra.mxu0 0
    %1888 = vmatprep.subr.bf16.mxu0 0
    %1889 = vmatpush1.bf16.msra.mxu0 0
    %1890 = vmatprep.subr.bf16.mxu0 0
    %1891 = vmatpush1.bf16.msra.mxu0 0
    %1892 = vmatprep.subr.bf16.mxu0 0
    %1893 = vmatpush1.bf16.msra.mxu0 0
    %1894 = vmatprep.subr.bf16.mxu0 0
    %1895 = vmatpush1.bf16.msra.mxu0 0
    %1896 = vmatprep.subr.bf16.mxu0 0
    %1897 = vmatpush1.bf16.msra.mxu0 0
    %1898 = vmatprep.subr.bf16.mxu0 0
    %1899 = vmatpush1.bf16.msra.mxu0 0
    %1900 = vmatprep.subr.bf16.mxu0 0
    %1901 = vmatpush1.bf16.msra.mxu0 0
    %1902 = vmatprep.subr.bf16.mxu0 0
    %1903 = vmatpush1.bf16.msra.mxu0 0
    %1904 = vmatprep.subr.bf16.mxu0 0
    %1905 = vmatpush1.bf16.msra.mxu0 0
    %1906 = vmatprep.subr.bf16.mxu0 0
    %1907 = vmatpush1.bf16.msra.mxu0 0
    %1908 = vmatprep.mubr.bf16.mxu0 0
    %1909 = vmatmul.mubr.bf16.gmra.mrb[0].mxu0 %v1871
    %v1910 = vpop.f32.mrb[0].mxu0
    %v1911 = vadd.f32 0.0, %v1910
    %v1912 = vpop.f32.mrb[0].mxu0
    %v1913 = vpop.f32.mrb[0].mxu0
    %v1914 = vpop.f32.mrb[0].mxu0
    %1915 = vdwg.mxu0
    %1916 = vrot.lane.b32.xlu0 %v1519, 56
    %v1917 = vpop.permute.xlu0 %1916
    %v1919 = vsel %vm109, %v1867, 0
    %v1922 = vsel %vm236, %v1917, 0
    %1924 = vmatprep.subr.bf16.mxu0 0
    %1925 = vmatpush1.bf16.msra.mxu0 %v1922
    %1926 = vmatprep.subr.bf16.mxu0 0
    %1927 = vmatpush1.bf16.msra.mxu0 0
    %1928 = vmatprep.subr.bf16.mxu0 0
    %1929 = vmatpush1.bf16.msra.mxu0 0
    %1930 = vmatprep.subr.bf16.mxu0 0
    %1931 = vmatpush1.bf16.msra.mxu0 0
    %1932 = vmatprep.subr.bf16.mxu0 0
    %1933 = vmatpush1.bf16.msra.mxu0 0
    %1934 = vmatprep.subr.bf16.mxu0 0
    %1935 = vmatpush1.bf16.msra.mxu0 0
    %1936 = vmatprep.subr.bf16.mxu0 0
    %1937 = vmatpush1.bf16.msra.mxu0 0
    %1938 = vmatprep.subr.bf16.mxu0 0
    %1939 = vmatpush1.bf16.msra.mxu0 0
    %1940 = vmatprep.subr.bf16.mxu0 0
    %1941 = vmatpush1.bf16.msra.mxu0 0
    %1942 = vmatprep.subr.bf16.mxu0 0
    %1943 = vmatpush1.bf16.msra.mxu0 0
    %1944 = vmatprep.subr.bf16.mxu0 0
    %1945 = vmatpush1.bf16.msra.mxu0 0
    %1946 = vmatprep.subr.bf16.mxu0 0
    %1947 = vmatpush1.bf16.msra.mxu0 0
    %1948 = vmatprep.subr.bf16.mxu0 0
    %1949 = vmatpush1.bf16.msra.mxu0 0
    %1950 = vmatprep.subr.bf16.mxu0 0
    %1951 = vmatpush1.bf16.msra.mxu0 0
    %1952 = vmatprep.subr.bf16.mxu0 0
    %1953 = vmatpush1.bf16.msra.mxu0 0
    %1954 = vmatprep.subr.bf16.mxu0 0
    %1955 = vmatpush1.bf16.msra.mxu0 0
    %1956 = vmatprep.mubr.bf16.mxu0 0
    %1957 = vmatmul.mubr.bf16.gmra.mrb[0].mxu0 %v1919
    %v1958 = vpop.f32.mrb[0].mxu0
    %v1959 = vadd.f32 0.0, %v1958
    %v1960 = vpop.f32.mrb[0].mxu0
    %v1961 = vpop.f32.mrb[0].mxu0
    %v1962 = vpop.f32.mrb[0].mxu0
    %1963 = vdwg.mxu0
    %v1964 = vld [vmem:[%s1 + $0x88] sm:$0xf]
    %v1965 = vpack.c.bf16 %v1959, %v1911
    %v1967 = vunpack.c.l.b16 %v1964
    %v1968 = vpack.c.b16 %v1967, %v1967
    %1969 = vrot.lane.b32.xlu0 %v1968, 96
    %v1970 = vpop.permute.xlu0 %1969
    %v1972 = vsel %vm109, %v1965, 0
    %v1975 = vsel %vm236, %v1970, 0
    %1977 = vmatprep.subr.bf16.mxu0 0
    %1978 = vmatpush1.bf16.msra.mxu0 %v1975
    %1979 = vmatprep.subr.bf16.mxu0 0
    %1980 = vmatpush1.bf16.msra.mxu0 0
    %1981 = vmatprep.subr.bf16.mxu0 0
    %1982 = vmatpush1.bf16.msra.mxu0 0
    %1983 = vmatprep.subr.bf16.mxu0 0
    %1984 = vmatpush1.bf16.msra.mxu0 0
    %1985 = vmatprep.subr.bf16.mxu0 0
    %1986 = vmatpush1.bf16.msra.mxu0 0
    %1987 = vmatprep.subr.bf16.mxu0 0
    %1988 = vmatpush1.bf16.msra.mxu0 0
    %1989 = vmatprep.subr.bf16.mxu0 0
    %1990 = vmatpush1.bf16.msra.mxu0 0
    %1991 = vmatprep.subr.bf16.mxu0 0
    %1992 = vmatpush1.bf16.msra.mxu0 0
    %1993 = vmatprep.subr.bf16.mxu0 0
    %1994 = vmatpush1.bf16.msra.mxu0 0
    %1995 = vmatprep.subr.bf16.mxu0 0
    %1996 = vmatpush1.bf16.msra.mxu0 0
    %1997 = vmatprep.subr.bf16.mxu0 0
    %1998 = vmatpush1.bf16.msra.mxu0 0
    %1999 = vmatprep.subr.bf16.mxu0 0
    %2000 = vmatpush1.bf16.msra.mxu0 0
    %2001 = vmatprep.subr.bf16.mxu0 0
    %2002 = vmatpush1.bf16.msra.mxu0 0
    %2003 = vmatprep.subr.bf16.mxu0 0
    %2004 = vmatpush1.bf16.msra.mxu0 0
    %2005 = vmatprep.subr.bf16.mxu0 0
    %2006 = vmatpush1.bf16.msra.mxu0 0
    %2007 = vmatprep.subr.bf16.mxu0 0
    %2008 = vmatpush1.bf16.msra.mxu0 0
    %2009 = vmatprep.mubr.bf16.mxu0 0
    %2010 = vmatmul.mubr.bf16.gmra.mrb[0].mxu0 %v1972
    %v2011 = vpop.f32.mrb[0].mxu0
    %v2012 = vadd.f32 0.0, %v2011
    %v2013 = vpop.f32.mrb[0].mxu0
    %v2014 = vpop.f32.mrb[0].mxu0
    %v2015 = vadd.f32 0.0, %v2014
    %v2016 = vpop.f32.mrb[0].mxu0
    %2017 = vdwg.mxu0
    %v2019 = vsel %vm109, %v1741, 0
    %v2022 = vsel %vm236, %v1740, 0
    %2024 = vmatprep.subr.bf16.mxu0 0
    %2025 = vmatpush1.bf16.msra.mxu0 %v2022
    %2026 = vmatprep.subr.bf16.mxu0 0
    %2027 = vmatpush1.bf16.msra.mxu0 0
    %2028 = vmatprep.subr.bf16.mxu0 0
    %2029 = vmatpush1.bf16.msra.mxu0 0
    %2030 = vmatprep.subr.bf16.mxu0 0
    %2031 = vmatpush1.bf16.msra.mxu0 0
    %2032 = vmatprep.subr.bf16.mxu0 0
    %2033 = vmatpush1.bf16.msra.mxu0 0
    %2034 = vmatprep.subr.bf16.mxu0 0
    %2035 = vmatpush1.bf16.msra.mxu0 0
    %2036 = vmatprep.subr.bf16.mxu0 0
    %2037 = vmatpush1.bf16.msra.mxu0 0
    %2038 = vmatprep.subr.bf16.mxu0 0
    %2039 = vmatpush1.bf16.msra.mxu0 0
    %2040 = vmatprep.subr.bf16.mxu0 0
    %2041 = vmatpush1.bf16.msra.mxu0 0
    %2042 = vmatprep.subr.bf16.mxu0 0
    %2043 = vmatpush1.bf16.msra.mxu0 0
    %2044 = vmatprep.subr.bf16.mxu0 0
    %2045 = vmatpush1.bf16.msra.mxu0 0
    %2046 = vmatprep.subr.bf16.mxu0 0
    %2047 = vmatpush1.bf16.msra.mxu0 0
    %2048 = vmatprep.subr.bf16.mxu0 0
    %2049 = vmatpush1.bf16.msra.mxu0 0
    %2050 = vmatprep.subr.bf16.mxu0 0
    %2051 = vmatpush1.bf16.msra.mxu0 0
    %2052 = vmatprep.subr.bf16.mxu0 0
    %2053 = vmatpush1.bf16.msra.mxu0 0
    %2054 = vmatprep.subr.bf16.mxu0 0
    %2055 = vmatpush1.bf16.msra.mxu0 0
    %2056 = vmatprep.mubr.bf16.mxu0 0
    %2057 = vmatmul.mubr.bf16.gmra.mrb[0].mxu0 %v2019
    %v2058 = vpop.f32.mrb[0].mxu0
    %v2059 = vadd.f32 %v2012, %v2058
    %v2060 = vpop.f32.mrb[0].mxu0
    %v2061 = vpop.f32.mrb[0].mxu0
    %v2062 = vadd.f32 %v2015, %v2061
    %v2063 = vpop.f32.mrb[0].mxu0
    %2064 = vdwg.mxu0
    %2065 = vrot.lane.b32.xlu0 %v1518, 112
    %v2066 = vpop.permute.xlu0 %2065
    %2067 = vrot.lane.b32.xlu0 %v1518, 80
    %v2068 = vpop.permute.xlu0 %2067
    %v2070 = vsel %vm109, %v2066, 0
    %v2073 = vsel %vm109, %v2068, 0
    %2075 = vmatprep.subr.bf16.mxu0 0
    %2076 = vmatpush1.bf16.xpose.msra.mxu0 %v2073
    %2077 = vmatprep.subr.bf16.mxu0 0
    %2078 = vmatpush1.bf16.xpose.msra.mxu0 0
    %2079 = vmatprep.subr.bf16.mxu0 0
    %2080 = vmatpush1.bf16.xpose.msra.mxu0 0
    %2081 = vmatprep.subr.bf16.mxu0 0
    %2082 = vmatpush1.bf16.xpose.msra.mxu0 0
    %2083 = vmatprep.subr.bf16.mxu0 0
    %2084 = vmatpush1.bf16.xpose.msra.mxu0 0
    %2085 = vmatprep.subr.bf16.mxu0 0
    %2086 = vmatpush1.bf16.xpose.msra.mxu0 0
    %2087 = vmatprep.subr.bf16.mxu0 0
    %2088 = vmatpush1.bf16.xpose.msra.mxu0 0
    %2089 = vmatprep.subr.bf16.mxu0 0
    %2090 = vmatpush1.bf16.xpose.msra.mxu0 0
    %2091 = vmatprep.subr.bf16.mxu0 0
    %2092 = vmatpush1.bf16.xpose.msra.mxu0 0
    %2093 = vmatprep.subr.bf16.mxu0 0
    %2094 = vmatpush1.bf16.xpose.msra.mxu0 0
    %2095 = vmatprep.subr.bf16.mxu0 0
    %2096 = vmatpush1.bf16.xpose.msra.mxu0 0
    %2097 = vmatprep.subr.bf16.mxu0 0
    %2098 = vmatpush1.bf16.xpose.msra.mxu0 0
    %2099 = vmatprep.subr.bf16.mxu0 0
    %2100 = vmatpush1.bf16.xpose.msra.mxu0 0
    %2101 = vmatprep.subr.bf16.mxu0 0
    %2102 = vmatpush1.bf16.xpose.msra.mxu0 0
    %2103 = vmatprep.subr.bf16.mxu0 0
    %2104 = vmatpush1.bf16.xpose.msra.mxu0 0
    %2105 = vmatprep.subr.bf16.mxu0 0
    %2106 = vmatpush1.bf16.xpose.msra.mxu0 0
    %2107 = vmatprep.mubr.bf16.mxu0 0
    %2108 = vmatmul.mubr.bf16.gmra.mrb[0].mxu0 %v2070
    %v2109 = vpop.f32.mrb[0].mxu0
    %v2110 = vadd.f32 0.0, %v2109
    %v2111 = vpop.f32.mrb[0].mxu0
    %v2112 = vpop.f32.mrb[0].mxu0
    %v2113 = vpop.f32.mrb[0].mxu0
    %2114 = vdwg.mxu0
    %2115 = vrot.lane.b32.xlu0 %v1519, 112
    %v2116 = vpop.permute.xlu0 %2115
    %2117 = vrot.lane.b32.xlu0 %v1519, 80
    %v2118 = vpop.permute.xlu0 %2117
    %v2120 = vsel %vm109, %v2116, 0
    %v2123 = vsel %vm109, %v2118, 0
    %2125 = vmatprep.subr.bf16.mxu0 0
    %2126 = vmatpush1.bf16.xpose.msra.mxu0 %v2123
    %2127 = vmatprep.subr.bf16.mxu0 0
    %2128 = vmatpush1.bf16.xpose.msra.mxu0 0
    %2129 = vmatprep.subr.bf16.mxu0 0
    %2130 = vmatpush1.bf16.xpose.msra.mxu0 0
    %2131 = vmatprep.subr.bf16.mxu0 0
    %2132 = vmatpush1.bf16.xpose.msra.mxu0 0
    %2133 = vmatprep.subr.bf16.mxu0 0
    %2134 = vmatpush1.bf16.xpose.msra.mxu0 0
    %2135 = vmatprep.subr.bf16.mxu0 0
    %2136 = vmatpush1.bf16.xpose.msra.mxu0 0
    %2137 = vmatprep.subr.bf16.mxu0 0
    %2138 = vmatpush1.bf16.xpose.msra.mxu0 0
    %2139 = vmatprep.subr.bf16.mxu0 0
    %2140 = vmatpush1.bf16.xpose.msra.mxu0 0
    %2141 = vmatprep.subr.bf16.mxu0 0
    %2142 = vmatpush1.bf16.xpose.msra.mxu0 0
    %2143 = vmatprep.subr.bf16.mxu0 0
    %2144 = vmatpush1.bf16.xpose.msra.mxu0 0
    %2145 = vmatprep.subr.bf16.mxu0 0
    %2146 = vmatpush1.bf16.xpose.msra.mxu0 0
    %2147 = vmatprep.subr.bf16.mxu0 0
    %2148 = vmatpush1.bf16.xpose.msra.mxu0 0
    %2149 = vmatprep.subr.bf16.mxu0 0
    %2150 = vmatpush1.bf16.xpose.msra.mxu0 0
    %2151 = vmatprep.subr.bf16.mxu0 0
    %2152 = vmatpush1.bf16.xpose.msra.mxu0 0
    %2153 = vmatprep.subr.bf16.mxu0 0
    %2154 = vmatpush1.bf16.xpose.msra.mxu0 0
    %2155 = vmatprep.subr.bf16.mxu0 0
    %2156 = vmatpush1.bf16.xpose.msra.mxu0 0
    %2157 = vmatprep.mubr.bf16.mxu0 0
    %2158 = vmatmul.mubr.bf16.gmra.mrb[0].mxu0 %v2120
    %v2159 = vpop.f32.mrb[0].mxu0
    %v2160 = vadd.f32 0.0, %v2159
    %v2161 = vpop.f32.mrb[0].mxu0
    %v2162 = vpop.f32.mrb[0].mxu0
    %v2163 = vpop.f32.mrb[0].mxu0
    %2164 = vdwg.mxu0
    %v2165 = vmul.f32 %v2110, 0.35355338
    %v2166 = vmul.f32 %v2160, 0.35355338
    %v2167 = vsel %vm109, %v2165, -inf
    %2168 = vmax.xlane.f32.xlu0 %v2167
    %v2169 = vpop.xlane.xlu0 %2168
    %v2170 = vsel %vm109, %v2166, -inf
    %2171 = vmax.xlane.f32.xlu0 %v2170
    %v2172 = vpop.xlane.xlu0 %2171
    %v2173 = vsub.f32 %v2165, %v2169
    %v2174 = vsub.f32 %v2166, %v2172
    %v2175 = vmul.f32 %v2173, 1.442695
    %v2176 = vpow.pop %v2175
    %v2177 = vmul.f32 %v2174, 1.442695
    %v2178 = vpow.pop %v2177
    %v2179 = vsel %vm109, %v2176, 0.0
    %2180 = vadd.xlane.f32.xlu0 %v2179
    %v2181 = vpop.xlane.xlu0 %2180
    %v2182 = vsel %vm109, %v2178, 0.0
    %2183 = vadd.xlane.f32.xlu0 %v2182
    %v2184 = vpop.xlane.xlu0 %2183
    %v2185 = vrcp.pop %v2181
    %v2186 = vmul.f32 %v2176, %v2185
    %v2187 = vrcp.pop %v2184
    %v2188 = vmul.f32 %v2178, %v2187
    %v2189 = vpack.c.bf16 %v2186, %v2186
    %v2190 = vpack.c.bf16 %v2188, %v2188
    %2191 = vrot.lane.b32.xlu0 %v1518, 48
    %v2192 = vpop.permute.xlu0 %2191
    %v2194 = vsel %vm109, %v2189, 0
    %v2197 = vsel %vm236, %v2192, 0
    %2199 = vmatprep.subr.bf16.mxu0 0
    %2200 = vmatpush1.bf16.msra.mxu0 %v2197
    %2201 = vmatprep.subr.bf16.mxu0 0
    %2202 = vmatpush1.bf16.msra.mxu0 0
    %2203 = vmatprep.subr.bf16.mxu0 0
    %2204 = vmatpush1.bf16.msra.mxu0 0
    %2205 = vmatprep.subr.bf16.mxu0 0
    %2206 = vmatpush1.bf16.msra.mxu0 0
    %2207 = vmatprep.subr.bf16.mxu0 0
    %2208 = vmatpush1.bf16.msra.mxu0 0
    %2209 = vmatprep.subr.bf16.mxu0 0
    %2210 = vmatpush1.bf16.msra.mxu0 0
    %2211 = vmatprep.subr.bf16.mxu0 0
    %2212 = vmatpush1.bf16.msra.mxu0 0
    %2213 = vmatprep.subr.bf16.mxu0 0
    %2214 = vmatpush1.bf16.msra.mxu0 0
    %2215 = vmatprep.subr.bf16.mxu0 0
    %2216 = vmatpush1.bf16.msra.mxu0 0
    %2217 = vmatprep.subr.bf16.mxu0 0
    %2218 = vmatpush1.bf16.msra.mxu0 0
    %2219 = vmatprep.subr.bf16.mxu0 0
    %2220 = vmatpush1.bf16.msra.mxu0 0
    %2221 = vmatprep.subr.bf16.mxu0 0
    %2222 = vmatpush1.bf16.msra.mxu0 0
    %2223 = vmatprep.subr.bf16.mxu0 0
    %2224 = vmatpush1.bf16.msra.mxu0 0
    %2225 = vmatprep.subr.bf16.mxu0 0
    %2226 = vmatpush1.bf16.msra.mxu0 0
    %2227 = vmatprep.subr.bf16.mxu0 0
    %2228 = vmatpush1.bf16.msra.mxu0 0
    %2229 = vmatprep.subr.bf16.mxu0 0
    %2230 = vmatpush1.bf16.msra.mxu0 0
    %2231 = vmatprep.mubr.bf16.mxu0 0
    %2232 = vmatmul.mubr.bf16.gmra.mrb[0].mxu0 %v2194
    %v2233 = vpop.f32.mrb[0].mxu0
    %v2234 = vadd.f32 0.0, %v2233
    %v2235 = vpop.f32.mrb[0].mxu0
    %v2236 = vpop.f32.mrb[0].mxu0
    %v2237 = vpop.f32.mrb[0].mxu0
    %2238 = vdwg.mxu0
    %2239 = vrot.lane.b32.xlu0 %v1519, 48
    %v2240 = vpop.permute.xlu0 %2239
    %v2242 = vsel %vm109, %v2190, 0
    %v2245 = vsel %vm236, %v2240, 0
    %2247 = vmatprep.subr.bf16.mxu0 0
    %2248 = vmatpush1.bf16.msra.mxu0 %v2245
    %2249 = vmatprep.subr.bf16.mxu0 0
    %2250 = vmatpush1.bf16.msra.mxu0 0
    %2251 = vmatprep.subr.bf16.mxu0 0
    %2252 = vmatpush1.bf16.msra.mxu0 0
    %2253 = vmatprep.subr.bf16.mxu0 0
    %2254 = vmatpush1.bf16.msra.mxu0 0
    %2255 = vmatprep.subr.bf16.mxu0 0
    %2256 = vmatpush1.bf16.msra.mxu0 0
    %2257 = vmatprep.subr.bf16.mxu0 0
    %2258 = vmatpush1.bf16.msra.mxu0 0
    %2259 = vmatprep.subr.bf16.mxu0 0
    %2260 = vmatpush1.bf16.msra.mxu0 0
    %2261 = vmatprep.subr.bf16.mxu0 0
    %2262 = vmatpush1.bf16.msra.mxu0 0
    %2263 = vmatprep.subr.bf16.mxu0 0
    %2264 = vmatpush1.bf16.msra.mxu0 0
    %2265 = vmatprep.subr.bf16.mxu0 0
    %2266 = vmatpush1.bf16.msra.mxu0 0
    %2267 = vmatprep.subr.bf16.mxu0 0
    %2268 = vmatpush1.bf16.msra.mxu0 0
    %2269 = vmatprep.subr.bf16.mxu0 0
    %2270 = vmatpush1.bf16.msra.mxu0 0
    %2271 = vmatprep.subr.bf16.mxu0 0
    %2272 = vmatpush1.bf16.msra.mxu0 0
    %2273 = vmatprep.subr.bf16.mxu0 0
    %2274 = vmatpush1.bf16.msra.mxu0 0
    %2275 = vmatprep.subr.bf16.mxu0 0
    %2276 = vmatpush1.bf16.msra.mxu0 0
    %2277 = vmatprep.subr.bf16.mxu0 0
    %2278 = vmatpush1.bf16.msra.mxu0 0
    %2279 = vmatprep.mubr.bf16.mxu0 0
    %2280 = vmatmul.mubr.bf16.gmra.mrb[0].mxu0 %v2242
    %v2281 = vpop.f32.mrb[0].mxu0
    %v2282 = vadd.f32 0.0, %v2281
    %v2283 = vpop.f32.mrb[0].mxu0
    %v2284 = vpop.f32.mrb[0].mxu0
    %v2285 = vpop.f32.mrb[0].mxu0
    %2286 = vdwg.mxu0
    %v2287 = vld [vmem:[%s1 + $0x88] sm:$0xf]
    %v2288 = vpack.c.bf16 %v2282, %v2234
    %v2290 = vunpack.c.l.b16 %v2287
    %v2291 = vpack.c.b16 %v2290, %v2290
    %2292 = vrot.lane.b32.xlu0 %v2291, 64
    %v2293 = vpop.permute.xlu0 %2292
    %v2295 = vsel %vm109, %v2288, 0
    %v2298 = vsel %vm236, %v2293, 0
    %2300 = vmatprep.subr.bf16.mxu0 0
    %2301 = vmatpush1.bf16.msra.mxu0 %v2298
    %2302 = vmatprep.subr.bf16.mxu0 0
    %2303 = vmatpush1.bf16.msra.mxu0 0
    %2304 = vmatprep.subr.bf16.mxu0 0
    %2305 = vmatpush1.bf16.msra.mxu0 0
    %2306 = vmatprep.subr.bf16.mxu0 0
    %2307 = vmatpush1.bf16.msra.mxu0 0
    %2308 = vmatprep.subr.bf16.mxu0 0
    %2309 = vmatpush1.bf16.msra.mxu0 0
    %2310 = vmatprep.subr.bf16.mxu0 0
    %2311 = vmatpush1.bf16.msra.mxu0 0
    %2312 = vmatprep.subr.bf16.mxu0 0
    %2313 = vmatpush1.bf16.msra.mxu0 0
    %2314 = vmatprep.subr.bf16.mxu0 0
    %2315 = vmatpush1.bf16.msra.mxu0 0
    %2316 = vmatprep.subr.bf16.mxu0 0
    %2317 = vmatpush1.bf16.msra.mxu0 0
    %2318 = vmatprep.subr.bf16.mxu0 0
    %2319 = vmatpush1.bf16.msra.mxu0 0
    %2320 = vmatprep.subr.bf16.mxu0 0
    %2321 = vmatpush1.bf16.msra.mxu0 0
    %2322 = vmatprep.subr.bf16.mxu0 0
    %2323 = vmatpush1.bf16.msra.mxu0 0
    %2324 = vmatprep.subr.bf16.mxu0 0
    %2325 = vmatpush1.bf16.msra.mxu0 0
    %2326 = vmatprep.subr.bf16.mxu0 0
    %2327 = vmatpush1.bf16.msra.mxu0 0
    %2328 = vmatprep.subr.bf16.mxu0 0
    %2329 = vmatpush1.bf16.msra.mxu0 0
    %2330 = vmatprep.subr.bf16.mxu0 0
    %2331 = vmatpush1.bf16.msra.mxu0 0
    %2332 = vmatprep.mubr.bf16.mxu0 0
    %2333 = vmatmul.mubr.bf16.gmra.mrb[0].mxu0 %v2295
    %v2334 = vpop.f32.mrb[0].mxu0
    %v2335 = vadd.f32 0.0, %v2334
    %v2336 = vpop.f32.mrb[0].mxu0
    %v2337 = vpop.f32.mrb[0].mxu0
    %v2338 = vadd.f32 0.0, %v2337
    %v2339 = vpop.f32.mrb[0].mxu0
    %2340 = vdwg.mxu0
    %v2341 = vadd.f32 %v2059, %v2335
    %v2342 = vadd.f32 %v2062, %v2338
    %2343 = vrot.lane.b32.xlu0 %v1518, 104
    %v2344 = vpop.permute.xlu0 %2343
    %2345 = vrot.lane.b32.xlu0 %v1518, 72
    %v2346 = vpop.permute.xlu0 %2345
    %v2348 = vsel %vm109, %v2344, 0
    %v2351 = vsel %vm109, %v2346, 0
    %2353 = vmatprep.subr.bf16.mxu0 0
    %2354 = vmatpush1.bf16.xpose.msra.mxu0 %v2351
    %2355 = vmatprep.subr.bf16.mxu0 0
    %2356 = vmatpush1.bf16.xpose.msra.mxu0 0
    %2357 = vmatprep.subr.bf16.mxu0 0
    %2358 = vmatpush1.bf16.xpose.msra.mxu0 0
    %2359 = vmatprep.subr.bf16.mxu0 0
    %2360 = vmatpush1.bf16.xpose.msra.mxu0 0
    %2361 = vmatprep.subr.bf16.mxu0 0
    %2362 = vmatpush1.bf16.xpose.msra.mxu0 0
    %2363 = vmatprep.subr.bf16.mxu0 0
    %2364 = vmatpush1.bf16.xpose.msra.mxu0 0
    %2365 = vmatprep.subr.bf16.mxu0 0
    %2366 = vmatpush1.bf16.xpose.msra.mxu0 0
    %2367 = vmatprep.subr.bf16.mxu0 0
    %2368 = vmatpush1.bf16.xpose.msra.mxu0 0
    %2369 = vmatprep.subr.bf16.mxu0 0
    %2370 = vmatpush1.bf16.xpose.msra.mxu0 0
    %2371 = vmatprep.subr.bf16.mxu0 0
    %2372 = vmatpush1.bf16.xpose.msra.mxu0 0
    %2373 = vmatprep.subr.bf16.mxu0 0
    %2374 = vmatpush1.bf16.xpose.msra.mxu0 0
    %2375 = vmatprep.subr.bf16.mxu0 0
    %2376 = vmatpush1.bf16.xpose.msra.mxu0 0
    %2377 = vmatprep.subr.bf16.mxu0 0
    %2378 = vmatpush1.bf16.xpose.msra.mxu0 0
    %2379 = vmatprep.subr.bf16.mxu0 0
    %2380 = vmatpush1.bf16.xpose.msra.mxu0 0
    %2381 = vmatprep.subr.bf16.mxu0 0
    %2382 = vmatpush1.bf16.xpose.msra.mxu0 0
    %2383 = vmatprep.subr.bf16.mxu0 0
    %2384 = vmatpush1.bf16.xpose.msra.mxu0 0
    %2385 = vmatprep.mubr.bf16.mxu0 0
    %2386 = vmatmul.mubr.bf16.gmra.mrb[0].mxu0 %v2348
    %v2387 = vpop.f32.mrb[0].mxu0
    %v2388 = vadd.f32 0.0, %v2387
    %v2389 = vpop.f32.mrb[0].mxu0
    %v2390 = vpop.f32.mrb[0].mxu0
    %v2391 = vpop.f32.mrb[0].mxu0
    %2392 = vdwg.mxu0
    %2393 = vrot.lane.b32.xlu0 %v1519, 104
    %v2394 = vpop.permute.xlu0 %2393
    %2395 = vrot.lane.b32.xlu0 %v1519, 72
    %v2396 = vpop.permute.xlu0 %2395
    %v2398 = vsel %vm109, %v2394, 0
    %v2401 = vsel %vm109, %v2396, 0
    %2403 = vmatprep.subr.bf16.mxu0 0
    %2404 = vmatpush1.bf16.xpose.msra.mxu0 %v2401
    %2405 = vmatprep.subr.bf16.mxu0 0
    %2406 = vmatpush1.bf16.xpose.msra.mxu0 0
    %2407 = vmatprep.subr.bf16.mxu0 0
    %2408 = vmatpush1.bf16.xpose.msra.mxu0 0
    %2409 = vmatprep.subr.bf16.mxu0 0
    %2410 = vmatpush1.bf16.xpose.msra.mxu0 0
    %2411 = vmatprep.subr.bf16.mxu0 0
    %2412 = vmatpush1.bf16.xpose.msra.mxu0 0
    %2413 = vmatprep.subr.bf16.mxu0 0
    %2414 = vmatpush1.bf16.xpose.msra.mxu0 0
    %2415 = vmatprep.subr.bf16.mxu0 0
    %2416 = vmatpush1.bf16.xpose.msra.mxu0 0
    %2417 = vmatprep.subr.bf16.mxu0 0
    %2418 = vmatpush1.bf16.xpose.msra.mxu0 0
    %2419 = vmatprep.subr.bf16.mxu0 0
    %2420 = vmatpush1.bf16.xpose.msra.mxu0 0
    %2421 = vmatprep.subr.bf16.mxu0 0
    %2422 = vmatpush1.bf16.xpose.msra.mxu0 0
    %2423 = vmatprep.subr.bf16.mxu0 0
    %2424 = vmatpush1.bf16.xpose.msra.mxu0 0
    %2425 = vmatprep.subr.bf16.mxu0 0
    %2426 = vmatpush1.bf16.xpose.msra.mxu0 0
    %2427 = vmatprep.subr.bf16.mxu0 0
    %2428 = vmatpush1.bf16.xpose.msra.mxu0 0
    %2429 = vmatprep.subr.bf16.mxu0 0
    %2430 = vmatpush1.bf16.xpose.msra.mxu0 0
    %2431 = vmatprep.subr.bf16.mxu0 0
    %2432 = vmatpush1.bf16.xpose.msra.mxu0 0
    %2433 = vmatprep.subr.bf16.mxu0 0
    %2434 = vmatpush1.bf16.xpose.msra.mxu0 0
    %2435 = vmatprep.mubr.bf16.mxu0 0
    %2436 = vmatmul.mubr.bf16.gmra.mrb[0].mxu0 %v2398
    %v2437 = vpop.f32.mrb[0].mxu0
    %v2438 = vadd.f32 0.0, %v2437
    %v2439 = vpop.f32.mrb[0].mxu0
    %v2440 = vpop.f32.mrb[0].mxu0
    %v2441 = vpop.f32.mrb[0].mxu0
    %2442 = vdwg.mxu0
    %v2443 = vmul.f32 %v2388, 0.35355338
    %v2444 = vmul.f32 %v2438, 0.35355338
    %v2445 = vsel %vm109, %v2443, -inf
    %2446 = vmax.xlane.f32.xlu0 %v2445
    %v2447 = vpop.xlane.xlu0 %2446
    %v2448 = vsel %vm109, %v2444, -inf
    %2449 = vmax.xlane.f32.xlu0 %v2448
    %v2450 = vpop.xlane.xlu0 %2449
    %v2451 = vsub.f32 %v2443, %v2447
    %v2452 = vsub.f32 %v2444, %v2450
    %v2453 = vmul.f32 %v2451, 1.442695
    %v2454 = vpow.pop %v2453
    %v2455 = vmul.f32 %v2452, 1.442695
    %v2456 = vpow.pop %v2455
    %v2457 = vsel %vm109, %v2454, 0.0
    %2458 = vadd.xlane.f32.xlu0 %v2457
    %v2459 = vpop.xlane.xlu0 %2458
    %v2460 = vsel %vm109, %v2456, 0.0
    %2461 = vadd.xlane.f32.xlu0 %v2460
    %v2462 = vpop.xlane.xlu0 %2461
    %v2463 = vrcp.pop %v2459
    %v2464 = vmul.f32 %v2454, %v2463
    %v2465 = vrcp.pop %v2462
    %v2466 = vmul.f32 %v2456, %v2465
    %v2467 = vpack.c.bf16 %v2464, %v2464
    %v2468 = vpack.c.bf16 %v2466, %v2466
    %2469 = vrot.lane.b32.xlu0 %v1518, 40
    %v2470 = vpop.permute.xlu0 %2469
    %v2472 = vsel %vm109, %v2467, 0
    %v2475 = vsel %vm236, %v2470, 0
    %2477 = vmatprep.subr.bf16.mxu0 0
    %2478 = vmatpush1.bf16.msra.mxu0 %v2475
    %2479 = vmatprep.subr.bf16.mxu0 0
    %2480 = vmatpush1.bf16.msra.mxu0 0
    %2481 = vmatprep.subr.bf16.mxu0 0
    %2482 = vmatpush1.bf16.msra.mxu0 0
    %2483 = vmatprep.subr.bf16.mxu0 0
    %2484 = vmatpush1.bf16.msra.mxu0 0
    %2485 = vmatprep.subr.bf16.mxu0 0
    %2486 = vmatpush1.bf16.msra.mxu0 0
    %2487 = vmatprep.subr.bf16.mxu0 0
    %2488 = vmatpush1.bf16.msra.mxu0 0
    %2489 = vmatprep.subr.bf16.mxu0 0
    %2490 = vmatpush1.bf16.msra.mxu0 0
    %2491 = vmatprep.subr.bf16.mxu0 0
    %2492 = vmatpush1.bf16.msra.mxu0 0
    %2493 = vmatprep.subr.bf16.mxu0 0
    %2494 = vmatpush1.bf16.msra.mxu0 0
    %2495 = vmatprep.subr.bf16.mxu0 0
    %2496 = vmatpush1.bf16.msra.mxu0 0
    %2497 = vmatprep.subr.bf16.mxu0 0
    %2498 = vmatpush1.bf16.msra.mxu0 0
    %2499 = vmatprep.subr.bf16.mxu0 0
    %2500 = vmatpush1.bf16.msra.mxu0 0
    %2501 = vmatprep.subr.bf16.mxu0 0
    %2502 = vmatpush1.bf16.msra.mxu0 0
    %2503 = vmatprep.subr.bf16.mxu0 0
    %2504 = vmatpush1.bf16.msra.mxu0 0
    %2505 = vmatprep.subr.bf16.mxu0 0
    %2506 = vmatpush1.bf16.msra.mxu0 0
    %2507 = vmatprep.subr.bf16.mxu0 0
    %2508 = vmatpush1.bf16.msra.mxu0 0
    %2509 = vmatprep.mubr.bf16.mxu0 0
    %2510 = vmatmul.mubr.bf16.gmra.mrb[0].mxu0 %v2472
    %v2511 = vpop.f32.mrb[0].mxu0
    %v2512 = vadd.f32 0.0, %v2511
    %v2513 = vpop.f32.mrb[0].mxu0
    %v2514 = vpop.f32.mrb[0].mxu0
    %v2515 = vpop.f32.mrb[0].mxu0
    %2516 = vdwg.mxu0
    %2517 = vrot.lane.b32.xlu0 %v1519, 40
    %v2518 = vpop.permute.xlu0 %2517
    %v2520 = vsel %vm109, %v2468, 0
    %v2523 = vsel %vm236, %v2518, 0
    %2525 = vmatprep.subr.bf16.mxu0 0
    %2526 = vmatpush1.bf16.msra.mxu0 %v2523
    %2527 = vmatprep.subr.bf16.mxu0 0
    %2528 = vmatpush1.bf16.msra.mxu0 0
    %2529 = vmatprep.subr.bf16.mxu0 0
    %2530 = vmatpush1.bf16.msra.mxu0 0
    %2531 = vmatprep.subr.bf16.mxu0 0
    %2532 = vmatpush1.bf16.msra.mxu0 0
    %2533 = vmatprep.subr.bf16.mxu0 0
    %2534 = vmatpush1.bf16.msra.mxu0 0
    %2535 = vmatprep.subr.bf16.mxu0 0
    %2536 = vmatpush1.bf16.msra.mxu0 0
    %2537 = vmatprep.subr.bf16.mxu0 0
    %2538 = vmatpush1.bf16.msra.mxu0 0
    %2539 = vmatprep.subr.bf16.mxu0 0
    %2540 = vmatpush1.bf16.msra.mxu0 0
    %2541 = vmatprep.subr.bf16.mxu0 0
    %2542 = vmatpush1.bf16.msra.mxu0 0
    %2543 = vmatprep.subr.bf16.mxu0 0
    %2544 = vmatpush1.bf16.msra.mxu0 0
    %2545 = vmatprep.subr.bf16.mxu0 0
    %2546 = vmatpush1.bf16.msra.mxu0 0
    %2547 = vmatprep.subr.bf16.mxu0 0
    %2548 = vmatpush1.bf16.msra.mxu0 0
    %2549 = vmatprep.subr.bf16.mxu0 0
    %2550 = vmatpush1.bf16.msra.mxu0 0
    %2551 = vmatprep.subr.bf16.mxu0 0
    %2552 = vmatpush1.bf16.msra.mxu0 0
    %2553 = vmatprep.subr.bf16.mxu0 0
    %2554 = vmatpush1.bf16.msra.mxu0 0
    %2555 = vmatprep.subr.bf16.mxu0 0
    %2556 = vmatpush1.bf16.msra.mxu0 0
    %2557 = vmatprep.mubr.bf16.mxu0 0
    %2558 = vmatmul.mubr.bf16.gmra.mrb[0].mxu0 %v2520
    %v2559 = vpop.f32.mrb[0].mxu0
    %v2560 = vadd.f32 0.0, %v2559
    %v2561 = vpop.f32.mrb[0].mxu0
    %v2562 = vpop.f32.mrb[0].mxu0
    %v2563 = vpop.f32.mrb[0].mxu0
    %2564 = vdwg.mxu0
    %v2565 = vld [vmem:[%s1 + $0x88] sm:$0xf]
    %v2566 = vpack.c.bf16 %v2560, %v2512
    %v2568 = vunpack.c.l.b16 %v2565
    %v2569 = vpack.c.b16 %v2568, %v2568
    %2570 = vrot.lane.b32.xlu0 %v2569, 32
    %v2571 = vpop.permute.xlu0 %2570
    %v2573 = vsel %vm109, %v2566, 0
    %v2576 = vsel %vm236, %v2571, 0
    %2578 = vmatprep.subr.bf16.mxu0 0
    %2579 = vmatpush1.bf16.msra.mxu0 %v2576
    %2580 = vmatprep.subr.bf16.mxu0 0
    %2581 = vmatpush1.bf16.msra.mxu0 0
    %2582 = vmatprep.subr.bf16.mxu0 0
    %2583 = vmatpush1.bf16.msra.mxu0 0
    %2584 = vmatprep.subr.bf16.mxu0 0
    %2585 = vmatpush1.bf16.msra.mxu0 0
    %2586 = vmatprep.subr.bf16.mxu0 0
    %2587 = vmatpush1.bf16.msra.mxu0 0
    %2588 = vmatprep.subr.bf16.mxu0 0
    %2589 = vmatpush1.bf16.msra.mxu0 0
    %2590 = vmatprep.subr.bf16.mxu0 0
    %2591 = vmatpush1.bf16.msra.mxu0 0
    %2592 = vmatprep.subr.bf16.mxu0 0
    %2593 = vmatpush1.bf16.msra.mxu0 0
    %2594 = vmatprep.subr.bf16.mxu0 0
    %2595 = vmatpush1.bf16.msra.mxu0 0
    %2596 = vmatprep.subr.bf16.mxu0 0
    %2597 = vmatpush1.bf16.msra.mxu0 0
    %2598 = vmatprep.subr.bf16.mxu0 0
    %2599 = vmatpush1.bf16.msra.mxu0 0
    %2600 = vmatprep.subr.bf16.mxu0 0
    %2601 = vmatpush1.bf16.msra.mxu0 0
    %2602 = vmatprep.subr.bf16.mxu0 0
    %2603 = vmatpush1.bf16.msra.mxu0 0
    %2604 = vmatprep.subr.bf16.mxu0 0
    %2605 = vmatpush1.bf16.msra.mxu0 0
    %2606 = vmatprep.subr.bf16.mxu0 0
    %2607 = vmatpush1.bf16.msra.mxu0 0
    %2608 = vmatprep.subr.bf16.mxu0 0
    %2609 = vmatpush1.bf16.msra.mxu0 0
    %2610 = vmatprep.mubr.bf16.mxu0 0
    %2611 = vmatmul.mubr.bf16.gmra.mrb[0].mxu0 %v2573
    %v2612 = vpop.f32.mrb[0].mxu0
    %v2613 = vadd.f32 0.0, %v2612
    %v2614 = vpop.f32.mrb[0].mxu0
    %v2615 = vpop.f32.mrb[0].mxu0
    %v2616 = vadd.f32 0.0, %v2615
    %v2617 = vpop.f32.mrb[0].mxu0
    %2618 = vdwg.mxu0
    %v2619 = vadd.f32 %v2341, %v2613
    %v2620 = vadd.f32 %v2342, %v2616
    %v2621 = vlaneseq
    %v2622 = vshrl.u32 %v2621, 7
    %v2623 = vsub.s32 0, %v2622
    %v2624 = vrot.slane %v1450, %v2623
    %v2625 = vadd.f32 %v2619, %v2624
    %v2626 = vadd.f32 %v2620, %v2624
    %v2627 = vadd.f32 %v1431, %v2625
    %v2628 = vadd.f32 %v1432, %v2626
    %v2629 = vsel %vm59, %v2627, 0.0
    %2630 = vadd.xlane.f32.xlu0 %v2629
    %v2631 = vpop.xlane.xlu0 %2630
    %v2632 = vsel %vm59, %v2628, 0.0
    %2633 = vadd.xlane.f32.xlu0 %v2632
    %v2634 = vpop.xlane.xlu0 %2633
    %v2635 = vmul.f32 %v2631, %v1223
    %v2636 = vmul.f32 %v2634, %v1223
    %v2637 = vsub.f32 %v2627, %v2635
    %v2638 = vsub.f32 %v2628, %v2636
    %v2639 = vmul.f32 %v2637, %v2637
    %v2640 = vmul.f32 %v2638, %v2638
    %v2641 = vsel %vm59, %v2639, 0.0
    %2642 = vadd.xlane.f32.xlu0 %v2641
    %v2643 = vpop.xlane.xlu0 %2642
    %v2644 = vsel %vm59, %v2640, 0.0
    %2645 = vadd.xlane.f32.xlu0 %v2644
    %v2646 = vpop.xlane.xlu0 %2645
    %v2647 = vmul.f32 %v2643, %v1223
    %v2648 = vmul.f32 %v2646, %v1223
    %v2649 = vadd.f32 %v2647, 1e-05
    %v2650 = vadd.f32 %v2648, 1e-05
    %v2651 = vrsqrt.pop %v2649
    %v2652 = vrsqrt.pop %v2650
    %v2653 = vmul.f32 %v2637, %v2651
    %v2654 = vmul.f32 %v2638, %v2652
    %v2655 = vlaneseq
    %v2656 = vshrl.u32 %v2655, 7
    %v2657 = vsub.s32 0, %v2656
    %v2658 = vrot.slane %v1451, %v2657
    %v2659 = vmul.f32 %v2653, %v2658
    %v2660 = vmul.f32 %v2654, %v2658
    %v2661 = vlaneseq
    %v2662 = vshrl.u32 %v2661, 7
    %v2663 = vsub.s32 0, %v2662
    %v2664 = vrot.slane %v1452, %v2663
    %v2665 = vadd.f32 %v2659, %v2664
    %v2666 = vadd.f32 %v2660, %v2664
    %v2667 = vpack.c.bf16 %v2666, %v2665
    %v2668 = vlaneseq
    %v2669 = vshrl.u32 %v2668, 7
    %v2670 = vsub.s32 0, %v2669
    %v2671 = vrot.slane %v1453, %v2670
    %v2676 = vunpack.c.l.b16 %v1437
    %v2677 = vunpack.c.l.b16 %v1438
    %v2678 = vunpack.c.l.b16 %v1439
    %v2679 = vunpack.c.l.b16 %v1440
    %v2680 = vpack.c.b16 %v2677, %v2676
    %v2681 = vpack.c.b16 %v2679, %v2678
    %v2685 = vsel %vm59, %v2667, 0
    %2687 = vmatprep.subr.bf16.mxu0 0
    %2688 = vmatpush1.bf16.msra.mxu0 %v2680
    %2689 = vmatprep.subr.bf16.mxu0 0
    %2690 = vmatpush1.bf16.msra.mxu0 %v2681
    %2691 = vmatprep.subr.bf16.mxu0 0
    %2692 = vmatpush1.bf16.msra.mxu0 0
    %2693 = vmatprep.subr.bf16.mxu0 0
    %2694 = vmatpush1.bf16.msra.mxu0 0
    %2695 = vmatprep.subr.bf16.mxu0 0
    %2696 = vmatpush1.bf16.msra.mxu0 0
    %2697 = vmatprep.subr.bf16.mxu0 0
    %2698 = vmatpush1.bf16.msra.mxu0 0
    %2699 = vmatprep.subr.bf16.mxu0 0
    %2700 = vmatpush1.bf16.msra.mxu0 0
    %2701 = vmatprep.subr.bf16.mxu0 0
    %2702 = vmatpush1.bf16.msra.mxu0 0
    %2703 = vmatprep.subr.bf16.mxu0 0
    %2704 = vmatpush1.bf16.msra.mxu0 0
    %2705 = vmatprep.subr.bf16.mxu0 0
    %2706 = vmatpush1.bf16.msra.mxu0 0
    %2707 = vmatprep.subr.bf16.mxu0 0
    %2708 = vmatpush1.bf16.msra.mxu0 0
    %2709 = vmatprep.subr.bf16.mxu0 0
    %2710 = vmatpush1.bf16.msra.mxu0 0
    %2711 = vmatprep.subr.bf16.mxu0 0
    %2712 = vmatpush1.bf16.msra.mxu0 0
    %2713 = vmatprep.subr.bf16.mxu0 0
    %2714 = vmatpush1.bf16.msra.mxu0 0
    %2715 = vmatprep.subr.bf16.mxu0 0
    %2716 = vmatpush1.bf16.msra.mxu0 0
    %2717 = vmatprep.subr.bf16.mxu0 0
    %2718 = vmatpush1.bf16.msra.mxu0 0
    %2719 = vmatprep.mubr.bf16.mxu0 0
    %2720 = vmatmul.mubr.bf16.gmra.mrb[0].mxu0 %v2685
    %v2721 = vpop.f32.mrb[0].mxu0
    %v2722 = vadd.f32 %v2671, %v2721
    %v2723 = vpop.f32.mrb[0].mxu0
    %v2724 = vpop.f32.mrb[0].mxu0
    %v2725 = vadd.f32 %v2671, %v2724
    %v2726 = vpop.f32.mrb[0].mxu0
    %2727 = vdwg.mxu0
    %v2728 = vmax.f32 %v2722, 0.0
    %v2729 = vmax.f32 %v2725, 0.0
    %v2730 = vpack.c.bf16 %v2729, %v2728
    %v2731 = vlaneseq
    %v2732 = vshrl.u32 %v2731, 7
    %v2733 = vsub.s32 0, %v2732
    %v2734 = vrot.slane %v1454, %v2733
    %v2743 = vunpack.c.l.b16 %v1441
    %v2744 = vunpack.c.l.b16 %v1442
    %v2745 = vunpack.c.l.b16 %v1443
    %v2746 = vunpack.c.l.b16 %v1444
    %v2747 = vunpack.c.l.b16 %v1445
    %v2748 = vunpack.c.l.b16 %v1446
    %v2749 = vunpack.c.l.b16 %v1447
    %v2750 = vunpack.c.l.b16 %v1448
    %v2751 = vpack.c.b16 %v2744, %v2743
    %v2752 = vpack.c.b16 %v2746, %v2745
    %v2753 = vpack.c.b16 %v2748, %v2747
    %v2754 = vpack.c.b16 %v2750, %v2749
    %v2760 = vsel %vm1348, %v2730, 0
    %2762 = vmatprep.subr.bf16.mxu0 0
    %2763 = vmatpush1.bf16.msra.mxu0 %v2751
    %2764 = vmatprep.subr.bf16.mxu0 0
    %2765 = vmatpush1.bf16.msra.mxu0 %v2752
    %2766 = vmatprep.subr.bf16.mxu0 0
    %2767 = vmatpush1.bf16.msra.mxu0 %v2753
    %2768 = vmatprep.subr.bf16.mxu0 0
    %2769 = vmatpush1.bf16.msra.mxu0 %v2754
    %2770 = vmatprep.subr.bf16.mxu0 0
    %2771 = vmatpush1.bf16.msra.mxu0 0
    %2772 = vmatprep.subr.bf16.mxu0 0
    %2773 = vmatpush1.bf16.msra.mxu0 0
    %2774 = vmatprep.subr.bf16.mxu0 0
    %2775 = vmatpush1.bf16.msra.mxu0 0
    %2776 = vmatprep.subr.bf16.mxu0 0
    %2777 = vmatpush1.bf16.msra.mxu0 0
    %2778 = vmatprep.subr.bf16.mxu0 0
    %2779 = vmatpush1.bf16.msra.mxu0 0
    %2780 = vmatprep.subr.bf16.mxu0 0
    %2781 = vmatpush1.bf16.msra.mxu0 0
    %2782 = vmatprep.subr.bf16.mxu0 0
    %2783 = vmatpush1.bf16.msra.mxu0 0
    %2784 = vmatprep.subr.bf16.mxu0 0
    %2785 = vmatpush1.bf16.msra.mxu0 0
    %2786 = vmatprep.subr.bf16.mxu0 0
    %2787 = vmatpush1.bf16.msra.mxu0 0
    %2788 = vmatprep.subr.bf16.mxu0 0
    %2789 = vmatpush1.bf16.msra.mxu0 0
    %2790 = vmatprep.subr.bf16.mxu0 0
    %2791 = vmatpush1.bf16.msra.mxu0 0
    %2792 = vmatprep.subr.bf16.mxu0 0
    %2793 = vmatpush1.bf16.msra.mxu0 0
    %2794 = vmatprep.mubr.bf16.mxu0 0
    %2795 = vmatmul.mubr.bf16.gmra.mrb[0].mxu0 %v2760
    %v2796 = vpop.f32.mrb[0].mxu0
    %v2797 = vadd.f32 %v2734, %v2796
    %v2798 = vpop.f32.mrb[0].mxu0
    %v2799 = vpop.f32.mrb[0].mxu0
    %v2800 = vadd.f32 %v2734, %v2799
    %v2801 = vpop.f32.mrb[0].mxu0
    %2802 = vdwg.mxu0
    %v2803 = vadd.f32 %v2665, %v2797
    %v2804 = vadd.f32 %v2666, %v2800
    %v2805 = vsel %vm59, %v2803, 0.0
    %2806 = vadd.xlane.f32.xlu0 %v2805
    %v2807 = vpop.xlane.xlu0 %2806
    %v2808 = vsel %vm59, %v2804, 0.0
    %2809 = vadd.xlane.f32.xlu0 %v2808
    %v2810 = vpop.xlane.xlu0 %2809
    %v2811 = vmul.f32 %v2807, %v1223
    %v2812 = vmul.f32 %v2810, %v1223
    %v2813 = vsub.f32 %v2803, %v2811
    %v2814 = vsub.f32 %v2804, %v2812
    %v2815 = vmul.f32 %v2813, %v2813
    %v2816 = vmul.f32 %v2814, %v2814
    %v2817 = vsel %vm59, %v2815, 0.0
    %2818 = vadd.xlane.f32.xlu0 %v2817
    %v2819 = vpop.xlane.xlu0 %2818
    %v2820 = vsel %vm59, %v2816, 0.0
    %2821 = vadd.xlane.f32.xlu0 %v2820
    %v2822 = vpop.xlane.xlu0 %2821
    %v2823 = vmul.f32 %v2819, %v1223
    %v2824 = vmul.f32 %v2822, %v1223
    %v2825 = vadd.f32 %v2823, 1e-05
    %v2826 = vadd.f32 %v2824, 1e-05
    %v2827 = vrsqrt.pop %v2825
    %v2828 = vrsqrt.pop %v2826
    %v2829 = vmul.f32 %v2813, %v2827
    %v2830 = vmul.f32 %v2814, %v2828
    %v2831 = vlaneseq
    %v2832 = vshrl.u32 %v2831, 7
    %v2833 = vsub.s32 0, %v2832
    %v2834 = vrot.slane %v1455, %v2833
    %v2835 = vmul.f32 %v2829, %v2834
    %v2836 = vmul.f32 %v2830, %v2834
    %v2837 = vlaneseq
    %v2838 = vshrl.u32 %v2837, 7
    %v2839 = vsub.s32 0, %v2838
    %v2840 = vrot.slane %v1456, %v2839
    %v2841 = vadd.f32 %v2835, %v2840
    %v2842 = vadd.f32 %v2836, %v2840
    %v2843 = vsel %vm59, %v2841, 0.0
    %v2844 = vrot.slane %v2843, 4
    %v2845 = vadd.f32 %v2843, %v2844
    %v2846 = vrot.slane %v2845, 2
    %v2847 = vadd.f32 %v2845, %v2846
    %v2848 = vrot.slane %v2847, 1
    %v2849 = vadd.f32 %v2847, %v2848
    %v2850 = vsel %vm59, %v2842, 0.0
    %v2851 = vrot.slane %v2850, 4
    %v2852 = vadd.f32 %v2850, %v2851
    %v2853 = vrot.slane %v2852, 2
    %v2854 = vadd.f32 %v2852, %v2853
    %v2855 = vrot.slane %v2854, 1
    %v2856 = vadd.f32 %v2854, %v2855
    %v2857 = vrcp.pop 8.0
    %v2858 = vmul.f32 %v2849, %v2857
    %v2859 = vmul.f32 %v2856, %v2857
    %v2860 = vld [vmem:[%s1 + $0x90] sm:$0xf]
    %v2861 = vld [vmem:[%s1 + $0x94] sm:$0xf]
    %v2862 = vld [vmem:[%s1 + $0x98] sm:$0xf]
    %v2863 = vld [vmem:[%s1 + $0x9c] sm:$0xf]
    %v2864 = vld [vmem:[%s2 + $0x10] sm:$0x1]
    %v2865 = vpack.c.bf16 %v2858, %v2858
    %v2866 = vpack.c.bf16 %v2859, %v2859
    %v2867 = vlaneseq
    %v2868 = vshrl.u32 %v2867, 7
    %v2869 = vsub.s32 0, %v2868
    %v2870 = vrot.slane %v2864, %v2869
    %v2873 = vunpack.c.l.b16 %v2865
    %v2874 = vunpack.c.l.b16 %v2866
    %vm2875 = vcmask 1041409
    %v2876 = vsel %vm2875, %v2874, %v2873
    %v2877 = vpack.c.b16 %v2876, %v2876
    %v2882 = vunpack.c.l.b16 %v2860
    %v2883 = vunpack.c.l.b16 %v2861
    %v2884 = vunpack.c.l.b16 %v2862
    %v2885 = vunpack.c.l.b16 %v2863
    %v2886 = vpack.c.b16 %v2883, %v2882
    %v2887 = vpack.c.b16 %v2885, %v2884
    %v2891 = vsel %vm59, %v2877, 0
    %2893 = vmatprep.subr.bf16.mxu0 0
    %2894 = vmatpush1.bf16.msra.mxu0 %v2886
    %2895 = vmatprep.subr.bf16.mxu0 0
    %2896 = vmatpush1.bf16.msra.mxu0 %v2887
    %2897 = vmatprep.subr.bf16.mxu0 0
    %2898 = vmatpush1.bf16.msra.mxu0 0
    %2899 = vmatprep.subr.bf16.mxu0 0
    %2900 = vmatpush1.bf16.msra.mxu0 0
    %2901 = vmatprep.subr.bf16.mxu0 0
    %2902 = vmatpush1.bf16.msra.mxu0 0
    %2903 = vmatprep.subr.bf16.mxu0 0
    %2904 = vmatpush1.bf16.msra.mxu0 0
    %2905 = vmatprep.subr.bf16.mxu0 0
    %2906 = vmatpush1.bf16.msra.mxu0 0
    %2907 = vmatprep.subr.bf16.mxu0 0
    %2908 = vmatpush1.bf16.msra.mxu0 0
    %2909 = vmatprep.subr.bf16.mxu0 0
    %2910 = vmatpush1.bf16.msra.mxu0 0
    %2911 = vmatprep.subr.bf16.mxu0 0
    %2912 = vmatpush1.bf16.msra.mxu0 0
    %2913 = vmatprep.subr.bf16.mxu0 0
    %2914 = vmatpush1.bf16.msra.mxu0 0
    %2915 = vmatprep.subr.bf16.mxu0 0
    %2916 = vmatpush1.bf16.msra.mxu0 0
    %2917 = vmatprep.subr.bf16.mxu0 0
    %2918 = vmatpush1.bf16.msra.mxu0 0
    %2919 = vmatprep.subr.bf16.mxu0 0
    %2920 = vmatpush1.bf16.msra.mxu0 0
    %2921 = vmatprep.subr.bf16.mxu0 0
    %2922 = vmatpush1.bf16.msra.mxu0 0
    %2923 = vmatprep.subr.bf16.mxu0 0
    %2924 = vmatpush1.bf16.msra.mxu0 0
    %2925 = vmatprep.mubr.bf16.mxu0 0
    %2926 = vmatmul.mubr.bf16.gmra.mrb[0].mxu0 %v2891
    %v2927 = vpop.f32.mrb[0].mxu0
    %v2928 = vadd.f32 %v2870, %v2927
    %v2929 = vpop.f32.mrb[0].mxu0
    %v2930 = vpop.f32.mrb[0].mxu0
    %v2931 = vpop.f32.mrb[0].mxu0
    %2932 = vdwg.mxu0
    %v2933 = vxor.u32 %v2928, 2147483648
    %v2934 = vmul.f32 %v2933, 1.442695
    %v2935 = vpow.pop %v2934
    %v2936 = vadd.f32 %v2935, 1.0
    %v2937 = vrcp.pop %v2936
    %v2938 = vmul.f32 1.0, %v2937
    %vm2939 = vcmask 254976
    %2940 = vst.msk [vmem:[#allocation2] sm:$0x3] %vm2939, %v2938
    // Predicated region
    $region14: #{transformer_predictor.1} parent=1 // pred_check
      _
    $region15: #{transformer_predictor.1} parent=1 // pred_check_branch
      %2942 = sbr.rel (0) target = $region17
    $region16: #{transformer_predictor.1} parent=1 // pred_region
      %s2944 = ssub.s32 32, 32
      %2945 = vsyncadd [#allocation3], %s2944
      %s2947 = sshll.u32 [#allocation2], 4
      %s2948 = int_to_ptr.vmem [resolvable:$true] %s2947
      %2950 = dma.vmem_to_hbm [thread:$0]  %s2948, 32, %s3, [#allocation3]
    $region17: #{transformer_predictor.1} parent=1 // pred_fallthru
      _
    // Predicated region
    $region18: #{transformer_predictor.1} parent=1 // pred_check
      _
    $region19: #{transformer_predictor.1} parent=1 // pred_check_branch
      %2952 = sbr.rel (0) target = $region21
    $region20: #{transformer_predictor.1} parent=1 // pred_region
      %2953 = dma.done [#allocation3], 32
    $region21: #{transformer_predictor.1} parent=1 // pred_fallthru
      _
    %2954 = vsyncpa [#allocation3], 1

</llo_original>
